<compile_context>
chip_gen: v7x
topology: tpu7x:2x2x1
jax: 0.10.0
libtpu: 0.0.40
codegen_flags: <defaults>
</compile_context>

<pallas_src>
import functools
import math

import jax
import jax.numpy as jnp
from jax.experimental import pallas as pl
from jax.experimental.pallas import tpu as pltpu

N_FLOW = 9          # number of coupling layers (len(mask))
D = 4               # keypoint dim
H = 64              # hidden width of each scale / translation net
LOG_2PI = math.log(2.0 * math.pi)
LOG_2 = math.log(2.0)

# RealNVP coupling mask (compile-time copy; only used for trace-time
# decisions like skipping zero-contribution lanes in layer 1).
MASK = ((1, 1, 0, 0), (1, 0, 1, 0), (0, 0, 1, 1)) * 3


def _leaky_relu(x):
    # torch.nn.LeakyReLU default negative_slope = 0.01
    return jnp.where(x > 0, x, 0.01 * x)


# ------------------------------ kernel --------------------------------------
def rle_loss_kernel(pred_ref, sigma_ref, target_ref, mask_ref,
                    w1_ref, b1_ref, w2_ref, b2_ref, w3_ref, b3_ref,
                    out_ref, *, n_total, padded):
    tile = pred_ref.shape[0]
    pred = pred_ref[...].astype(jnp.float32)
    sig_raw = sigma_ref[...].astype(jnp.float32)
    target = target_ref[...].astype(jnp.float32)

    # global row index of every element of this tile
    row0 = pl.program_id(0) * tile
    g_rows = row0 + jax.lax.broadcasted_iota(jnp.int32, (tile, D), 0)

    # sigma = sigmoid(x); only 1/sigma and log(sigma) are ever needed:
    #   1/sigma = 1 + exp(-x),  log(sigma) = -log(1 + exp(-x))
    # (reuses one exp; drops the reference's 1e-9 epsilon -> ~1e-9 rel. diff)
    e = jnp.exp(-sig_raw)
    inv_sigma = 1.0 + e
    log_sigma = -jnp.log(inv_sigma)

    # error = (pred - target) / sigma ;  PyTorch scales batch ROW 3 by 0.1
    row3_scale = jnp.where(g_rows == 3, jnp.float32(0.1), jnp.float32(1.0))
    error = (pred - target) * inv_sigma * row3_scale

    # ---- RealNVP backward pass (data -> latent) + log|det J| --------------
    z = error
    log_det = jnp.zeros((tile, 1), jnp.float32)
    for i in reversed(range(N_FLOW)):                 # static unroll, 9 layers
        m = MASK[i]                                   # python tuple (trace time)
        m_row = mask_ref[i:i + 1, :]                  # (1, D) float, from VMEM
        one_m = 1.0 - m_row

        # Fused [scale | translation] MLP.
        # Layer 1 (K=4): rank-1 FMAs on the VPU into a single (T, 128)
        # accumulator; lanes with m==0 contribute exactly zero (input is m*z),
        # so they are skipped at trace time.
        acc = jnp.broadcast_to(b1_ref[i:i + 1, :], (tile, 2 * H)).astype(jnp.float32)
        w1 = w1_ref[i]                                              # (D, 128)
        for k in range(D):
            if m[k]:
                acc = acc + z[:, k:k + 1] * w1[k:k + 1, :]
        h = _leaky_relu(acc)
        # Layers 2/3: 128-wide block-diagonal MXU matmuls, f32 accumulation.
        h = _leaky_relu(jnp.dot(h, w2_ref[i], preferred_element_type=jnp.float32)
                        + b2_ref[i:i + 1, :])
        o = jnp.dot(h, w3_ref[i], preferred_element_type=jnp.float32) \
            + b3_ref[i:i + 1, :]                                    # (T, 2*D)

        s = jnp.tanh(o[:, 0:D]) * one_m          # scale head (zero on m==1 lanes)
        t = o[:, D:2 * D]                        # translation head
        # masked lanes keep z; unmasked lanes: (z - t) * exp(-s)
        z = m_row * z + one_m * ((z - t) * jnp.exp(-s))
        log_det = log_det - jnp.sum(s, axis=1, keepdims=True)

    # prior MultivariateNormal(0, I):  log N(z) = -||z||^2/2 - D/2*log(2*pi)
    log_phi = (-0.5 * jnp.sum(z * z, axis=1, keepdims=True)
               - 0.5 * D * LOG_2PI + log_det)                       # (T, 1)

    nf_loss = log_sigma - log_phi                                   # (T, D)
    loss_q = log_sigma + LOG_2 + jnp.abs(error)   # log(2*sigma) + |error|
    loss = (nf_loss + loss_q) * jnp.float32(1.0 / n_total)          # loss /= N

    if padded:                         # zero out padded rows' contribution
        loss = jnp.where(g_rows < n_total, loss, 0.0)

    partial = jnp.sum(loss)
    out_ref[...] = jnp.broadcast_to(partial, out_ref.shape)


# --------------------------- host-side packing -------------------------------
def pack_flow_params(p):
    """Pack scale/translation nets into fused block-diagonal weights."""
    f32 = jnp.float32
    w1 = jnp.concatenate([p['sw1'], p['tw1']], axis=-1).astype(f32)   # (9, 4, 128)
    b1 = jnp.concatenate([p['sb1'], p['tb1']], axis=-1).astype(f32)   # (9, 128)
    zH = jnp.zeros((N_FLOW, H, H), f32)
    w2 = jnp.concatenate([jnp.concatenate([p['sw2'], zH], axis=-1),
                          jnp.concatenate([zH, p['tw2']], axis=-1)],
                         axis=1).astype(f32)                          # (9, 128, 128)
    b2 = jnp.concatenate([p['sb2'], p['tb2']], axis=-1).astype(f32)   # (9, 128)
    zD = jnp.zeros((N_FLOW, H, D), f32)
    w3 = jnp.concatenate([jnp.concatenate([p['sw3'], zD], axis=-1),
                          jnp.concatenate([zD, p['tw3']], axis=-1)],
                         axis=1).astype(f32)                          # (9, 128, 8)
    b3 = jnp.concatenate([p['sb3'], p['tb3']], axis=-1).astype(f32)   # (9, 8)
    return w1, b1, w2, b2, w3, b3


def _round_up(x, m):
    return (x + m - 1) // m * m


def rle_loss(pred, sigma, target, params, *, tile_n=1024):
    """Compute the RLE loss with the Pallas kernel (batch tiled over a grid)."""
    n = pred.shape[0]
    tile = min(tile_n, _round_up(n, 8))       # rows per grid step (multiple of 8)
    n_pad = _round_up(n, tile)
    num_tiles = n_pad // tile
    if n_pad != n:
        pad = ((0, n_pad - n), (0, 0))
        pred = jnp.pad(pred, pad)
        sigma = jnp.pad(sigma, pad)
        target = jnp.pad(target, pad)

    w1, b1, w2, b2, w3, b3 = pack_flow_params(params)
    mask = jnp.asarray(params['mask'], jnp.float32)                  # (9, 4)

    kernel = functools.partial(rle_loss_kernel, n_total=n, padded=(n_pad != n))
    tiled = lambda i: (i, 0)
    resident3 = lambda i: (0, 0, 0)            # weights stay VMEM-resident
    resident2 = lambda i: (0, 0)

    partials = pl.pallas_call(
        kernel,
        out_shape=jax.ShapeDtypeStruct((num_tiles, 8, 128), jnp.float32),
        grid=(num_tiles,),
        in_specs=[
            pl.BlockSpec((tile, D), tiled),
            pl.BlockSpec((tile, D), tiled),
            pl.BlockSpec((tile, D), tiled),
            pl.BlockSpec(mask.shape, resident2),
            pl.BlockSpec(w1.shape, resident3),
            pl.BlockSpec(b1.shape, resident2),
            pl.BlockSpec(w2.shape, resident3),
            pl.BlockSpec(b2.shape, resident2),
            pl.BlockSpec(w3.shape, resident3),
            pl.BlockSpec(b3.shape, resident2),
        ],
        out_specs=pl.BlockSpec((1, 8, 128), lambda i: (i, 0, 0)),
        compiler_params=pltpu.CompilerParams(
            dimension_semantics=("parallel",)),
    )(pred, sigma, target, mask, w1, b1, w2, b2, w3, b3)

    # tiny final reduction of per-tile partial sums (exact copy sits at [i,0,0])
    return jnp.sum(partials[:, 0, 0])


# ---------------- deterministic parameter construction -----------------------
def init_params(key):
    def xavier(k, shape, gain=0.01):                 # nn.init.xavier_uniform_
        fan_in, fan_out = shape[-2], shape[-1]
        limit = gain * math.sqrt(6.0 / (fan_in + fan_out))
        return jax.random.uniform(k, shape, jnp.float32, -limit, limit)

    def bias(k, shape, fan_in):                      # default nn.Linear bias init
        b = 1.0 / math.sqrt(fan_in)
        return jax.random.uniform(k, shape, jnp.float32, -b, b)

    keys = jax.random.split(key, 12)
    mask = jnp.array(MASK, jnp.float32)              # (9, 4)
    return dict(
        mask=mask,
        sw1=xavier(keys[0], (N_FLOW, D, H)), sb1=bias(keys[1], (N_FLOW, H), D),
        sw2=xavier(keys[2], (N_FLOW, H, H)), sb2=bias(keys[3], (N_FLOW, H), H),
        sw3=xavier(keys[4], (N_FLOW, H, D)), sb3=bias(keys[5], (N_FLOW, D), H),
        tw1=xavier(keys[6], (N_FLOW, D, H)), tb1=bias(keys[7], (N_FLOW, H), D),
        tw2=xavier(keys[8], (N_FLOW, H, H)), tb2=bias(keys[9], (N_FLOW, H), H),
        tw3=xavier(keys[10], (N_FLOW, H, D)), tb3=bias(keys[11], (N_FLOW, D), H),
    )


# ---------------- pure-JAX reference (mirrors the PyTorch module) ------------
def rle_loss_ref(pred, sigma_raw, target, p):
    sigma = jax.nn.sigmoid(sigma_raw)
    error = (pred - target) / (sigma + 1e-9)
    error = error.at[3].multiply(0.1)                # scales batch ROW 3

    def mlp(z, w1, b1, w2, b2, w3, b3):
        h = jax.nn.leaky_relu(z @ w1 + b1, 0.01)
        h = jax.nn.leaky_relu(h @ w2 + b2, 0.01)
        return h @ w3 + b3

    z = error
    logdet = jnp.zeros((pred.shape[0],), jnp.float32)
    for i in reversed(range(N_FLOW)):
        m = p['mask'][i]
        z_ = m * z
        s = jnp.tanh(mlp(z_, p['sw1'][i], p['sb1'][i], p['sw2'][i],
                         p['sb2'][i], p['sw3'][i], p['sb3'][i])) * (1 - m)
        t = mlp(z_, p['tw1'][i], p['tb1'][i], p['tw2'][i],
                p['tb2'][i], p['tw3'][i], p['tb3'][i]) * (1 - m)
        z = (1 - m) * (z - t) * jnp.exp(-s) + z_
        logdet = logdet - s.sum(axis=1)

    log_phi = (-0.5 * jnp.sum(z * z, axis=1) - 0.5 * D * LOG_2PI + logdet
               ).reshape(-1, 1)
    nf_loss = jnp.log(sigma) - log_phi
    loss_q = jnp.log(sigma * 2.0) + jnp.abs(error)
    loss = (nf_loss + loss_q) / pred.shape[0]
    return jnp.sum(loss)


if __name__ == "__main__":
    key = jax.random.PRNGKey(0)
    kp, ks, kt, kw = jax.random.split(key, 4)
    params = init_params(kw)

    # case 1: small batch, single tile, no padding
    N1 = 8
    pred1 = jax.random.normal(kp, (N1, D), jnp.float32)
    sigma1 = jax.random.normal(ks, (N1, D), jnp.float32)
    target1 = jax.random.normal(kt, (N1, D), jnp.float32)
    out1 = rle_loss(pred1, sigma1, target1, params)
    jax.block_until_ready(out1)
    ref1 = rle_loss_ref(pred1, sigma1, target1, params)
    assert jnp.allclose(out1, ref1, atol=5e-4, rtol=5e-4), (out1, ref1)

    # case 2: multi-tile grid + padding + global row-3 / global-N handling
    N2 = 40
    kp2, ks2, kt2 = jax.random.split(jax.random.PRNGKey(1), 3)
    pred2 = jax.random.normal(kp2, (N2, D), jnp.float32)
    sigma2 = jax.random.normal(ks2, (N2, D), jnp.float32)
    target2 = jax.random.normal(kt2, (N2, D), jnp.float32)
    out2 = rle_loss(pred2, sigma2, target2, params, tile_n=16)   # 3 tiles, padded
    jax.block_until_ready(out2)
    ref2 = rle_loss_ref(pred2, sigma2, target2, params)
    assert jnp.allclose(out2, ref2, atol=5e-4, rtol=5e-4), (out2, ref2)

    print("KERNEL_OK")
</pallas_src>

<mosaic_0001>
module attributes {stable_mosaic.version = 11 : i64} {
  func.func @rle_loss_kernel(%arg0: i32, %arg1: memref<8x4xf32, #tpu.memory_space<vmem>>, %arg2: memref<8x4xf32, #tpu.memory_space<vmem>>, %arg3: memref<8x4xf32, #tpu.memory_space<vmem>>, %arg4: memref<9x4xf32, #tpu.memory_space<vmem>>, %arg5: memref<9x4x128xf32, #tpu.memory_space<vmem>>, %arg6: memref<9x128xf32, #tpu.memory_space<vmem>>, %arg7: memref<9x128x128xf32, #tpu.memory_space<vmem>>, %arg8: memref<9x128xf32, #tpu.memory_space<vmem>>, %arg9: memref<9x128x8xf32, #tpu.memory_space<vmem>>, %arg10: memref<9x8xf32, #tpu.memory_space<vmem>>, %arg11: memref<1x8x128xf32, #tpu.memory_space<vmem>>) attributes {dimension_semantics = [#tpu.dimension_semantics<parallel>], iteration_bounds = array<i64: 1>, scalar_prefetch = 0 : i64, scratch_operands = 0 : i64, tpu.core_type = #tpu.core_type<tc>, window_params = [{transform_indices = @transform_0, window_bounds = array<i64: 8, 4>}, {transform_indices = @transform_1, window_bounds = array<i64: 8, 4>}, {transform_indices = @transform_2, window_bounds = array<i64: 8, 4>}, {pipeline_mode = #tpu.pipeline_mode<synchronous>, transform_indices = @transform_3, window_bounds = array<i64: 9, 4>}, {pipeline_mode = #tpu.pipeline_mode<synchronous>, transform_indices = @transform_4, window_bounds = array<i64: 9, 4, 128>}, {pipeline_mode = #tpu.pipeline_mode<synchronous>, transform_indices = @transform_5, window_bounds = array<i64: 9, 128>}, {pipeline_mode = #tpu.pipeline_mode<synchronous>, transform_indices = @transform_6, window_bounds = array<i64: 9, 128, 128>}, {pipeline_mode = #tpu.pipeline_mode<synchronous>, transform_indices = @transform_7, window_bounds = array<i64: 9, 128>}, {pipeline_mode = #tpu.pipeline_mode<synchronous>, transform_indices = @transform_8, window_bounds = array<i64: 9, 128, 8>}, {pipeline_mode = #tpu.pipeline_mode<synchronous>, transform_indices = @transform_9, window_bounds = array<i64: 9, 8>}, {transform_indices = @transform_10, window_bounds = array<i64: 1, 8, 128>}]} {
    %c0 = arith.constant 0 : index
    %c0_0 = arith.constant 0 : index
    %0 = vector.load %arg1[%c0, %c0_0] : memref<8x4xf32, #tpu.memory_space<vmem>>, vector<8x4xf32>
    %c0_1 = arith.constant 0 : index
    %c0_2 = arith.constant 0 : index
    %1 = vector.load %arg2[%c0_1, %c0_2] : memref<8x4xf32, #tpu.memory_space<vmem>>, vector<8x4xf32>
    %c0_3 = arith.constant 0 : index
    %c0_4 = arith.constant 0 : index
    %2 = vector.load %arg3[%c0_3, %c0_4] : memref<8x4xf32, #tpu.memory_space<vmem>>, vector<8x4xf32>
    %c8_i32 = arith.constant 8 : i32
    %3 = arith.muli %arg0, %c8_i32 : i32
    %4 = tpu.iota {dimensions = array<i32: 0>} : vector<8x4xi32>
    %5 = vector.broadcast %3 : i32 to vector<8x4xi32>
    %6 = arith.addi %5, %4 : vector<8x4xi32>
    %cst = arith.constant 0.000000e+00 : f32
    %7 = vector.broadcast %cst : f32 to vector<8x4xf32>
    %8 = arith.subf %7, %1 : vector<8x4xf32>
    %9 = math.exp %8 : vector<8x4xf32>
    %cst_5 = arith.constant 1.000000e+00 : f32
    %10 = vector.broadcast %cst_5 : f32 to vector<8x4xf32>
    %11 = arith.addf %10, %9 : vector<8x4xf32>
    %12 = math.log %11 : vector<8x4xf32>
    %cst_6 = arith.constant 0.000000e+00 : f32
    %13 = vector.broadcast %cst_6 : f32 to vector<8x4xf32>
    %14 = arith.subf %13, %12 : vector<8x4xf32>
    %c3_i32 = arith.constant 3 : i32
    %15 = vector.broadcast %c3_i32 : i32 to vector<8x4xi32>
    %16 = arith.cmpi eq, %6, %15 : vector<8x4xi32>
    %cst_7 = arith.constant 1.000000e-01 : f32
    %cst_8 = arith.constant 1.000000e+00 : f32
    %17 = vector.broadcast %cst_7 : f32 to vector<8x4xf32>
    %18 = vector.broadcast %cst_8 : f32 to vector<8x4xf32>
    %19 = arith.select %16, %17, %18 : vector<8x4xi1>, vector<8x4xf32>
    %20 = arith.subf %0, %2 : vector<8x4xf32>
    %21 = arith.mulf %20, %11 : vector<8x4xf32>
    %22 = arith.mulf %21, %19 : vector<8x4xf32>
    %cst_9 = arith.constant 0.000000e+00 : f32
    %23 = vector.broadcast %cst_9 : f32 to vector<8x1xf32>
    %c8 = arith.constant 8 : index
    %c0_10 = arith.constant 0 : index
    %24 = vector.load %arg4[%c8, %c0_10] : memref<9x4xf32, #tpu.memory_space<vmem>>, vector<1x4xf32>
    %cst_11 = arith.constant 1.000000e+00 : f32
    %25 = vector.broadcast %cst_11 : f32 to vector<1x4xf32>
    %26 = arith.subf %25, %24 : vector<1x4xf32>
    %c8_12 = arith.constant 8 : index
    %c0_13 = arith.constant 0 : index
    %27 = vector.load %arg6[%c8_12, %c0_13] : memref<9x128xf32, #tpu.memory_space<vmem>>, vector<1x128xf32>
    %28 = vector.shape_cast %27 : vector<1x128xf32> to vector<1x128xf32>
    %29 = vector.broadcast %28 : vector<1x128xf32> to vector<8x128xf32>
    %c8_14 = arith.constant 8 : index
    %c0_15 = arith.constant 0 : index
    %c0_16 = arith.constant 0 : index
    %30 = vector.load %arg5[%c8_14, %c0_15, %c0_16] : memref<9x4x128xf32, #tpu.memory_space<vmem>>, vector<1x4x128xf32>
    %31 = vector.shape_cast %30 : vector<1x4x128xf32> to vector<4x128xf32>
    %32 = vector.extract_strided_slice %22 {offsets = [0, 2], sizes = [8, 1], strides = [1, 1]} : vector<8x4xf32> to vector<8x1xf32>
    %33 = vector.extract_strided_slice %31 {offsets = [2, 0], sizes = [1, 128], strides = [1, 1]} : vector<4x128xf32> to vector<1x128xf32>
    %34 = vector.broadcast %32 : vector<8x1xf32> to vector<8x128xf32>
    %35 = vector.broadcast %33 : vector<1x128xf32> to vector<8x128xf32>
    %36 = arith.mulf %34, %35 : vector<8x128xf32>
    %37 = arith.addf %29, %36 : vector<8x128xf32>
    %38 = vector.extract_strided_slice %22 {offsets = [0, 3], sizes = [8, 1], strides = [1, 1]} : vector<8x4xf32> to vector<8x1xf32>
    %39 = vector.extract_strided_slice %31 {offsets = [3, 0], sizes = [1, 128], strides = [1, 1]} : vector<4x128xf32> to vector<1x128xf32>
    %40 = vector.broadcast %38 : vector<8x1xf32> to vector<8x128xf32>
    %41 = vector.broadcast %39 : vector<1x128xf32> to vector<8x128xf32>
    %42 = arith.mulf %40, %41 : vector<8x128xf32>
    %43 = arith.addf %37, %42 : vector<8x128xf32>
    %cst_17 = arith.constant 0.000000e+00 : f32
    %44 = vector.broadcast %cst_17 : f32 to vector<8x128xf32>
    %45 = arith.cmpf ogt, %43, %44 : vector<8x128xf32>
    %cst_18 = arith.constant 0.00999999977 : f32
    %46 = vector.broadcast %cst_18 : f32 to vector<8x128xf32>
    %47 = arith.mulf %46, %43 : vector<8x128xf32>
    %48 = arith.select %45, %43, %47 : vector<8x128xi1>, vector<8x128xf32>
    %c8_19 = arith.constant 8 : index
    %c0_20 = arith.constant 0 : index
    %c0_21 = arith.constant 0 : index
    %49 = vector.load %arg7[%c8_19, %c0_20, %c0_21] : memref<9x128x128xf32, #tpu.memory_space<vmem>>, vector<1x128x128xf32>
    %50 = vector.shape_cast %49 : vector<1x128x128xf32> to vector<128x128xf32>
    %cst_22 = arith.constant dense<0.000000e+00> : vector<8x128xf32>
    %51 = tpu.matmul %48, %50, %cst_22 {dimension_numbers = #tpu.dot_dimension_numbers<[1], [0], [0], [1], [0, 0, 1, 1], [], []>} : vector<8x128xf32>, vector<128x128xf32>, vector<8x128xf32> -> vector<8x128xf32>
    %c8_23 = arith.constant 8 : index
    %c0_24 = arith.constant 0 : index
    %52 = vector.load %arg8[%c8_23, %c0_24] : memref<9x128xf32, #tpu.memory_space<vmem>>, vector<1x128xf32>
    %53 = vector.broadcast %52 : vector<1x128xf32> to vector<8x128xf32>
    %54 = arith.addf %51, %53 : vector<8x128xf32>
    %cst_25 = arith.constant 0.000000e+00 : f32
    %55 = vector.broadcast %cst_25 : f32 to vector<8x128xf32>
    %56 = arith.cmpf ogt, %54, %55 : vector<8x128xf32>
    %cst_26 = arith.constant 0.00999999977 : f32
    %57 = vector.broadcast %cst_26 : f32 to vector<8x128xf32>
    %58 = arith.mulf %57, %54 : vector<8x128xf32>
    %59 = arith.select %56, %54, %58 : vector<8x128xi1>, vector<8x128xf32>
    %c8_27 = arith.constant 8 : index
    %c0_28 = arith.constant 0 : index
    %c0_29 = arith.constant 0 : index
    %60 = vector.load %arg9[%c8_27, %c0_28, %c0_29] : memref<9x128x8xf32, #tpu.memory_space<vmem>>, vector<1x128x8xf32>
    %61 = vector.shape_cast %60 : vector<1x128x8xf32> to vector<128x8xf32>
    %cst_30 = arith.constant dense<0.000000e+00> : vector<8x8xf32>
    %62 = tpu.matmul %59, %61, %cst_30 {dimension_numbers = #tpu.dot_dimension_numbers<[1], [0], [0], [1], [0, 0, 1, 1], [], []>} : vector<8x128xf32>, vector<128x8xf32>, vector<8x8xf32> -> vector<8x8xf32>
    %c8_31 = arith.constant 8 : index
    %c0_32 = arith.constant 0 : index
    %63 = vector.load %arg10[%c8_31, %c0_32] : memref<9x8xf32, #tpu.memory_space<vmem>>, vector<1x8xf32>
    %64 = vector.broadcast %63 : vector<1x8xf32> to vector<8x8xf32>
    %65 = arith.addf %62, %64 : vector<8x8xf32>
    %66 = vector.extract_strided_slice %65 {offsets = [0, 0], sizes = [8, 4], strides = [1, 1]} : vector<8x8xf32> to vector<8x4xf32>
    %67 = math.tanh %66 : vector<8x4xf32>
    %68 = vector.broadcast %26 : vector<1x4xf32> to vector<8x4xf32>
    %69 = arith.mulf %67, %68 : vector<8x4xf32>
    %70 = vector.extract_strided_slice %65 {offsets = [0, 4], sizes = [8, 4], strides = [1, 1]} : vector<8x8xf32> to vector<8x4xf32>
    %71 = vector.broadcast %24 : vector<1x4xf32> to vector<8x4xf32>
    %72 = arith.mulf %71, %22 : vector<8x4xf32>
    %73 = arith.subf %22, %70 : vector<8x4xf32>
    %cst_33 = arith.constant 0.000000e+00 : f32
    %74 = vector.broadcast %cst_33 : f32 to vector<8x4xf32>
    %75 = arith.subf %74, %69 : vector<8x4xf32>
    %76 = math.exp %75 : vector<8x4xf32>
    %77 = arith.mulf %73, %76 : vector<8x4xf32>
    %78 = vector.broadcast %26 : vector<1x4xf32> to vector<8x4xf32>
    %79 = arith.mulf %78, %77 : vector<8x4xf32>
    %80 = arith.addf %72, %79 : vector<8x4xf32>
    %cst_34 = arith.constant dense<0.000000e+00> : vector<8xf32>
    %81 = vector.multi_reduction <add>, %69, %cst_34 [1] : vector<8x4xf32> to vector<8xf32>
    %82 = vector.shape_cast %81 : vector<8xf32> to vector<8x1xf32>
    %83 = arith.subf %23, %82 : vector<8x1xf32>
    %c7 = arith.constant 7 : index
    %c0_35 = arith.constant 0 : index
    %84 = vector.load %arg4[%c7, %c0_35] : memref<9x4xf32, #tpu.memory_space<vmem>>, vector<1x4xf32>
    %cst_36 = arith.constant 1.000000e+00 : f32
    %85 = vector.broadcast %cst_36 : f32 to vector<1x4xf32>
    %86 = arith.subf %85, %84 : vector<1x4xf32>
    %c7_37 = arith.constant 7 : index
    %c0_38 = arith.constant 0 : index
    %87 = vector.load %arg6[%c7_37, %c0_38] : memref<9x128xf32, #tpu.memory_space<vmem>>, vector<1x128xf32>
    %88 = vector.shape_cast %87 : vector<1x128xf32> to vector<1x128xf32>
    %89 = vector.broadcast %88 : vector<1x128xf32> to vector<8x128xf32>
    %c7_39 = arith.constant 7 : index
    %c0_40 = arith.constant 0 : index
    %c0_41 = arith.constant 0 : index
    %90 = vector.load %arg5[%c7_39, %c0_40, %c0_41] : memref<9x4x128xf32, #tpu.memory_space<vmem>>, vector<1x4x128xf32>
    %91 = vector.shape_cast %90 : vector<1x4x128xf32> to vector<4x128xf32>
    %92 = vector.extract_strided_slice %80 {offsets = [0, 0], sizes = [8, 1], strides = [1, 1]} : vector<8x4xf32> to vector<8x1xf32>
    %93 = vector.extract_strided_slice %91 {offsets = [0, 0], sizes = [1, 128], strides = [1, 1]} : vector<4x128xf32> to vector<1x128xf32>
    %94 = vector.broadcast %92 : vector<8x1xf32> to vector<8x128xf32>
    %95 = vector.broadcast %93 : vector<1x128xf32> to vector<8x128xf32>
    %96 = arith.mulf %94, %95 : vector<8x128xf32>
    %97 = arith.addf %89, %96 : vector<8x128xf32>
    %98 = vector.extract_strided_slice %80 {offsets = [0, 2], sizes = [8, 1], strides = [1, 1]} : vector<8x4xf32> to vector<8x1xf32>
    %99 = vector.extract_strided_slice %91 {offsets = [2, 0], sizes = [1, 128], strides = [1, 1]} : vector<4x128xf32> to vector<1x128xf32>
    %100 = vector.broadcast %98 : vector<8x1xf32> to vector<8x128xf32>
    %101 = vector.broadcast %99 : vector<1x128xf32> to vector<8x128xf32>
    %102 = arith.mulf %100, %101 : vector<8x128xf32>
    %103 = arith.addf %97, %102 : vector<8x128xf32>
    %cst_42 = arith.constant 0.000000e+00 : f32
    %104 = vector.broadcast %cst_42 : f32 to vector<8x128xf32>
    %105 = arith.cmpf ogt, %103, %104 : vector<8x128xf32>
    %cst_43 = arith.constant 0.00999999977 : f32
    %106 = vector.broadcast %cst_43 : f32 to vector<8x128xf32>
    %107 = arith.mulf %106, %103 : vector<8x128xf32>
    %108 = arith.select %105, %103, %107 : vector<8x128xi1>, vector<8x128xf32>
    %c7_44 = arith.constant 7 : index
    %c0_45 = arith.constant 0 : index
    %c0_46 = arith.constant 0 : index
    %109 = vector.load %arg7[%c7_44, %c0_45, %c0_46] : memref<9x128x128xf32, #tpu.memory_space<vmem>>, vector<1x128x128xf32>
    %110 = vector.shape_cast %109 : vector<1x128x128xf32> to vector<128x128xf32>
    %cst_47 = arith.constant dense<0.000000e+00> : vector<8x128xf32>
    %111 = tpu.matmul %108, %110, %cst_47 {dimension_numbers = #tpu.dot_dimension_numbers<[1], [0], [0], [1], [0, 0, 1, 1], [], []>} : vector<8x128xf32>, vector<128x128xf32>, vector<8x128xf32> -> vector<8x128xf32>
    %c7_48 = arith.constant 7 : index
    %c0_49 = arith.constant 0 : index
    %112 = vector.load %arg8[%c7_48, %c0_49] : memref<9x128xf32, #tpu.memory_space<vmem>>, vector<1x128xf32>
    %113 = vector.broadcast %112 : vector<1x128xf32> to vector<8x128xf32>
    %114 = arith.addf %111, %113 : vector<8x128xf32>
    %cst_50 = arith.constant 0.000000e+00 : f32
    %115 = vector.broadcast %cst_50 : f32 to vector<8x128xf32>
    %116 = arith.cmpf ogt, %114, %115 : vector<8x128xf32>
    %cst_51 = arith.constant 0.00999999977 : f32
    %117 = vector.broadcast %cst_51 : f32 to vector<8x128xf32>
    %118 = arith.mulf %117, %114 : vector<8x128xf32>
    %119 = arith.select %116, %114, %118 : vector<8x128xi1>, vector<8x128xf32>
    %c7_52 = arith.constant 7 : index
    %c0_53 = arith.constant 0 : index
    %c0_54 = arith.constant 0 : index
    %120 = vector.load %arg9[%c7_52, %c0_53, %c0_54] : memref<9x128x8xf32, #tpu.memory_space<vmem>>, vector<1x128x8xf32>
    %121 = vector.shape_cast %120 : vector<1x128x8xf32> to vector<128x8xf32>
    %cst_55 = arith.constant dense<0.000000e+00> : vector<8x8xf32>
    %122 = tpu.matmul %119, %121, %cst_55 {dimension_numbers = #tpu.dot_dimension_numbers<[1], [0], [0], [1], [0, 0, 1, 1], [], []>} : vector<8x128xf32>, vector<128x8xf32>, vector<8x8xf32> -> vector<8x8xf32>
    %c7_56 = arith.constant 7 : index
    %c0_57 = arith.constant 0 : index
    %123 = vector.load %arg10[%c7_56, %c0_57] : memref<9x8xf32, #tpu.memory_space<vmem>>, vector<1x8xf32>
    %124 = vector.broadcast %123 : vector<1x8xf32> to vector<8x8xf32>
    %125 = arith.addf %122, %124 : vector<8x8xf32>
    %126 = vector.extract_strided_slice %125 {offsets = [0, 0], sizes = [8, 4], strides = [1, 1]} : vector<8x8xf32> to vector<8x4xf32>
    %127 = math.tanh %126 : vector<8x4xf32>
    %128 = vector.broadcast %86 : vector<1x4xf32> to vector<8x4xf32>
    %129 = arith.mulf %127, %128 : vector<8x4xf32>
    %130 = vector.extract_strided_slice %125 {offsets = [0, 4], sizes = [8, 4], strides = [1, 1]} : vector<8x8xf32> to vector<8x4xf32>
    %131 = vector.broadcast %84 : vector<1x4xf32> to vector<8x4xf32>
    %132 = arith.mulf %131, %80 : vector<8x4xf32>
    %133 = arith.subf %80, %130 : vector<8x4xf32>
    %cst_58 = arith.constant 0.000000e+00 : f32
    %134 = vector.broadcast %cst_58 : f32 to vector<8x4xf32>
    %135 = arith.subf %134, %129 : vector<8x4xf32>
    %136 = math.exp %135 : vector<8x4xf32>
    %137 = arith.mulf %133, %136 : vector<8x4xf32>
    %138 = vector.broadcast %86 : vector<1x4xf32> to vector<8x4xf32>
    %139 = arith.mulf %138, %137 : vector<8x4xf32>
    %140 = arith.addf %132, %139 : vector<8x4xf32>
    %cst_59 = arith.constant dense<0.000000e+00> : vector<8xf32>
    %141 = vector.multi_reduction <add>, %129, %cst_59 [1] : vector<8x4xf32> to vector<8xf32>
    %142 = vector.shape_cast %141 : vector<8xf32> to vector<8x1xf32>
    %143 = arith.subf %83, %142 : vector<8x1xf32>
    %c6 = arith.constant 6 : index
    %c0_60 = arith.constant 0 : index
    %144 = vector.load %arg4[%c6, %c0_60] : memref<9x4xf32, #tpu.memory_space<vmem>>, vector<1x4xf32>
    %cst_61 = arith.constant 1.000000e+00 : f32
    %145 = vector.broadcast %cst_61 : f32 to vector<1x4xf32>
    %146 = arith.subf %145, %144 : vector<1x4xf32>
    %c6_62 = arith.constant 6 : index
    %c0_63 = arith.constant 0 : index
    %147 = vector.load %arg6[%c6_62, %c0_63] : memref<9x128xf32, #tpu.memory_space<vmem>>, vector<1x128xf32>
    %148 = vector.shape_cast %147 : vector<1x128xf32> to vector<1x128xf32>
    %149 = vector.broadcast %148 : vector<1x128xf32> to vector<8x128xf32>
    %c6_64 = arith.constant 6 : index
    %c0_65 = arith.constant 0 : index
    %c0_66 = arith.constant 0 : index
    %150 = vector.load %arg5[%c6_64, %c0_65, %c0_66] : memref<9x4x128xf32, #tpu.memory_space<vmem>>, vector<1x4x128xf32>
    %151 = vector.shape_cast %150 : vector<1x4x128xf32> to vector<4x128xf32>
    %152 = vector.extract_strided_slice %140 {offsets = [0, 0], sizes = [8, 1], strides = [1, 1]} : vector<8x4xf32> to vector<8x1xf32>
    %153 = vector.extract_strided_slice %151 {offsets = [0, 0], sizes = [1, 128], strides = [1, 1]} : vector<4x128xf32> to vector<1x128xf32>
    %154 = vector.broadcast %152 : vector<8x1xf32> to vector<8x128xf32>
    %155 = vector.broadcast %153 : vector<1x128xf32> to vector<8x128xf32>
    %156 = arith.mulf %154, %155 : vector<8x128xf32>
    %157 = arith.addf %149, %156 : vector<8x128xf32>
    %158 = vector.extract_strided_slice %140 {offsets = [0, 1], sizes = [8, 1], strides = [1, 1]} : vector<8x4xf32> to vector<8x1xf32>
    %159 = vector.extract_strided_slice %151 {offsets = [1, 0], sizes = [1, 128], strides = [1, 1]} : vector<4x128xf32> to vector<1x128xf32>
    %160 = vector.broadcast %158 : vector<8x1xf32> to vector<8x128xf32>
    %161 = vector.broadcast %159 : vector<1x128xf32> to vector<8x128xf32>
    %162 = arith.mulf %160, %161 : vector<8x128xf32>
    %163 = arith.addf %157, %162 : vector<8x128xf32>
    %cst_67 = arith.constant 0.000000e+00 : f32
    %164 = vector.broadcast %cst_67 : f32 to vector<8x128xf32>
    %165 = arith.cmpf ogt, %163, %164 : vector<8x128xf32>
    %cst_68 = arith.constant 0.00999999977 : f32
    %166 = vector.broadcast %cst_68 : f32 to vector<8x128xf32>
    %167 = arith.mulf %166, %163 : vector<8x128xf32>
    %168 = arith.select %165, %163, %167 : vector<8x128xi1>, vector<8x128xf32>
    %c6_69 = arith.constant 6 : index
    %c0_70 = arith.constant 0 : index
    %c0_71 = arith.constant 0 : index
    %169 = vector.load %arg7[%c6_69, %c0_70, %c0_71] : memref<9x128x128xf32, #tpu.memory_space<vmem>>, vector<1x128x128xf32>
    %170 = vector.shape_cast %169 : vector<1x128x128xf32> to vector<128x128xf32>
    %cst_72 = arith.constant dense<0.000000e+00> : vector<8x128xf32>
    %171 = tpu.matmul %168, %170, %cst_72 {dimension_numbers = #tpu.dot_dimension_numbers<[1], [0], [0], [1], [0, 0, 1, 1], [], []>} : vector<8x128xf32>, vector<128x128xf32>, vector<8x128xf32> -> vector<8x128xf32>
    %c6_73 = arith.constant 6 : index
    %c0_74 = arith.constant 0 : index
    %172 = vector.load %arg8[%c6_73, %c0_74] : memref<9x128xf32, #tpu.memory_space<vmem>>, vector<1x128xf32>
    %173 = vector.broadcast %172 : vector<1x128xf32> to vector<8x128xf32>
    %174 = arith.addf %171, %173 : vector<8x128xf32>
    %cst_75 = arith.constant 0.000000e+00 : f32
    %175 = vector.broadcast %cst_75 : f32 to vector<8x128xf32>
    %176 = arith.cmpf ogt, %174, %175 : vector<8x128xf32>
    %cst_76 = arith.constant 0.00999999977 : f32
    %177 = vector.broadcast %cst_76 : f32 to vector<8x128xf32>
    %178 = arith.mulf %177, %174 : vector<8x128xf32>
    %179 = arith.select %176, %174, %178 : vector<8x128xi1>, vector<8x128xf32>
    %c6_77 = arith.constant 6 : index
    %c0_78 = arith.constant 0 : index
    %c0_79 = arith.constant 0 : index
    %180 = vector.load %arg9[%c6_77, %c0_78, %c0_79] : memref<9x128x8xf32, #tpu.memory_space<vmem>>, vector<1x128x8xf32>
    %181 = vector.shape_cast %180 : vector<1x128x8xf32> to vector<128x8xf32>
    %cst_80 = arith.constant dense<0.000000e+00> : vector<8x8xf32>
    %182 = tpu.matmul %179, %181, %cst_80 {dimension_numbers = #tpu.dot_dimension_numbers<[1], [0], [0], [1], [0, 0, 1, 1], [], []>} : vector<8x128xf32>, vector<128x8xf32>, vector<8x8xf32> -> vector<8x8xf32>
    %c6_81 = arith.constant 6 : index
    %c0_82 = arith.constant 0 : index
    %183 = vector.load %arg10[%c6_81, %c0_82] : memref<9x8xf32, #tpu.memory_space<vmem>>, vector<1x8xf32>
    %184 = vector.broadcast %183 : vector<1x8xf32> to vector<8x8xf32>
    %185 = arith.addf %182, %184 : vector<8x8xf32>
    %186 = vector.extract_strided_slice %185 {offsets = [0, 0], sizes = [8, 4], strides = [1, 1]} : vector<8x8xf32> to vector<8x4xf32>
    %187 = math.tanh %186 : vector<8x4xf32>
    %188 = vector.broadcast %146 : vector<1x4xf32> to vector<8x4xf32>
    %189 = arith.mulf %187, %188 : vector<8x4xf32>
    %190 = vector.extract_strided_slice %185 {offsets = [0, 4], sizes = [8, 4], strides = [1, 1]} : vector<8x8xf32> to vector<8x4xf32>
    %191 = vector.broadcast %144 : vector<1x4xf32> to vector<8x4xf32>
    %192 = arith.mulf %191, %140 : vector<8x4xf32>
    %193 = arith.subf %140, %190 : vector<8x4xf32>
    %cst_83 = arith.constant 0.000000e+00 : f32
    %194 = vector.broadcast %cst_83 : f32 to vector<8x4xf32>
    %195 = arith.subf %194, %189 : vector<8x4xf32>
    %196 = math.exp %195 : vector<8x4xf32>
    %197 = arith.mulf %193, %196 : vector<8x4xf32>
    %198 = vector.broadcast %146 : vector<1x4xf32> to vector<8x4xf32>
    %199 = arith.mulf %198, %197 : vector<8x4xf32>
    %200 = arith.addf %192, %199 : vector<8x4xf32>
    %cst_84 = arith.constant dense<0.000000e+00> : vector<8xf32>
    %201 = vector.multi_reduction <add>, %189, %cst_84 [1] : vector<8x4xf32> to vector<8xf32>
    %202 = vector.shape_cast %201 : vector<8xf32> to vector<8x1xf32>
    %203 = arith.subf %143, %202 : vector<8x1xf32>
    %c5 = arith.constant 5 : index
    %c0_85 = arith.constant 0 : index
    %204 = vector.load %arg4[%c5, %c0_85] : memref<9x4xf32, #tpu.memory_space<vmem>>, vector<1x4xf32>
    %cst_86 = arith.constant 1.000000e+00 : f32
    %205 = vector.broadcast %cst_86 : f32 to vector<1x4xf32>
    %206 = arith.subf %205, %204 : vector<1x4xf32>
    %c5_87 = arith.constant 5 : index
    %c0_88 = arith.constant 0 : index
    %207 = vector.load %arg6[%c5_87, %c0_88] : memref<9x128xf32, #tpu.memory_space<vmem>>, vector<1x128xf32>
    %208 = vector.shape_cast %207 : vector<1x128xf32> to vector<1x128xf32>
    %209 = vector.broadcast %208 : vector<1x128xf32> to vector<8x128xf32>
    %c5_89 = arith.constant 5 : index
    %c0_90 = arith.constant 0 : index
    %c0_91 = arith.constant 0 : index
    %210 = vector.load %arg5[%c5_89, %c0_90, %c0_91] : memref<9x4x128xf32, #tpu.memory_space<vmem>>, vector<1x4x128xf32>
    %211 = vector.shape_cast %210 : vector<1x4x128xf32> to vector<4x128xf32>
    %212 = vector.extract_strided_slice %200 {offsets = [0, 2], sizes = [8, 1], strides = [1, 1]} : vector<8x4xf32> to vector<8x1xf32>
    %213 = vector.extract_strided_slice %211 {offsets = [2, 0], sizes = [1, 128], strides = [1, 1]} : vector<4x128xf32> to vector<1x128xf32>
    %214 = vector.broadcast %212 : vector<8x1xf32> to vector<8x128xf32>
    %215 = vector.broadcast %213 : vector<1x128xf32> to vector<8x128xf32>
    %216 = arith.mulf %214, %215 : vector<8x128xf32>
    %217 = arith.addf %209, %216 : vector<8x128xf32>
    %218 = vector.extract_strided_slice %200 {offsets = [0, 3], sizes = [8, 1], strides = [1, 1]} : vector<8x4xf32> to vector<8x1xf32>
    %219 = vector.extract_strided_slice %211 {offsets = [3, 0], sizes = [1, 128], strides = [1, 1]} : vector<4x128xf32> to vector<1x128xf32>
    %220 = vector.broadcast %218 : vector<8x1xf32> to vector<8x128xf32>
    %221 = vector.broadcast %219 : vector<1x128xf32> to vector<8x128xf32>
    %222 = arith.mulf %220, %221 : vector<8x128xf32>
    %223 = arith.addf %217, %222 : vector<8x128xf32>
    %cst_92 = arith.constant 0.000000e+00 : f32
    %224 = vector.broadcast %cst_92 : f32 to vector<8x128xf32>
    %225 = arith.cmpf ogt, %223, %224 : vector<8x128xf32>
    %cst_93 = arith.constant 0.00999999977 : f32
    %226 = vector.broadcast %cst_93 : f32 to vector<8x128xf32>
    %227 = arith.mulf %226, %223 : vector<8x128xf32>
    %228 = arith.select %225, %223, %227 : vector<8x128xi1>, vector<8x128xf32>
    %c5_94 = arith.constant 5 : index
    %c0_95 = arith.constant 0 : index
    %c0_96 = arith.constant 0 : index
    %229 = vector.load %arg7[%c5_94, %c0_95, %c0_96] : memref<9x128x128xf32, #tpu.memory_space<vmem>>, vector<1x128x128xf32>
    %230 = vector.shape_cast %229 : vector<1x128x128xf32> to vector<128x128xf32>
    %cst_97 = arith.constant dense<0.000000e+00> : vector<8x128xf32>
    %231 = tpu.matmul %228, %230, %cst_97 {dimension_numbers = #tpu.dot_dimension_numbers<[1], [0], [0], [1], [0, 0, 1, 1], [], []>} : vector<8x128xf32>, vector<128x128xf32>, vector<8x128xf32> -> vector<8x128xf32>
    %c5_98 = arith.constant 5 : index
    %c0_99 = arith.constant 0 : index
    %232 = vector.load %arg8[%c5_98, %c0_99] : memref<9x128xf32, #tpu.memory_space<vmem>>, vector<1x128xf32>
    %233 = vector.broadcast %232 : vector<1x128xf32> to vector<8x128xf32>
    %234 = arith.addf %231, %233 : vector<8x128xf32>
    %cst_100 = arith.constant 0.000000e+00 : f32
    %235 = vector.broadcast %cst_100 : f32 to vector<8x128xf32>
    %236 = arith.cmpf ogt, %234, %235 : vector<8x128xf32>
    %cst_101 = arith.constant 0.00999999977 : f32
    %237 = vector.broadcast %cst_101 : f32 to vector<8x128xf32>
    %238 = arith.mulf %237, %234 : vector<8x128xf32>
    %239 = arith.select %236, %234, %238 : vector<8x128xi1>, vector<8x128xf32>
    %c5_102 = arith.constant 5 : index
    %c0_103 = arith.constant 0 : index
    %c0_104 = arith.constant 0 : index
    %240 = vector.load %arg9[%c5_102, %c0_103, %c0_104] : memref<9x128x8xf32, #tpu.memory_space<vmem>>, vector<1x128x8xf32>
    %241 = vector.shape_cast %240 : vector<1x128x8xf32> to vector<128x8xf32>
    %cst_105 = arith.constant dense<0.000000e+00> : vector<8x8xf32>
    %242 = tpu.matmul %239, %241, %cst_105 {dimension_numbers = #tpu.dot_dimension_numbers<[1], [0], [0], [1], [0, 0, 1, 1], [], []>} : vector<8x128xf32>, vector<128x8xf32>, vector<8x8xf32> -> vector<8x8xf32>
    %c5_106 = arith.constant 5 : index
    %c0_107 = arith.constant 0 : index
    %243 = vector.load %arg10[%c5_106, %c0_107] : memref<9x8xf32, #tpu.memory_space<vmem>>, vector<1x8xf32>
    %244 = vector.broadcast %243 : vector<1x8xf32> to vector<8x8xf32>
    %245 = arith.addf %242, %244 : vector<8x8xf32>
    %246 = vector.extract_strided_slice %245 {offsets = [0, 0], sizes = [8, 4], strides = [1, 1]} : vector<8x8xf32> to vector<8x4xf32>
    %247 = math.tanh %246 : vector<8x4xf32>
    %248 = vector.broadcast %206 : vector<1x4xf32> to vector<8x4xf32>
    %249 = arith.mulf %247, %248 : vector<8x4xf32>
    %250 = vector.extract_strided_slice %245 {offsets = [0, 4], sizes = [8, 4], strides = [1, 1]} : vector<8x8xf32> to vector<8x4xf32>
    %251 = vector.broadcast %204 : vector<1x4xf32> to vector<8x4xf32>
    %252 = arith.mulf %251, %200 : vector<8x4xf32>
    %253 = arith.subf %200, %250 : vector<8x4xf32>
    %cst_108 = arith.constant 0.000000e+00 : f32
    %254 = vector.broadcast %cst_108 : f32 to vector<8x4xf32>
    %255 = arith.subf %254, %249 : vector<8x4xf32>
    %256 = math.exp %255 : vector<8x4xf32>
    %257 = arith.mulf %253, %256 : vector<8x4xf32>
    %258 = vector.broadcast %206 : vector<1x4xf32> to vector<8x4xf32>
    %259 = arith.mulf %258, %257 : vector<8x4xf32>
    %260 = arith.addf %252, %259 : vector<8x4xf32>
    %cst_109 = arith.constant dense<0.000000e+00> : vector<8xf32>
    %261 = vector.multi_reduction <add>, %249, %cst_109 [1] : vector<8x4xf32> to vector<8xf32>
    %262 = vector.shape_cast %261 : vector<8xf32> to vector<8x1xf32>
    %263 = arith.subf %203, %262 : vector<8x1xf32>
    %c4 = arith.constant 4 : index
    %c0_110 = arith.constant 0 : index
    %264 = vector.load %arg4[%c4, %c0_110] : memref<9x4xf32, #tpu.memory_space<vmem>>, vector<1x4xf32>
    %cst_111 = arith.constant 1.000000e+00 : f32
    %265 = vector.broadcast %cst_111 : f32 to vector<1x4xf32>
    %266 = arith.subf %265, %264 : vector<1x4xf32>
    %c4_112 = arith.constant 4 : index
    %c0_113 = arith.constant 0 : index
    %267 = vector.load %arg6[%c4_112, %c0_113] : memref<9x128xf32, #tpu.memory_space<vmem>>, vector<1x128xf32>
    %268 = vector.shape_cast %267 : vector<1x128xf32> to vector<1x128xf32>
    %269 = vector.broadcast %268 : vector<1x128xf32> to vector<8x128xf32>
    %c4_114 = arith.constant 4 : index
    %c0_115 = arith.constant 0 : index
    %c0_116 = arith.constant 0 : index
    %270 = vector.load %arg5[%c4_114, %c0_115, %c0_116] : memref<9x4x128xf32, #tpu.memory_space<vmem>>, vector<1x4x128xf32>
    %271 = vector.shape_cast %270 : vector<1x4x128xf32> to vector<4x128xf32>
    %272 = vector.extract_strided_slice %260 {offsets = [0, 0], sizes = [8, 1], strides = [1, 1]} : vector<8x4xf32> to vector<8x1xf32>
    %273 = vector.extract_strided_slice %271 {offsets = [0, 0], sizes = [1, 128], strides = [1, 1]} : vector<4x128xf32> to vector<1x128xf32>
    %274 = vector.broadcast %272 : vector<8x1xf32> to vector<8x128xf32>
    %275 = vector.broadcast %273 : vector<1x128xf32> to vector<8x128xf32>
    %276 = arith.mulf %274, %275 : vector<8x128xf32>
    %277 = arith.addf %269, %276 : vector<8x128xf32>
    %278 = vector.extract_strided_slice %260 {offsets = [0, 2], sizes = [8, 1], strides = [1, 1]} : vector<8x4xf32> to vector<8x1xf32>
    %279 = vector.extract_strided_slice %271 {offsets = [2, 0], sizes = [1, 128], strides = [1, 1]} : vector<4x128xf32> to vector<1x128xf32>
    %280 = vector.broadcast %278 : vector<8x1xf32> to vector<8x128xf32>
    %281 = vector.broadcast %279 : vector<1x128xf32> to vector<8x128xf32>
    %282 = arith.mulf %280, %281 : vector<8x128xf32>
    %283 = arith.addf %277, %282 : vector<8x128xf32>
    %cst_117 = arith.constant 0.000000e+00 : f32
    %284 = vector.broadcast %cst_117 : f32 to vector<8x128xf32>
    %285 = arith.cmpf ogt, %283, %284 : vector<8x128xf32>
    %cst_118 = arith.constant 0.00999999977 : f32
    %286 = vector.broadcast %cst_118 : f32 to vector<8x128xf32>
    %287 = arith.mulf %286, %283 : vector<8x128xf32>
    %288 = arith.select %285, %283, %287 : vector<8x128xi1>, vector<8x128xf32>
    %c4_119 = arith.constant 4 : index
    %c0_120 = arith.constant 0 : index
    %c0_121 = arith.constant 0 : index
    %289 = vector.load %arg7[%c4_119, %c0_120, %c0_121] : memref<9x128x128xf32, #tpu.memory_space<vmem>>, vector<1x128x128xf32>
    %290 = vector.shape_cast %289 : vector<1x128x128xf32> to vector<128x128xf32>
    %cst_122 = arith.constant dense<0.000000e+00> : vector<8x128xf32>
    %291 = tpu.matmul %288, %290, %cst_122 {dimension_numbers = #tpu.dot_dimension_numbers<[1], [0], [0], [1], [0, 0, 1, 1], [], []>} : vector<8x128xf32>, vector<128x128xf32>, vector<8x128xf32> -> vector<8x128xf32>
    %c4_123 = arith.constant 4 : index
    %c0_124 = arith.constant 0 : index
    %292 = vector.load %arg8[%c4_123, %c0_124] : memref<9x128xf32, #tpu.memory_space<vmem>>, vector<1x128xf32>
    %293 = vector.broadcast %292 : vector<1x128xf32> to vector<8x128xf32>
    %294 = arith.addf %291, %293 : vector<8x128xf32>
    %cst_125 = arith.constant 0.000000e+00 : f32
    %295 = vector.broadcast %cst_125 : f32 to vector<8x128xf32>
    %296 = arith.cmpf ogt, %294, %295 : vector<8x128xf32>
    %cst_126 = arith.constant 0.00999999977 : f32
    %297 = vector.broadcast %cst_126 : f32 to vector<8x128xf32>
    %298 = arith.mulf %297, %294 : vector<8x128xf32>
    %299 = arith.select %296, %294, %298 : vector<8x128xi1>, vector<8x128xf32>
    %c4_127 = arith.constant 4 : index
    %c0_128 = arith.constant 0 : index
    %c0_129 = arith.constant 0 : index
    %300 = vector.load %arg9[%c4_127, %c0_128, %c0_129] : memref<9x128x8xf32, #tpu.memory_space<vmem>>, vector<1x128x8xf32>
    %301 = vector.shape_cast %300 : vector<1x128x8xf32> to vector<128x8xf32>
    %cst_130 = arith.constant dense<0.000000e+00> : vector<8x8xf32>
    %302 = tpu.matmul %299, %301, %cst_130 {dimension_numbers = #tpu.dot_dimension_numbers<[1], [0], [0], [1], [0, 0, 1, 1], [], []>} : vector<8x128xf32>, vector<128x8xf32>, vector<8x8xf32> -> vector<8x8xf32>
    %c4_131 = arith.constant 4 : index
    %c0_132 = arith.constant 0 : index
    %303 = vector.load %arg10[%c4_131, %c0_132] : memref<9x8xf32, #tpu.memory_space<vmem>>, vector<1x8xf32>
    %304 = vector.broadcast %303 : vector<1x8xf32> to vector<8x8xf32>
    %305 = arith.addf %302, %304 : vector<8x8xf32>
    %306 = vector.extract_strided_slice %305 {offsets = [0, 0], sizes = [8, 4], strides = [1, 1]} : vector<8x8xf32> to vector<8x4xf32>
    %307 = math.tanh %306 : vector<8x4xf32>
    %308 = vector.broadcast %266 : vector<1x4xf32> to vector<8x4xf32>
    %309 = arith.mulf %307, %308 : vector<8x4xf32>
    %310 = vector.extract_strided_slice %305 {offsets = [0, 4], sizes = [8, 4], strides = [1, 1]} : vector<8x8xf32> to vector<8x4xf32>
    %311 = vector.broadcast %264 : vector<1x4xf32> to vector<8x4xf32>
    %312 = arith.mulf %311, %260 : vector<8x4xf32>
    %313 = arith.subf %260, %310 : vector<8x4xf32>
    %cst_133 = arith.constant 0.000000e+00 : f32
    %314 = vector.broadcast %cst_133 : f32 to vector<8x4xf32>
    %315 = arith.subf %314, %309 : vector<8x4xf32>
    %316 = math.exp %315 : vector<8x4xf32>
    %317 = arith.mulf %313, %316 : vector<8x4xf32>
    %318 = vector.broadcast %266 : vector<1x4xf32> to vector<8x4xf32>
    %319 = arith.mulf %318, %317 : vector<8x4xf32>
    %320 = arith.addf %312, %319 : vector<8x4xf32>
    %cst_134 = arith.constant dense<0.000000e+00> : vector<8xf32>
    %321 = vector.multi_reduction <add>, %309, %cst_134 [1] : vector<8x4xf32> to vector<8xf32>
    %322 = vector.shape_cast %321 : vector<8xf32> to vector<8x1xf32>
    %323 = arith.subf %263, %322 : vector<8x1xf32>
    %c3 = arith.constant 3 : index
    %c0_135 = arith.constant 0 : index
    %324 = vector.load %arg4[%c3, %c0_135] : memref<9x4xf32, #tpu.memory_space<vmem>>, vector<1x4xf32>
    %cst_136 = arith.constant 1.000000e+00 : f32
    %325 = vector.broadcast %cst_136 : f32 to vector<1x4xf32>
    %326 = arith.subf %325, %324 : vector<1x4xf32>
    %c3_137 = arith.constant 3 : index
    %c0_138 = arith.constant 0 : index
    %327 = vector.load %arg6[%c3_137, %c0_138] : memref<9x128xf32, #tpu.memory_space<vmem>>, vector<1x128xf32>
    %328 = vector.shape_cast %327 : vector<1x128xf32> to vector<1x128xf32>
    %329 = vector.broadcast %328 : vector<1x128xf32> to vector<8x128xf32>
    %c3_139 = arith.constant 3 : index
    %c0_140 = arith.constant 0 : index
    %c0_141 = arith.constant 0 : index
    %330 = vector.load %arg5[%c3_139, %c0_140, %c0_141] : memref<9x4x128xf32, #tpu.memory_space<vmem>>, vector<1x4x128xf32>
    %331 = vector.shape_cast %330 : vector<1x4x128xf32> to vector<4x128xf32>
    %332 = vector.extract_strided_slice %320 {offsets = [0, 0], sizes = [8, 1], strides = [1, 1]} : vector<8x4xf32> to vector<8x1xf32>
    %333 = vector.extract_strided_slice %331 {offsets = [0, 0], sizes = [1, 128], strides = [1, 1]} : vector<4x128xf32> to vector<1x128xf32>
    %334 = vector.broadcast %332 : vector<8x1xf32> to vector<8x128xf32>
    %335 = vector.broadcast %333 : vector<1x128xf32> to vector<8x128xf32>
    %336 = arith.mulf %334, %335 : vector<8x128xf32>
    %337 = arith.addf %329, %336 : vector<8x128xf32>
    %338 = vector.extract_strided_slice %320 {offsets = [0, 1], sizes = [8, 1], strides = [1, 1]} : vector<8x4xf32> to vector<8x1xf32>
    %339 = vector.extract_strided_slice %331 {offsets = [1, 0], sizes = [1, 128], strides = [1, 1]} : vector<4x128xf32> to vector<1x128xf32>
    %340 = vector.broadcast %338 : vector<8x1xf32> to vector<8x128xf32>
    %341 = vector.broadcast %339 : vector<1x128xf32> to vector<8x128xf32>
    %342 = arith.mulf %340, %341 : vector<8x128xf32>
    %343 = arith.addf %337, %342 : vector<8x128xf32>
    %cst_142 = arith.constant 0.000000e+00 : f32
    %344 = vector.broadcast %cst_142 : f32 to vector<8x128xf32>
    %345 = arith.cmpf ogt, %343, %344 : vector<8x128xf32>
    %cst_143 = arith.constant 0.00999999977 : f32
    %346 = vector.broadcast %cst_143 : f32 to vector<8x128xf32>
    %347 = arith.mulf %346, %343 : vector<8x128xf32>
    %348 = arith.select %345, %343, %347 : vector<8x128xi1>, vector<8x128xf32>
    %c3_144 = arith.constant 3 : index
    %c0_145 = arith.constant 0 : index
    %c0_146 = arith.constant 0 : index
    %349 = vector.load %arg7[%c3_144, %c0_145, %c0_146] : memref<9x128x128xf32, #tpu.memory_space<vmem>>, vector<1x128x128xf32>
    %350 = vector.shape_cast %349 : vector<1x128x128xf32> to vector<128x128xf32>
    %cst_147 = arith.constant dense<0.000000e+00> : vector<8x128xf32>
    %351 = tpu.matmul %348, %350, %cst_147 {dimension_numbers = #tpu.dot_dimension_numbers<[1], [0], [0], [1], [0, 0, 1, 1], [], []>} : vector<8x128xf32>, vector<128x128xf32>, vector<8x128xf32> -> vector<8x128xf32>
    %c3_148 = arith.constant 3 : index
    %c0_149 = arith.constant 0 : index
    %352 = vector.load %arg8[%c3_148, %c0_149] : memref<9x128xf32, #tpu.memory_space<vmem>>, vector<1x128xf32>
    %353 = vector.broadcast %352 : vector<1x128xf32> to vector<8x128xf32>
    %354 = arith.addf %351, %353 : vector<8x128xf32>
    %cst_150 = arith.constant 0.000000e+00 : f32
    %355 = vector.broadcast %cst_150 : f32 to vector<8x128xf32>
    %356 = arith.cmpf ogt, %354, %355 : vector<8x128xf32>
    %cst_151 = arith.constant 0.00999999977 : f32
    %357 = vector.broadcast %cst_151 : f32 to vector<8x128xf32>
    %358 = arith.mulf %357, %354 : vector<8x128xf32>
    %359 = arith.select %356, %354, %358 : vector<8x128xi1>, vector<8x128xf32>
    %c3_152 = arith.constant 3 : index
    %c0_153 = arith.constant 0 : index
    %c0_154 = arith.constant 0 : index
    %360 = vector.load %arg9[%c3_152, %c0_153, %c0_154] : memref<9x128x8xf32, #tpu.memory_space<vmem>>, vector<1x128x8xf32>
    %361 = vector.shape_cast %360 : vector<1x128x8xf32> to vector<128x8xf32>
    %cst_155 = arith.constant dense<0.000000e+00> : vector<8x8xf32>
    %362 = tpu.matmul %359, %361, %cst_155 {dimension_numbers = #tpu.dot_dimension_numbers<[1], [0], [0], [1], [0, 0, 1, 1], [], []>} : vector<8x128xf32>, vector<128x8xf32>, vector<8x8xf32> -> vector<8x8xf32>
    %c3_156 = arith.constant 3 : index
    %c0_157 = arith.constant 0 : index
    %363 = vector.load %arg10[%c3_156, %c0_157] : memref<9x8xf32, #tpu.memory_space<vmem>>, vector<1x8xf32>
    %364 = vector.broadcast %363 : vector<1x8xf32> to vector<8x8xf32>
    %365 = arith.addf %362, %364 : vector<8x8xf32>
    %366 = vector.extract_strided_slice %365 {offsets = [0, 0], sizes = [8, 4], strides = [1, 1]} : vector<8x8xf32> to vector<8x4xf32>
    %367 = math.tanh %366 : vector<8x4xf32>
    %368 = vector.broadcast %326 : vector<1x4xf32> to vector<8x4xf32>
    %369 = arith.mulf %367, %368 : vector<8x4xf32>
    %370 = vector.extract_strided_slice %365 {offsets = [0, 4], sizes = [8, 4], strides = [1, 1]} : vector<8x8xf32> to vector<8x4xf32>
    %371 = vector.broadcast %324 : vector<1x4xf32> to vector<8x4xf32>
    %372 = arith.mulf %371, %320 : vector<8x4xf32>
    %373 = arith.subf %320, %370 : vector<8x4xf32>
    %cst_158 = arith.constant 0.000000e+00 : f32
    %374 = vector.broadcast %cst_158 : f32 to vector<8x4xf32>
    %375 = arith.subf %374, %369 : vector<8x4xf32>
    %376 = math.exp %375 : vector<8x4xf32>
    %377 = arith.mulf %373, %376 : vector<8x4xf32>
    %378 = vector.broadcast %326 : vector<1x4xf32> to vector<8x4xf32>
    %379 = arith.mulf %378, %377 : vector<8x4xf32>
    %380 = arith.addf %372, %379 : vector<8x4xf32>
    %cst_159 = arith.constant dense<0.000000e+00> : vector<8xf32>
    %381 = vector.multi_reduction <add>, %369, %cst_159 [1] : vector<8x4xf32> to vector<8xf32>
    %382 = vector.shape_cast %381 : vector<8xf32> to vector<8x1xf32>
    %383 = arith.subf %323, %382 : vector<8x1xf32>
    %c2 = arith.constant 2 : index
    %c0_160 = arith.constant 0 : index
    %384 = vector.load %arg4[%c2, %c0_160] : memref<9x4xf32, #tpu.memory_space<vmem>>, vector<1x4xf32>
    %cst_161 = arith.constant 1.000000e+00 : f32
    %385 = vector.broadcast %cst_161 : f32 to vector<1x4xf32>
    %386 = arith.subf %385, %384 : vector<1x4xf32>
    %c2_162 = arith.constant 2 : index
    %c0_163 = arith.constant 0 : index
    %387 = vector.load %arg6[%c2_162, %c0_163] : memref<9x128xf32, #tpu.memory_space<vmem>>, vector<1x128xf32>
    %388 = vector.shape_cast %387 : vector<1x128xf32> to vector<1x128xf32>
    %389 = vector.broadcast %388 : vector<1x128xf32> to vector<8x128xf32>
    %c2_164 = arith.constant 2 : index
    %c0_165 = arith.constant 0 : index
    %c0_166 = arith.constant 0 : index
    %390 = vector.load %arg5[%c2_164, %c0_165, %c0_166] : memref<9x4x128xf32, #tpu.memory_space<vmem>>, vector<1x4x128xf32>
    %391 = vector.shape_cast %390 : vector<1x4x128xf32> to vector<4x128xf32>
    %392 = vector.extract_strided_slice %380 {offsets = [0, 2], sizes = [8, 1], strides = [1, 1]} : vector<8x4xf32> to vector<8x1xf32>
    %393 = vector.extract_strided_slice %391 {offsets = [2, 0], sizes = [1, 128], strides = [1, 1]} : vector<4x128xf32> to vector<1x128xf32>
    %394 = vector.broadcast %392 : vector<8x1xf32> to vector<8x128xf32>
    %395 = vector.broadcast %393 : vector<1x128xf32> to vector<8x128xf32>
    %396 = arith.mulf %394, %395 : vector<8x128xf32>
    %397 = arith.addf %389, %396 : vector<8x128xf32>
    %398 = vector.extract_strided_slice %380 {offsets = [0, 3], sizes = [8, 1], strides = [1, 1]} : vector<8x4xf32> to vector<8x1xf32>
    %399 = vector.extract_strided_slice %391 {offsets = [3, 0], sizes = [1, 128], strides = [1, 1]} : vector<4x128xf32> to vector<1x128xf32>
    %400 = vector.broadcast %398 : vector<8x1xf32> to vector<8x128xf32>
    %401 = vector.broadcast %399 : vector<1x128xf32> to vector<8x128xf32>
    %402 = arith.mulf %400, %401 : vector<8x128xf32>
    %403 = arith.addf %397, %402 : vector<8x128xf32>
    %cst_167 = arith.constant 0.000000e+00 : f32
    %404 = vector.broadcast %cst_167 : f32 to vector<8x128xf32>
    %405 = arith.cmpf ogt, %403, %404 : vector<8x128xf32>
    %cst_168 = arith.constant 0.00999999977 : f32
    %406 = vector.broadcast %cst_168 : f32 to vector<8x128xf32>
    %407 = arith.mulf %406, %403 : vector<8x128xf32>
    %408 = arith.select %405, %403, %407 : vector<8x128xi1>, vector<8x128xf32>
    %c2_169 = arith.constant 2 : index
    %c0_170 = arith.constant 0 : index
    %c0_171 = arith.constant 0 : index
    %409 = vector.load %arg7[%c2_169, %c0_170, %c0_171] : memref<9x128x128xf32, #tpu.memory_space<vmem>>, vector<1x128x128xf32>
    %410 = vector.shape_cast %409 : vector<1x128x128xf32> to vector<128x128xf32>
    %cst_172 = arith.constant dense<0.000000e+00> : vector<8x128xf32>
    %411 = tpu.matmul %408, %410, %cst_172 {dimension_numbers = #tpu.dot_dimension_numbers<[1], [0], [0], [1], [0, 0, 1, 1], [], []>} : vector<8x128xf32>, vector<128x128xf32>, vector<8x128xf32> -> vector<8x128xf32>
    %c2_173 = arith.constant 2 : index
    %c0_174 = arith.constant 0 : index
    %412 = vector.load %arg8[%c2_173, %c0_174] : memref<9x128xf32, #tpu.memory_space<vmem>>, vector<1x128xf32>
    %413 = vector.broadcast %412 : vector<1x128xf32> to vector<8x128xf32>
    %414 = arith.addf %411, %413 : vector<8x128xf32>
    %cst_175 = arith.constant 0.000000e+00 : f32
    %415 = vector.broadcast %cst_175 : f32 to vector<8x128xf32>
    %416 = arith.cmpf ogt, %414, %415 : vector<8x128xf32>
    %cst_176 = arith.constant 0.00999999977 : f32
    %417 = vector.broadcast %cst_176 : f32 to vector<8x128xf32>
    %418 = arith.mulf %417, %414 : vector<8x128xf32>
    %419 = arith.select %416, %414, %418 : vector<8x128xi1>, vector<8x128xf32>
    %c2_177 = arith.constant 2 : index
    %c0_178 = arith.constant 0 : index
    %c0_179 = arith.constant 0 : index
    %420 = vector.load %arg9[%c2_177, %c0_178, %c0_179] : memref<9x128x8xf32, #tpu.memory_space<vmem>>, vector<1x128x8xf32>
    %421 = vector.shape_cast %420 : vector<1x128x8xf32> to vector<128x8xf32>
    %cst_180 = arith.constant dense<0.000000e+00> : vector<8x8xf32>
    %422 = tpu.matmul %419, %421, %cst_180 {dimension_numbers = #tpu.dot_dimension_numbers<[1], [0], [0], [1], [0, 0, 1, 1], [], []>} : vector<8x128xf32>, vector<128x8xf32>, vector<8x8xf32> -> vector<8x8xf32>
    %c2_181 = arith.constant 2 : index
    %c0_182 = arith.constant 0 : index
    %423 = vector.load %arg10[%c2_181, %c0_182] : memref<9x8xf32, #tpu.memory_space<vmem>>, vector<1x8xf32>
    %424 = vector.broadcast %423 : vector<1x8xf32> to vector<8x8xf32>
    %425 = arith.addf %422, %424 : vector<8x8xf32>
    %426 = vector.extract_strided_slice %425 {offsets = [0, 0], sizes = [8, 4], strides = [1, 1]} : vector<8x8xf32> to vector<8x4xf32>
    %427 = math.tanh %426 : vector<8x4xf32>
    %428 = vector.broadcast %386 : vector<1x4xf32> to vector<8x4xf32>
    %429 = arith.mulf %427, %428 : vector<8x4xf32>
    %430 = vector.extract_strided_slice %425 {offsets = [0, 4], sizes = [8, 4], strides = [1, 1]} : vector<8x8xf32> to vector<8x4xf32>
    %431 = vector.broadcast %384 : vector<1x4xf32> to vector<8x4xf32>
    %432 = arith.mulf %431, %380 : vector<8x4xf32>
    %433 = arith.subf %380, %430 : vector<8x4xf32>
    %cst_183 = arith.constant 0.000000e+00 : f32
    %434 = vector.broadcast %cst_183 : f32 to vector<8x4xf32>
    %435 = arith.subf %434, %429 : vector<8x4xf32>
    %436 = math.exp %435 : vector<8x4xf32>
    %437 = arith.mulf %433, %436 : vector<8x4xf32>
    %438 = vector.broadcast %386 : vector<1x4xf32> to vector<8x4xf32>
    %439 = arith.mulf %438, %437 : vector<8x4xf32>
    %440 = arith.addf %432, %439 : vector<8x4xf32>
    %cst_184 = arith.constant dense<0.000000e+00> : vector<8xf32>
    %441 = vector.multi_reduction <add>, %429, %cst_184 [1] : vector<8x4xf32> to vector<8xf32>
    %442 = vector.shape_cast %441 : vector<8xf32> to vector<8x1xf32>
    %443 = arith.subf %383, %442 : vector<8x1xf32>
    %c1 = arith.constant 1 : index
    %c0_185 = arith.constant 0 : index
    %444 = vector.load %arg4[%c1, %c0_185] : memref<9x4xf32, #tpu.memory_space<vmem>>, vector<1x4xf32>
    %cst_186 = arith.constant 1.000000e+00 : f32
    %445 = vector.broadcast %cst_186 : f32 to vector<1x4xf32>
    %446 = arith.subf %445, %444 : vector<1x4xf32>
    %c1_187 = arith.constant 1 : index
    %c0_188 = arith.constant 0 : index
    %447 = vector.load %arg6[%c1_187, %c0_188] : memref<9x128xf32, #tpu.memory_space<vmem>>, vector<1x128xf32>
    %448 = vector.shape_cast %447 : vector<1x128xf32> to vector<1x128xf32>
    %449 = vector.broadcast %448 : vector<1x128xf32> to vector<8x128xf32>
    %c1_189 = arith.constant 1 : index
    %c0_190 = arith.constant 0 : index
    %c0_191 = arith.constant 0 : index
    %450 = vector.load %arg5[%c1_189, %c0_190, %c0_191] : memref<9x4x128xf32, #tpu.memory_space<vmem>>, vector<1x4x128xf32>
    %451 = vector.shape_cast %450 : vector<1x4x128xf32> to vector<4x128xf32>
    %452 = vector.extract_strided_slice %440 {offsets = [0, 0], sizes = [8, 1], strides = [1, 1]} : vector<8x4xf32> to vector<8x1xf32>
    %453 = vector.extract_strided_slice %451 {offsets = [0, 0], sizes = [1, 128], strides = [1, 1]} : vector<4x128xf32> to vector<1x128xf32>
    %454 = vector.broadcast %452 : vector<8x1xf32> to vector<8x128xf32>
    %455 = vector.broadcast %453 : vector<1x128xf32> to vector<8x128xf32>
    %456 = arith.mulf %454, %455 : vector<8x128xf32>
    %457 = arith.addf %449, %456 : vector<8x128xf32>
    %458 = vector.extract_strided_slice %440 {offsets = [0, 2], sizes = [8, 1], strides = [1, 1]} : vector<8x4xf32> to vector<8x1xf32>
    %459 = vector.extract_strided_slice %451 {offsets = [2, 0], sizes = [1, 128], strides = [1, 1]} : vector<4x128xf32> to vector<1x128xf32>
    %460 = vector.broadcast %458 : vector<8x1xf32> to vector<8x128xf32>
    %461 = vector.broadcast %459 : vector<1x128xf32> to vector<8x128xf32>
    %462 = arith.mulf %460, %461 : vector<8x128xf32>
    %463 = arith.addf %457, %462 : vector<8x128xf32>
    %cst_192 = arith.constant 0.000000e+00 : f32
    %464 = vector.broadcast %cst_192 : f32 to vector<8x128xf32>
    %465 = arith.cmpf ogt, %463, %464 : vector<8x128xf32>
    %cst_193 = arith.constant 0.00999999977 : f32
    %466 = vector.broadcast %cst_193 : f32 to vector<8x128xf32>
    %467 = arith.mulf %466, %463 : vector<8x128xf32>
    %468 = arith.select %465, %463, %467 : vector<8x128xi1>, vector<8x128xf32>
    %c1_194 = arith.constant 1 : index
    %c0_195 = arith.constant 0 : index
    %c0_196 = arith.constant 0 : index
    %469 = vector.load %arg7[%c1_194, %c0_195, %c0_196] : memref<9x128x128xf32, #tpu.memory_space<vmem>>, vector<1x128x128xf32>
    %470 = vector.shape_cast %469 : vector<1x128x128xf32> to vector<128x128xf32>
    %cst_197 = arith.constant dense<0.000000e+00> : vector<8x128xf32>
    %471 = tpu.matmul %468, %470, %cst_197 {dimension_numbers = #tpu.dot_dimension_numbers<[1], [0], [0], [1], [0, 0, 1, 1], [], []>} : vector<8x128xf32>, vector<128x128xf32>, vector<8x128xf32> -> vector<8x128xf32>
    %c1_198 = arith.constant 1 : index
    %c0_199 = arith.constant 0 : index
    %472 = vector.load %arg8[%c1_198, %c0_199] : memref<9x128xf32, #tpu.memory_space<vmem>>, vector<1x128xf32>
    %473 = vector.broadcast %472 : vector<1x128xf32> to vector<8x128xf32>
    %474 = arith.addf %471, %473 : vector<8x128xf32>
    %cst_200 = arith.constant 0.000000e+00 : f32
    %475 = vector.broadcast %cst_200 : f32 to vector<8x128xf32>
    %476 = arith.cmpf ogt, %474, %475 : vector<8x128xf32>
    %cst_201 = arith.constant 0.00999999977 : f32
    %477 = vector.broadcast %cst_201 : f32 to vector<8x128xf32>
    %478 = arith.mulf %477, %474 : vector<8x128xf32>
    %479 = arith.select %476, %474, %478 : vector<8x128xi1>, vector<8x128xf32>
    %c1_202 = arith.constant 1 : index
    %c0_203 = arith.constant 0 : index
    %c0_204 = arith.constant 0 : index
    %480 = vector.load %arg9[%c1_202, %c0_203, %c0_204] : memref<9x128x8xf32, #tpu.memory_space<vmem>>, vector<1x128x8xf32>
    %481 = vector.shape_cast %480 : vector<1x128x8xf32> to vector<128x8xf32>
    %cst_205 = arith.constant dense<0.000000e+00> : vector<8x8xf32>
    %482 = tpu.matmul %479, %481, %cst_205 {dimension_numbers = #tpu.dot_dimension_numbers<[1], [0], [0], [1], [0, 0, 1, 1], [], []>} : vector<8x128xf32>, vector<128x8xf32>, vector<8x8xf32> -> vector<8x8xf32>
    %c1_206 = arith.constant 1 : index
    %c0_207 = arith.constant 0 : index
    %483 = vector.load %arg10[%c1_206, %c0_207] : memref<9x8xf32, #tpu.memory_space<vmem>>, vector<1x8xf32>
    %484 = vector.broadcast %483 : vector<1x8xf32> to vector<8x8xf32>
    %485 = arith.addf %482, %484 : vector<8x8xf32>
    %486 = vector.extract_strided_slice %485 {offsets = [0, 0], sizes = [8, 4], strides = [1, 1]} : vector<8x8xf32> to vector<8x4xf32>
    %487 = math.tanh %486 : vector<8x4xf32>
    %488 = vector.broadcast %446 : vector<1x4xf32> to vector<8x4xf32>
    %489 = arith.mulf %487, %488 : vector<8x4xf32>
    %490 = vector.extract_strided_slice %485 {offsets = [0, 4], sizes = [8, 4], strides = [1, 1]} : vector<8x8xf32> to vector<8x4xf32>
    %491 = vector.broadcast %444 : vector<1x4xf32> to vector<8x4xf32>
    %492 = arith.mulf %491, %440 : vector<8x4xf32>
    %493 = arith.subf %440, %490 : vector<8x4xf32>
    %cst_208 = arith.constant 0.000000e+00 : f32
    %494 = vector.broadcast %cst_208 : f32 to vector<8x4xf32>
    %495 = arith.subf %494, %489 : vector<8x4xf32>
    %496 = math.exp %495 : vector<8x4xf32>
    %497 = arith.mulf %493, %496 : vector<8x4xf32>
    %498 = vector.broadcast %446 : vector<1x4xf32> to vector<8x4xf32>
    %499 = arith.mulf %498, %497 : vector<8x4xf32>
    %500 = arith.addf %492, %499 : vector<8x4xf32>
    %cst_209 = arith.constant dense<0.000000e+00> : vector<8xf32>
    %501 = vector.multi_reduction <add>, %489, %cst_209 [1] : vector<8x4xf32> to vector<8xf32>
    %502 = vector.shape_cast %501 : vector<8xf32> to vector<8x1xf32>
    %503 = arith.subf %443, %502 : vector<8x1xf32>
    %c0_210 = arith.constant 0 : index
    %c0_211 = arith.constant 0 : index
    %504 = vector.load %arg4[%c0_210, %c0_211] : memref<9x4xf32, #tpu.memory_space<vmem>>, vector<1x4xf32>
    %cst_212 = arith.constant 1.000000e+00 : f32
    %505 = vector.broadcast %cst_212 : f32 to vector<1x4xf32>
    %506 = arith.subf %505, %504 : vector<1x4xf32>
    %c0_213 = arith.constant 0 : index
    %c0_214 = arith.constant 0 : index
    %507 = vector.load %arg6[%c0_213, %c0_214] : memref<9x128xf32, #tpu.memory_space<vmem>>, vector<1x128xf32>
    %508 = vector.shape_cast %507 : vector<1x128xf32> to vector<1x128xf32>
    %509 = vector.broadcast %508 : vector<1x128xf32> to vector<8x128xf32>
    %c0_215 = arith.constant 0 : index
    %c0_216 = arith.constant 0 : index
    %c0_217 = arith.constant 0 : index
    %510 = vector.load %arg5[%c0_215, %c0_216, %c0_217] : memref<9x4x128xf32, #tpu.memory_space<vmem>>, vector<1x4x128xf32>
    %511 = vector.shape_cast %510 : vector<1x4x128xf32> to vector<4x128xf32>
    %512 = vector.extract_strided_slice %500 {offsets = [0, 0], sizes = [8, 1], strides = [1, 1]} : vector<8x4xf32> to vector<8x1xf32>
    %513 = vector.extract_strided_slice %511 {offsets = [0, 0], sizes = [1, 128], strides = [1, 1]} : vector<4x128xf32> to vector<1x128xf32>
    %514 = vector.broadcast %512 : vector<8x1xf32> to vector<8x128xf32>
    %515 = vector.broadcast %513 : vector<1x128xf32> to vector<8x128xf32>
    %516 = arith.mulf %514, %515 : vector<8x128xf32>
    %517 = arith.addf %509, %516 : vector<8x128xf32>
    %518 = vector.extract_strided_slice %500 {offsets = [0, 1], sizes = [8, 1], strides = [1, 1]} : vector<8x4xf32> to vector<8x1xf32>
    %519 = vector.extract_strided_slice %511 {offsets = [1, 0], sizes = [1, 128], strides = [1, 1]} : vector<4x128xf32> to vector<1x128xf32>
    %520 = vector.broadcast %518 : vector<8x1xf32> to vector<8x128xf32>
    %521 = vector.broadcast %519 : vector<1x128xf32> to vector<8x128xf32>
    %522 = arith.mulf %520, %521 : vector<8x128xf32>
    %523 = arith.addf %517, %522 : vector<8x128xf32>
    %cst_218 = arith.constant 0.000000e+00 : f32
    %524 = vector.broadcast %cst_218 : f32 to vector<8x128xf32>
    %525 = arith.cmpf ogt, %523, %524 : vector<8x128xf32>
    %cst_219 = arith.constant 0.00999999977 : f32
    %526 = vector.broadcast %cst_219 : f32 to vector<8x128xf32>
    %527 = arith.mulf %526, %523 : vector<8x128xf32>
    %528 = arith.select %525, %523, %527 : vector<8x128xi1>, vector<8x128xf32>
    %c0_220 = arith.constant 0 : index
    %c0_221 = arith.constant 0 : index
    %c0_222 = arith.constant 0 : index
    %529 = vector.load %arg7[%c0_220, %c0_221, %c0_222] : memref<9x128x128xf32, #tpu.memory_space<vmem>>, vector<1x128x128xf32>
    %530 = vector.shape_cast %529 : vector<1x128x128xf32> to vector<128x128xf32>
    %cst_223 = arith.constant dense<0.000000e+00> : vector<8x128xf32>
    %531 = tpu.matmul %528, %530, %cst_223 {dimension_numbers = #tpu.dot_dimension_numbers<[1], [0], [0], [1], [0, 0, 1, 1], [], []>} : vector<8x128xf32>, vector<128x128xf32>, vector<8x128xf32> -> vector<8x128xf32>
    %c0_224 = arith.constant 0 : index
    %c0_225 = arith.constant 0 : index
    %532 = vector.load %arg8[%c0_224, %c0_225] : memref<9x128xf32, #tpu.memory_space<vmem>>, vector<1x128xf32>
    %533 = vector.broadcast %532 : vector<1x128xf32> to vector<8x128xf32>
    %534 = arith.addf %531, %533 : vector<8x128xf32>
    %cst_226 = arith.constant 0.000000e+00 : f32
    %535 = vector.broadcast %cst_226 : f32 to vector<8x128xf32>
    %536 = arith.cmpf ogt, %534, %535 : vector<8x128xf32>
    %cst_227 = arith.constant 0.00999999977 : f32
    %537 = vector.broadcast %cst_227 : f32 to vector<8x128xf32>
    %538 = arith.mulf %537, %534 : vector<8x128xf32>
    %539 = arith.select %536, %534, %538 : vector<8x128xi1>, vector<8x128xf32>
    %c0_228 = arith.constant 0 : index
    %c0_229 = arith.constant 0 : index
    %c0_230 = arith.constant 0 : index
    %540 = vector.load %arg9[%c0_228, %c0_229, %c0_230] : memref<9x128x8xf32, #tpu.memory_space<vmem>>, vector<1x128x8xf32>
    %541 = vector.shape_cast %540 : vector<1x128x8xf32> to vector<128x8xf32>
    %cst_231 = arith.constant dense<0.000000e+00> : vector<8x8xf32>
    %542 = tpu.matmul %539, %541, %cst_231 {dimension_numbers = #tpu.dot_dimension_numbers<[1], [0], [0], [1], [0, 0, 1, 1], [], []>} : vector<8x128xf32>, vector<128x8xf32>, vector<8x8xf32> -> vector<8x8xf32>
    %c0_232 = arith.constant 0 : index
    %c0_233 = arith.constant 0 : index
    %543 = vector.load %arg10[%c0_232, %c0_233] : memref<9x8xf32, #tpu.memory_space<vmem>>, vector<1x8xf32>
    %544 = vector.broadcast %543 : vector<1x8xf32> to vector<8x8xf32>
    %545 = arith.addf %542, %544 : vector<8x8xf32>
    %546 = vector.extract_strided_slice %545 {offsets = [0, 0], sizes = [8, 4], strides = [1, 1]} : vector<8x8xf32> to vector<8x4xf32>
    %547 = math.tanh %546 : vector<8x4xf32>
    %548 = vector.broadcast %506 : vector<1x4xf32> to vector<8x4xf32>
    %549 = arith.mulf %547, %548 : vector<8x4xf32>
    %550 = vector.extract_strided_slice %545 {offsets = [0, 4], sizes = [8, 4], strides = [1, 1]} : vector<8x8xf32> to vector<8x4xf32>
    %551 = vector.broadcast %504 : vector<1x4xf32> to vector<8x4xf32>
    %552 = arith.mulf %551, %500 : vector<8x4xf32>
    %553 = arith.subf %500, %550 : vector<8x4xf32>
    %cst_234 = arith.constant 0.000000e+00 : f32
    %554 = vector.broadcast %cst_234 : f32 to vector<8x4xf32>
    %555 = arith.subf %554, %549 : vector<8x4xf32>
    %556 = math.exp %555 : vector<8x4xf32>
    %557 = arith.mulf %553, %556 : vector<8x4xf32>
    %558 = vector.broadcast %506 : vector<1x4xf32> to vector<8x4xf32>
    %559 = arith.mulf %558, %557 : vector<8x4xf32>
    %560 = arith.addf %552, %559 : vector<8x4xf32>
    %cst_235 = arith.constant dense<0.000000e+00> : vector<8xf32>
    %561 = vector.multi_reduction <add>, %549, %cst_235 [1] : vector<8x4xf32> to vector<8xf32>
    %562 = vector.shape_cast %561 : vector<8xf32> to vector<8x1xf32>
    %563 = arith.subf %503, %562 : vector<8x1xf32>
    %564 = arith.mulf %560, %560 : vector<8x4xf32>
    %cst_236 = arith.constant dense<0.000000e+00> : vector<8xf32>
    %565 = vector.multi_reduction <add>, %564, %cst_236 [1] : vector<8x4xf32> to vector<8xf32>
    %566 = vector.shape_cast %565 : vector<8xf32> to vector<8x1xf32>
    %cst_237 = arith.constant -5.000000e-01 : f32
    %567 = vector.broadcast %cst_237 : f32 to vector<8x1xf32>
    %568 = arith.mulf %567, %566 : vector<8x1xf32>
    %cst_238 = arith.constant 3.67575407 : f32
    %569 = vector.broadcast %cst_238 : f32 to vector<8x1xf32>
    %570 = arith.subf %568, %569 : vector<8x1xf32>
    %571 = arith.addf %570, %563 : vector<8x1xf32>
    %572 = vector.broadcast %571 : vector<8x1xf32> to vector<8x4xf32>
    %573 = arith.subf %14, %572 : vector<8x4xf32>
    %cst_239 = arith.constant 0.693147182 : f32
    %574 = vector.broadcast %cst_239 : f32 to vector<8x4xf32>
    %575 = arith.addf %14, %574 : vector<8x4xf32>
    %576 = math.absf %22 : vector<8x4xf32>
    %577 = arith.addf %575, %576 : vector<8x4xf32>
    %578 = arith.addf %573, %577 : vector<8x4xf32>
    %cst_240 = arith.constant 1.250000e-01 : f32
    %579 = vector.broadcast %cst_240 : f32 to vector<8x4xf32>
    %580 = arith.mulf %578, %579 : vector<8x4xf32>
    %581 = vector.shape_cast %580 : vector<8x4xf32> to vector<1x8x4xf32>
    %cst_241 = arith.constant dense<0.000000e+00> : vector<1xf32>
    %582 = vector.multi_reduction <add>, %581, %cst_241 [1, 2] : vector<1x8x4xf32> to vector<1xf32>
    %583 = vector.shape_cast %582 : vector<1xf32> to vector<1x1x1xf32>
    %584 = vector.extract %583[0, 0, 0] : f32 from vector<1x1x1xf32>
    %585 = vector.broadcast %584 : f32 to vector<1x8x128xf32>
    %c0_242 = arith.constant 0 : index
    %c0_243 = arith.constant 0 : index
    %c0_244 = arith.constant 0 : index
    %586 = vector.load %arg11[%c0_242, %c0_243, %c0_244] : memref<1x8x128xf32, #tpu.memory_space<vmem>>, vector<1x8x128xf32>
    tpu.vector_store %arg11[%c0_242, %c0_243, %c0_244], %585 {strides = array<i32>} : memref<1x8x128xf32, #tpu.memory_space<vmem>>, vector<1x8x128xf32>,
    return
  }
  func.func @transform_0(%arg0: i32) -> (i32, i32) {
    %c0_i32 = arith.constant 0 : i32
    %c0_i32_0 = arith.constant 0 : i32
    return %arg0, %c0_i32 : i32, i32
  }
  func.func @transform_1(%arg0: i32) -> (i32, i32) {
    %c0_i32 = arith.constant 0 : i32
    %c0_i32_0 = arith.constant 0 : i32
    return %arg0, %c0_i32 : i32, i32
  }
  func.func @transform_2(%arg0: i32) -> (i32, i32) {
    %c0_i32 = arith.constant 0 : i32
    %c0_i32_0 = arith.constant 0 : i32
    return %arg0, %c0_i32 : i32, i32
  }
  func.func @transform_3(%arg0: i32) -> (i32, i32) {
    %c0_i32 = arith.constant 0 : i32
    %c0_i32_0 = arith.constant 0 : i32
    %c0_i32_1 = arith.constant 0 : i32
    return %c0_i32, %c0_i32_0 : i32, i32
  }
  func.func @transform_4(%arg0: i32) -> (i32, i32, i32) {
    %c0_i32 = arith.constant 0 : i32
    %c0_i32_0 = arith.constant 0 : i32
    %c0_i32_1 = arith.constant 0 : i32
    %c0_i32_2 = arith.constant 0 : i32
    return %c0_i32, %c0_i32_0, %c0_i32_1 : i32, i32, i32
  }
  func.func @transform_5(%arg0: i32) -> (i32, i32) {
    %c0_i32 = arith.constant 0 : i32
    %c0_i32_0 = arith.constant 0 : i32
    %c0_i32_1 = arith.constant 0 : i32
    return %c0_i32, %c0_i32_0 : i32, i32
  }
  func.func @transform_6(%arg0: i32) -> (i32, i32, i32) {
    %c0_i32 = arith.constant 0 : i32
    %c0_i32_0 = arith.constant 0 : i32
    %c0_i32_1 = arith.constant 0 : i32
    %c0_i32_2 = arith.constant 0 : i32
    return %c0_i32, %c0_i32_0, %c0_i32_1 : i32, i32, i32
  }
  func.func @transform_7(%arg0: i32) -> (i32, i32) {
    %c0_i32 = arith.constant 0 : i32
    %c0_i32_0 = arith.constant 0 : i32
    %c0_i32_1 = arith.constant 0 : i32
    return %c0_i32, %c0_i32_0 : i32, i32
  }
  func.func @transform_8(%arg0: i32) -> (i32, i32, i32) {
    %c0_i32 = arith.constant 0 : i32
    %c0_i32_0 = arith.constant 0 : i32
    %c0_i32_1 = arith.constant 0 : i32
    %c0_i32_2 = arith.constant 0 : i32
    return %c0_i32, %c0_i32_0, %c0_i32_1 : i32, i32, i32
  }
  func.func @transform_9(%arg0: i32) -> (i32, i32) {
    %c0_i32 = arith.constant 0 : i32
    %c0_i32_0 = arith.constant 0 : i32
    %c0_i32_1 = arith.constant 0 : i32
    return %c0_i32, %c0_i32_0 : i32, i32
  }
  func.func @transform_10(%arg0: i32) -> (i32, i32, i32) {
    %c0_i32 = arith.constant 0 : i32
    %c0_i32_0 = arith.constant 0 : i32
    %c0_i32_1 = arith.constant 0 : i32
    return %arg0, %c0_i32, %c0_i32_0 : i32, i32, i32
  }
}

</mosaic_0001>

<llo_original>
// kernel: tpu_custom_call.1
$region0: #{tpu_custom_call.1}
  #allocation0 [shape = 'u32[]', space=smem, size = 0x4, offset = 0x4, fixed_abs, tag = 'smem constant byte address 0x4 - core index']
  #allocation1 [shape = 'u32[144,128]{1,0:T(1,128)}', space=vmem, size = 0x12000, scoped, tag = 'internal scratch']
  %s0 = inlined_call_operand.vmem [shape: f32[8,4], index: 0, kind: input, shape index: {}]
  %s1 = inlined_call_operand.vmem [shape: f32[8,4], index: 1, kind: input, shape index: {}]
  %s2 = inlined_call_operand.vmem [shape: f32[8,4], index: 2, kind: input, shape index: {}]
  %s3 = inlined_call_operand.vmem [shape: f32[9,4], index: 3, kind: input, shape index: {}]
  %s4 = inlined_call_operand.vmem [shape: f32[9,4,128], index: 4, kind: input, shape index: {}]
  %s5 = inlined_call_operand.vmem [shape: f32[9,128], index: 5, kind: input, shape index: {}]
  %s6 = inlined_call_operand.vmem [shape: f32[9,128,128], index: 6, kind: input, shape index: {}]
  %s7 = inlined_call_operand.vmem [shape: f32[9,128], index: 7, kind: input, shape index: {}]
  %s8 = inlined_call_operand.vmem [shape: f32[9,128,8], index: 8, kind: input, shape index: {}]
  %s9 = inlined_call_operand.vmem [shape: f32[9,8], index: 9, kind: input, shape index: {}]
  %s10 = inlined_call_operand.hbm [shape: f32[1,8,128], index: 10, kind: output, shape index: {}]
  %s11 = sld [smem:[#allocation0]]
  $region50: #{tpu_custom_call.1} parent=0
    _
  %s13 = ssub.s32 1, %s11
  %s14 = scalar_select 0, %s13, %s11
  $region1: #{tpu_custom_call.1} parent=0
    #allocation2 [shape = 'u8[4096]{0}', space=vmem, size = 0x1000, scoped, tag = 'output window, operand 0, single buffered']
    #allocation3 [shape = 's32[1]{0}', space=sflag, size = 0x4, scoped, tag = 'scoped memory for tpu_custom_call.1']
    %15 = vsyncpa [#allocation3], 0
    // Predicated region
    $region2: #{tpu_custom_call.1} parent=1 // pred_check
      _
    $region3: #{tpu_custom_call.1} parent=1 // pred_check_branch
      %17 = sbr.rel (0) target = $region5
    $region4: #{tpu_custom_call.1} parent=1 // pred_region
      _
    $region5: #{tpu_custom_call.1} parent=1 // pred_fallthru
      _
    // Predicated region
    $region6: #{tpu_custom_call.1} parent=1 // pred_check
      _
    $region7: #{tpu_custom_call.1} parent=1 // pred_check_branch
      %19 = sbr.rel (0) target = $region9
    $region8: #{tpu_custom_call.1} parent=1 // pred_region
      _
    $region9: #{tpu_custom_call.1} parent=1 // pred_fallthru
      _
    // Predicated region
    $region10: #{tpu_custom_call.1} parent=1 // pred_check
      _
    $region11: #{tpu_custom_call.1} parent=1 // pred_check_branch
      %21 = sbr.rel (0) target = $region13
    $region12: #{tpu_custom_call.1} parent=1 // pred_region
      _
    $region13: #{tpu_custom_call.1} parent=1 // pred_fallthru
      _
    // Predicated region
    $region14: #{tpu_custom_call.1} parent=1 // pred_check
      _
    $region15: #{tpu_custom_call.1} parent=1 // pred_check_branch
      %23 = sbr.rel (0) target = $region17
    $region16: #{tpu_custom_call.1} parent=1 // pred_region
      _
    $region17: #{tpu_custom_call.1} parent=1 // pred_fallthru
      _
    // Predicated region
    $region18: #{tpu_custom_call.1} parent=1 // pred_check
      _
    $region19: #{tpu_custom_call.1} parent=1 // pred_check_branch
      %25 = sbr.rel (0) target = $region21
    $region20: #{tpu_custom_call.1} parent=1 // pred_region
      _
    $region21: #{tpu_custom_call.1} parent=1 // pred_fallthru
      _
    // Predicated region
    $region22: #{tpu_custom_call.1} parent=1 // pred_check
      _
    $region23: #{tpu_custom_call.1} parent=1 // pred_check_branch
      %27 = sbr.rel (0) target = $region25
    $region24: #{tpu_custom_call.1} parent=1 // pred_region
      _
    $region25: #{tpu_custom_call.1} parent=1 // pred_fallthru
      _
    // Predicated region
    $region26: #{tpu_custom_call.1} parent=1 // pred_check
      _
    $region27: #{tpu_custom_call.1} parent=1 // pred_check_branch
      %29 = sbr.rel (0) target = $region29
    $region28: #{tpu_custom_call.1} parent=1 // pred_region
      _
    $region29: #{tpu_custom_call.1} parent=1 // pred_fallthru
      _
    // Predicated region
    $region30: #{tpu_custom_call.1} parent=1 // pred_check
      _
    $region31: #{tpu_custom_call.1} parent=1 // pred_check_branch
      %31 = sbr.rel (0) target = $region33
    $region32: #{tpu_custom_call.1} parent=1 // pred_region
      _
    $region33: #{tpu_custom_call.1} parent=1 // pred_fallthru
      _
    // Predicated region
    $region34: #{tpu_custom_call.1} parent=1 // pred_check
      _
    $region35: #{tpu_custom_call.1} parent=1 // pred_check_branch
      %33 = sbr.rel (0) target = $region37
    $region36: #{tpu_custom_call.1} parent=1 // pred_region
      _
    $region37: #{tpu_custom_call.1} parent=1 // pred_fallthru
      _
    // Predicated region
    $region38: #{tpu_custom_call.1} parent=1 // pred_check
      _
    $region39: #{tpu_custom_call.1} parent=1 // pred_check_branch
      %35 = sbr.rel (0) target = $region41
    $region40: #{tpu_custom_call.1} parent=1 // pred_region
      _
    $region41: #{tpu_custom_call.1} parent=1 // pred_fallthru
      _
    %v36 = vld [vmem:[%s0] sm:$0xff]
    %v37 = vld [vmem:[%s1] sm:$0xff]
    %v38 = vld [vmem:[%s2] sm:$0xff]
    %s39 = smul.u32 0, 8
    %v40 = vlaneseq
    %v41 = vshrl.u32 %v40, 7
    %v42 = vstv %s39
    %v43 = vadd.s32 %v42, %v41
    %v44 = vsub.f32 0.0, %v37
    %v45 = vmul.f32 %v44, 1.442695
    %v46 = vpow.pop %v45
    %v47 = vadd.f32 %v46, 1.0
    %v48 = vlog2.pop %v47
    %v49 = vmul.f32 %v48, 0.6931472
    %v50 = vsub.f32 0.0, %v49
    %vm51 = vcmp.eq.s32.totalorder %v43, 3
    %v52 = vsel %vm51, 0.1, 1.0
    %v53 = vsub.f32 %v36, %v38
    %v54 = vmul.f32 %v53, %v47
    %v55 = vmul.f32 %v54, %v52
    %v56 = vld [vmem:[%s3 + $0x8] sm:$0x1]
    %v57 = vsub.f32 1.0, %v56
    %v58 = vld [vmem:[%s5 + $0x8] sm:$0x1]
    %v59 = vlaneseq
    %v60 = vshrl.u32 %v59, 7
    %v61 = vsub.s32 0, %v60
    %v62 = vrot.slane %v58, %v61
    %s63 = scalar_lea.vmem %s4, 32
    %v64 = vld [vmem:[%s63] sm:$0xf]
    %66 = vset.pattern.permute.xlu0 2
    %67 = vperm.xlu0 %66, %v55
    %v68 = vpop.permute.xlu0 %67
    %v70 = vlaneseq
    %v71 = vshrl.u32 %v70, 7
    %v72 = vsub.s32 2, %v71
    %v73 = vrot.slane %v64, %v72
    %v74 = vmul.f32 %v68, %v73
    %v75 = vadd.f32 %v62, %v74
    %76 = vset.pattern.permute.xlu0 3
    %77 = vperm.xlu0 %76, %v55
    %v78 = vpop.permute.xlu0 %77
    %v80 = vlaneseq
    %v81 = vshrl.u32 %v80, 7
    %v82 = vsub.s32 3, %v81
    %v83 = vrot.slane %v64, %v82
    %v84 = vmul.f32 %v78, %v83
    %v85 = vadd.f32 %v75, %v84
    %vm86 = vcmp.gt.f32.partialorder %v85, 0.0
    %v87 = vmul.f32 %v85, 0.01
    %v88 = vsel %vm86, %v85, %v87
    %s89 = scalar_lea.vmem %s6, 1024
    %v90 = vld [vmem:[%s89] sm:$0xff]
    %v91 = vld [vmem:[%s89 + $0x8] sm:$0xff]
    %v92 = vld [vmem:[%s89 + $0x10] sm:$0xff]
    %v93 = vld [vmem:[%s89 + $0x18] sm:$0xff]
    %v94 = vld [vmem:[%s89 + $0x20] sm:$0xff]
    %v95 = vld [vmem:[%s89 + $0x28] sm:$0xff]
    %v96 = vld [vmem:[%s89 + $0x30] sm:$0xff]
    %v97 = vld [vmem:[%s89 + $0x38] sm:$0xff]
    %v98 = vld [vmem:[%s89 + $0x40] sm:$0xff]
    %v99 = vld [vmem:[%s89 + $0x48] sm:$0xff]
    %v100 = vld [vmem:[%s89 + $0x50] sm:$0xff]
    %v101 = vld [vmem:[%s89 + $0x58] sm:$0xff]
    %v102 = vld [vmem:[%s89 + $0x60] sm:$0xff]
    %v103 = vld [vmem:[%s89 + $0x68] sm:$0xff]
    %v104 = vld [vmem:[%s89 + $0x70] sm:$0xff]
    %v105 = vld [vmem:[%s89 + $0x78] sm:$0xff]
    %v106 = vld [vmem:[%s7 + $0x8] sm:$0x1]
    %v107 = vlaneseq
    %v108 = vshrl.u32 %v107, 7
    %v109 = vsub.s32 0, %v108
    %v110 = vrot.slane %v106, %v109
    %111 = vmatprep.subr.mxu0 0.0
    %112 = vmatpush1.msra.mxu0 %v90
    %113 = vmatprep.subr.mxu0 0.0
    %114 = vmatpush1.msra.mxu0 %v91
    %115 = vmatprep.subr.mxu0 0.0
    %116 = vmatpush1.msra.mxu0 %v92
    %117 = vmatprep.subr.mxu0 0.0
    %118 = vmatpush1.msra.mxu0 %v93
    %119 = vmatprep.subr.mxu0 0.0
    %120 = vmatpush1.msra.mxu0 %v94
    %121 = vmatprep.subr.mxu0 0.0
    %122 = vmatpush1.msra.mxu0 %v95
    %123 = vmatprep.subr.mxu0 0.0
    %124 = vmatpush1.msra.mxu0 %v96
    %125 = vmatprep.subr.mxu0 0.0
    %126 = vmatpush1.msra.mxu0 %v97
    %127 = vmatprep.subr.mxu0 0.0
    %128 = vmatpush1.msra.mxu0 %v98
    %129 = vmatprep.subr.mxu0 0.0
    %130 = vmatpush1.msra.mxu0 %v99
    %131 = vmatprep.subr.mxu0 0.0
    %132 = vmatpush1.msra.mxu0 %v100
    %133 = vmatprep.subr.mxu0 0.0
    %134 = vmatpush1.msra.mxu0 %v101
    %135 = vmatprep.subr.mxu0 0.0
    %136 = vmatpush1.msra.mxu0 %v102
    %137 = vmatprep.subr.mxu0 0.0
    %138 = vmatpush1.msra.mxu0 %v103
    %139 = vmatprep.subr.mxu0 0.0
    %140 = vmatpush1.msra.mxu0 %v104
    %141 = vmatprep.subr.mxu0 0.0
    %142 = vmatpush1.msra.mxu0 %v105
    %143 = vmatprep.subr.mxu0 0.0
    %144 = vmatpush1.msra.mxu0 0.0
    %145 = vmatprep.subr.mxu0 0.0
    %146 = vmatpush1.msra.mxu0 0.0
    %147 = vmatprep.subr.mxu0 0.0
    %148 = vmatpush1.msra.mxu0 0.0
    %149 = vmatprep.subr.mxu0 0.0
    %150 = vmatpush1.msra.mxu0 0.0
    %151 = vmatprep.subr.mxu0 0.0
    %152 = vmatpush1.msra.mxu0 0.0
    %153 = vmatprep.subr.mxu0 0.0
    %154 = vmatpush1.msra.mxu0 0.0
    %155 = vmatprep.subr.mxu0 0.0
    %156 = vmatpush1.msra.mxu0 0.0
    %157 = vmatprep.subr.mxu0 0.0
    %158 = vmatpush1.msra.mxu0 0.0
    %159 = vmatprep.subr.mxu0 0.0
    %160 = vmatpush1.msra.mxu0 0.0
    %161 = vmatprep.subr.mxu0 0.0
    %162 = vmatpush1.msra.mxu0 0.0
    %163 = vmatprep.subr.mxu0 0.0
    %164 = vmatpush1.msra.mxu0 0.0
    %165 = vmatprep.subr.mxu0 0.0
    %166 = vmatpush1.msra.mxu0 0.0
    %167 = vmatprep.subr.mxu0 0.0
    %168 = vmatpush1.msra.mxu0 0.0
    %169 = vmatprep.subr.mxu0 0.0
    %170 = vmatpush1.msra.mxu0 0.0
    %171 = vmatprep.subr.mxu0 0.0
    %172 = vmatpush1.msra.mxu0 0.0
    %173 = vmatprep.subr.mxu0 0.0
    %174 = vmatpush1.msra.mxu0 0.0
    %175 = vmatprep.mubr.f32.mxu0 0.0
    %176 = vmatmul.mubr.f32.gmra.mrb[0].mxu0 %v88
    %v177 = vpop.f32.mrb[0].mxu0
    %v178 = vadd.f32 %v110, %v177
    %v179 = vpop.f32.mrb[0].mxu0
    %180 = vdwg.mxu0
    %vm181 = vcmp.gt.f32.partialorder %v178, 0.0
    %v182 = vmul.f32 %v178, 0.01
    %v183 = vsel %vm181, %v178, %v182
    %s184 = scalar_lea.vmem %s8, 1024
    %v185 = vld [vmem:[%s184] sm:$0xff]
    %v186 = vld [vmem:[%s184 + $0x8] sm:$0xff]
    %v187 = vld [vmem:[%s184 + $0x10] sm:$0xff]
    %v188 = vld [vmem:[%s184 + $0x18] sm:$0xff]
    %v189 = vld [vmem:[%s184 + $0x20] sm:$0xff]
    %v190 = vld [vmem:[%s184 + $0x28] sm:$0xff]
    %v191 = vld [vmem:[%s184 + $0x30] sm:$0xff]
    %v192 = vld [vmem:[%s184 + $0x38] sm:$0xff]
    %v193 = vld [vmem:[%s184 + $0x40] sm:$0xff]
    %v194 = vld [vmem:[%s184 + $0x48] sm:$0xff]
    %v195 = vld [vmem:[%s184 + $0x50] sm:$0xff]
    %v196 = vld [vmem:[%s184 + $0x58] sm:$0xff]
    %v197 = vld [vmem:[%s184 + $0x60] sm:$0xff]
    %v198 = vld [vmem:[%s184 + $0x68] sm:$0xff]
    %v199 = vld [vmem:[%s184 + $0x70] sm:$0xff]
    %v200 = vld [vmem:[%s184 + $0x78] sm:$0xff]
    %v201 = vld [vmem:[%s9 + $0x8] sm:$0x1]
    %v202 = vlaneseq
    %v203 = vshrl.u32 %v202, 7
    %v204 = vsub.s32 0, %v203
    %v205 = vrot.slane %v201, %v204
    %206 = vmatprep.subr.mxu0 0.0
    %207 = vmatpush1.msra.mxu0 %v185
    %208 = vmatprep.subr.mxu0 0.0
    %209 = vmatpush1.msra.mxu0 %v186
    %210 = vmatprep.subr.mxu0 0.0
    %211 = vmatpush1.msra.mxu0 %v187
    %212 = vmatprep.subr.mxu0 0.0
    %213 = vmatpush1.msra.mxu0 %v188
    %214 = vmatprep.subr.mxu0 0.0
    %215 = vmatpush1.msra.mxu0 %v189
    %216 = vmatprep.subr.mxu0 0.0
    %217 = vmatpush1.msra.mxu0 %v190
    %218 = vmatprep.subr.mxu0 0.0
    %219 = vmatpush1.msra.mxu0 %v191
    %220 = vmatprep.subr.mxu0 0.0
    %221 = vmatpush1.msra.mxu0 %v192
    %222 = vmatprep.subr.mxu0 0.0
    %223 = vmatpush1.msra.mxu0 %v193
    %224 = vmatprep.subr.mxu0 0.0
    %225 = vmatpush1.msra.mxu0 %v194
    %226 = vmatprep.subr.mxu0 0.0
    %227 = vmatpush1.msra.mxu0 %v195
    %228 = vmatprep.subr.mxu0 0.0
    %229 = vmatpush1.msra.mxu0 %v196
    %230 = vmatprep.subr.mxu0 0.0
    %231 = vmatpush1.msra.mxu0 %v197
    %232 = vmatprep.subr.mxu0 0.0
    %233 = vmatpush1.msra.mxu0 %v198
    %234 = vmatprep.subr.mxu0 0.0
    %235 = vmatpush1.msra.mxu0 %v199
    %236 = vmatprep.subr.mxu0 0.0
    %237 = vmatpush1.msra.mxu0 %v200
    %238 = vmatprep.subr.mxu0 0.0
    %239 = vmatpush1.msra.mxu0 0.0
    %240 = vmatprep.subr.mxu0 0.0
    %241 = vmatpush1.msra.mxu0 0.0
    %242 = vmatprep.subr.mxu0 0.0
    %243 = vmatpush1.msra.mxu0 0.0
    %244 = vmatprep.subr.mxu0 0.0
    %245 = vmatpush1.msra.mxu0 0.0
    %246 = vmatprep.subr.mxu0 0.0
    %247 = vmatpush1.msra.mxu0 0.0
    %248 = vmatprep.subr.mxu0 0.0
    %249 = vmatpush1.msra.mxu0 0.0
    %250 = vmatprep.subr.mxu0 0.0
    %251 = vmatpush1.msra.mxu0 0.0
    %252 = vmatprep.subr.mxu0 0.0
    %253 = vmatpush1.msra.mxu0 0.0
    %254 = vmatprep.subr.mxu0 0.0
    %255 = vmatpush1.msra.mxu0 0.0
    %256 = vmatprep.subr.mxu0 0.0
    %257 = vmatpush1.msra.mxu0 0.0
    %258 = vmatprep.subr.mxu0 0.0
    %259 = vmatpush1.msra.mxu0 0.0
    %260 = vmatprep.subr.mxu0 0.0
    %261 = vmatpush1.msra.mxu0 0.0
    %262 = vmatprep.subr.mxu0 0.0
    %263 = vmatpush1.msra.mxu0 0.0
    %264 = vmatprep.subr.mxu0 0.0
    %265 = vmatpush1.msra.mxu0 0.0
    %266 = vmatprep.subr.mxu0 0.0
    %267 = vmatpush1.msra.mxu0 0.0
    %268 = vmatprep.subr.mxu0 0.0
    %269 = vmatpush1.msra.mxu0 0.0
    %270 = vmatprep.mubr.f32.mxu0 0.0
    %271 = vmatmul.mubr.f32.gmra.mrb[0].mxu0 %v183
    %v272 = vpop.f32.mrb[0].mxu0
    %v273 = vadd.f32 %v205, %v272
    %v274 = vpop.f32.mrb[0].mxu0
    %275 = vdwg.mxu0
    %v276 = vtanh.pop %v273
    %v277 = vlaneseq
    %v278 = vshrl.u32 %v277, 7
    %v279 = vsub.s32 0, %v278
    %v280 = vrot.slane %v57, %v279
    %v281 = vmul.f32 %v276, %v280
    %v282 = vlaneseq
    %v283 = vshrl.u32 %v282, 7
    %v284 = vsub.s32 0, %v283
    %v285 = vrot.slane %v56, %v284
    %v286 = vmul.f32 %v285, %v55
    %288 = vrot.lane.b32.xlu0 %v273, 124
    %v289 = vpop.permute.xlu0 %288
    %v291 = vsub.f32 %v55, %v289
    %v292 = vsub.f32 0.0, %v281
    %v293 = vmul.f32 %v292, 1.442695
    %v294 = vpow.pop %v293
    %v295 = vmul.f32 %v291, %v294
    %v296 = vmul.f32 %v280, %v295
    %v297 = vadd.f32 %v286, %v296
    %vm298 = vcmask 31744
    %v299 = vsel %vm298, %v281, 0.0
    %300 = vadd.xlane.f32.xlu0 %v299
    %v301 = vpop.xlane.xlu0 %300
    %v302 = vsub.f32 0.0, %v301
    %v303 = vld [vmem:[%s3 + $0x7] sm:$0x1]
    %v304 = vsub.f32 1.0, %v303
    %v305 = vld [vmem:[%s5 + $0x7] sm:$0x1]
    %v306 = vlaneseq
    %v307 = vshrl.u32 %v306, 7
    %v308 = vsub.s32 0, %v307
    %v309 = vrot.slane %v305, %v308
    %s310 = scalar_lea.vmem %s4, 28
    %v311 = vld [vmem:[%s310] sm:$0xf]
    %313 = vset.pattern.permute.xlu0 0
    %314 = vperm.xlu0 %313, %v297
    %v315 = vpop.permute.xlu0 %314
    %v317 = vlaneseq
    %v318 = vshrl.u32 %v317, 7
    %v319 = vsub.s32 0, %v318
    %v320 = vrot.slane %v311, %v319
    %v321 = vmul.f32 %v315, %v320
    %v322 = vadd.f32 %v309, %v321
    %323 = vset.pattern.permute.xlu0 2
    %324 = vperm.xlu0 %323, %v297
    %v325 = vpop.permute.xlu0 %324
    %v327 = vlaneseq
    %v328 = vshrl.u32 %v327, 7
    %v329 = vsub.s32 2, %v328
    %v330 = vrot.slane %v311, %v329
    %v331 = vmul.f32 %v325, %v330
    %v332 = vadd.f32 %v322, %v331
    %vm333 = vcmp.gt.f32.partialorder %v332, 0.0
    %v334 = vmul.f32 %v332, 0.01
    %v335 = vsel %vm333, %v332, %v334
    %s336 = scalar_lea.vmem %s6, 896
    %v337 = vld [vmem:[%s336] sm:$0xff]
    %v338 = vld [vmem:[%s336 + $0x8] sm:$0xff]
    %v339 = vld [vmem:[%s336 + $0x10] sm:$0xff]
    %v340 = vld [vmem:[%s336 + $0x18] sm:$0xff]
    %v341 = vld [vmem:[%s336 + $0x20] sm:$0xff]
    %v342 = vld [vmem:[%s336 + $0x28] sm:$0xff]
    %v343 = vld [vmem:[%s336 + $0x30] sm:$0xff]
    %v344 = vld [vmem:[%s336 + $0x38] sm:$0xff]
    %v345 = vld [vmem:[%s336 + $0x40] sm:$0xff]
    %v346 = vld [vmem:[%s336 + $0x48] sm:$0xff]
    %v347 = vld [vmem:[%s336 + $0x50] sm:$0xff]
    %v348 = vld [vmem:[%s336 + $0x58] sm:$0xff]
    %v349 = vld [vmem:[%s336 + $0x60] sm:$0xff]
    %v350 = vld [vmem:[%s336 + $0x68] sm:$0xff]
    %v351 = vld [vmem:[%s336 + $0x70] sm:$0xff]
    %v352 = vld [vmem:[%s336 + $0x78] sm:$0xff]
    %v353 = vld [vmem:[%s7 + $0x7] sm:$0x1]
    %v354 = vlaneseq
    %v355 = vshrl.u32 %v354, 7
    %v356 = vsub.s32 0, %v355
    %v357 = vrot.slane %v353, %v356
    %358 = vmatprep.subr.mxu0 0.0
    %359 = vmatpush1.msra.mxu0 %v337
    %360 = vmatprep.subr.mxu0 0.0
    %361 = vmatpush1.msra.mxu0 %v338
    %362 = vmatprep.subr.mxu0 0.0
    %363 = vmatpush1.msra.mxu0 %v339
    %364 = vmatprep.subr.mxu0 0.0
    %365 = vmatpush1.msra.mxu0 %v340
    %366 = vmatprep.subr.mxu0 0.0
    %367 = vmatpush1.msra.mxu0 %v341
    %368 = vmatprep.subr.mxu0 0.0
    %369 = vmatpush1.msra.mxu0 %v342
    %370 = vmatprep.subr.mxu0 0.0
    %371 = vmatpush1.msra.mxu0 %v343
    %372 = vmatprep.subr.mxu0 0.0
    %373 = vmatpush1.msra.mxu0 %v344
    %374 = vmatprep.subr.mxu0 0.0
    %375 = vmatpush1.msra.mxu0 %v345
    %376 = vmatprep.subr.mxu0 0.0
    %377 = vmatpush1.msra.mxu0 %v346
    %378 = vmatprep.subr.mxu0 0.0
    %379 = vmatpush1.msra.mxu0 %v347
    %380 = vmatprep.subr.mxu0 0.0
    %381 = vmatpush1.msra.mxu0 %v348
    %382 = vmatprep.subr.mxu0 0.0
    %383 = vmatpush1.msra.mxu0 %v349
    %384 = vmatprep.subr.mxu0 0.0
    %385 = vmatpush1.msra.mxu0 %v350
    %386 = vmatprep.subr.mxu0 0.0
    %387 = vmatpush1.msra.mxu0 %v351
    %388 = vmatprep.subr.mxu0 0.0
    %389 = vmatpush1.msra.mxu0 %v352
    %390 = vmatprep.subr.mxu0 0.0
    %391 = vmatpush1.msra.mxu0 0.0
    %392 = vmatprep.subr.mxu0 0.0
    %393 = vmatpush1.msra.mxu0 0.0
    %394 = vmatprep.subr.mxu0 0.0
    %395 = vmatpush1.msra.mxu0 0.0
    %396 = vmatprep.subr.mxu0 0.0
    %397 = vmatpush1.msra.mxu0 0.0
    %398 = vmatprep.subr.mxu0 0.0
    %399 = vmatpush1.msra.mxu0 0.0
    %400 = vmatprep.subr.mxu0 0.0
    %401 = vmatpush1.msra.mxu0 0.0
    %402 = vmatprep.subr.mxu0 0.0
    %403 = vmatpush1.msra.mxu0 0.0
    %404 = vmatprep.subr.mxu0 0.0
    %405 = vmatpush1.msra.mxu0 0.0
    %406 = vmatprep.subr.mxu0 0.0
    %407 = vmatpush1.msra.mxu0 0.0
    %408 = vmatprep.subr.mxu0 0.0
    %409 = vmatpush1.msra.mxu0 0.0
    %410 = vmatprep.subr.mxu0 0.0
    %411 = vmatpush1.msra.mxu0 0.0
    %412 = vmatprep.subr.mxu0 0.0
    %413 = vmatpush1.msra.mxu0 0.0
    %414 = vmatprep.subr.mxu0 0.0
    %415 = vmatpush1.msra.mxu0 0.0
    %416 = vmatprep.subr.mxu0 0.0
    %417 = vmatpush1.msra.mxu0 0.0
    %418 = vmatprep.subr.mxu0 0.0
    %419 = vmatpush1.msra.mxu0 0.0
    %420 = vmatprep.subr.mxu0 0.0
    %421 = vmatpush1.msra.mxu0 0.0
    %422 = vmatprep.mubr.f32.mxu0 0.0
    %423 = vmatmul.mubr.f32.gmra.mrb[0].mxu0 %v335
    %v424 = vpop.f32.mrb[0].mxu0
    %v425 = vadd.f32 %v357, %v424
    %v426 = vpop.f32.mrb[0].mxu0
    %427 = vdwg.mxu0
    %vm428 = vcmp.gt.f32.partialorder %v425, 0.0
    %v429 = vmul.f32 %v425, 0.01
    %v430 = vsel %vm428, %v425, %v429
    %s431 = scalar_lea.vmem %s8, 896
    %v432 = vld [vmem:[%s431] sm:$0xff]
    %v433 = vld [vmem:[%s431 + $0x8] sm:$0xff]
    %v434 = vld [vmem:[%s431 + $0x10] sm:$0xff]
    %v435 = vld [vmem:[%s431 + $0x18] sm:$0xff]
    %v436 = vld [vmem:[%s431 + $0x20] sm:$0xff]
    %v437 = vld [vmem:[%s431 + $0x28] sm:$0xff]
    %v438 = vld [vmem:[%s431 + $0x30] sm:$0xff]
    %v439 = vld [vmem:[%s431 + $0x38] sm:$0xff]
    %v440 = vld [vmem:[%s431 + $0x40] sm:$0xff]
    %v441 = vld [vmem:[%s431 + $0x48] sm:$0xff]
    %v442 = vld [vmem:[%s431 + $0x50] sm:$0xff]
    %v443 = vld [vmem:[%s431 + $0x58] sm:$0xff]
    %v444 = vld [vmem:[%s431 + $0x60] sm:$0xff]
    %v445 = vld [vmem:[%s431 + $0x68] sm:$0xff]
    %v446 = vld [vmem:[%s431 + $0x70] sm:$0xff]
    %v447 = vld [vmem:[%s431 + $0x78] sm:$0xff]
    %v448 = vld [vmem:[%s9 + $0x7] sm:$0x1]
    %v449 = vlaneseq
    %v450 = vshrl.u32 %v449, 7
    %v451 = vsub.s32 0, %v450
    %v452 = vrot.slane %v448, %v451
    %453 = vmatprep.subr.mxu0 0.0
    %454 = vmatpush1.msra.mxu0 %v432
    %455 = vmatprep.subr.mxu0 0.0
    %456 = vmatpush1.msra.mxu0 %v433
    %457 = vmatprep.subr.mxu0 0.0
    %458 = vmatpush1.msra.mxu0 %v434
    %459 = vmatprep.subr.mxu0 0.0
    %460 = vmatpush1.msra.mxu0 %v435
    %461 = vmatprep.subr.mxu0 0.0
    %462 = vmatpush1.msra.mxu0 %v436
    %463 = vmatprep.subr.mxu0 0.0
    %464 = vmatpush1.msra.mxu0 %v437
    %465 = vmatprep.subr.mxu0 0.0
    %466 = vmatpush1.msra.mxu0 %v438
    %467 = vmatprep.subr.mxu0 0.0
    %468 = vmatpush1.msra.mxu0 %v439
    %469 = vmatprep.subr.mxu0 0.0
    %470 = vmatpush1.msra.mxu0 %v440
    %471 = vmatprep.subr.mxu0 0.0
    %472 = vmatpush1.msra.mxu0 %v441
    %473 = vmatprep.subr.mxu0 0.0
    %474 = vmatpush1.msra.mxu0 %v442
    %475 = vmatprep.subr.mxu0 0.0
    %476 = vmatpush1.msra.mxu0 %v443
    %477 = vmatprep.subr.mxu0 0.0
    %478 = vmatpush1.msra.mxu0 %v444
    %479 = vmatprep.subr.mxu0 0.0
    %480 = vmatpush1.msra.mxu0 %v445
    %481 = vmatprep.subr.mxu0 0.0
    %482 = vmatpush1.msra.mxu0 %v446
    %483 = vmatprep.subr.mxu0 0.0
    %484 = vmatpush1.msra.mxu0 %v447
    %485 = vmatprep.subr.mxu0 0.0
    %486 = vmatpush1.msra.mxu0 0.0
    %487 = vmatprep.subr.mxu0 0.0
    %488 = vmatpush1.msra.mxu0 0.0
    %489 = vmatprep.subr.mxu0 0.0
    %490 = vmatpush1.msra.mxu0 0.0
    %491 = vmatprep.subr.mxu0 0.0
    %492 = vmatpush1.msra.mxu0 0.0
    %493 = vmatprep.subr.mxu0 0.0
    %494 = vmatpush1.msra.mxu0 0.0
    %495 = vmatprep.subr.mxu0 0.0
    %496 = vmatpush1.msra.mxu0 0.0
    %497 = vmatprep.subr.mxu0 0.0
    %498 = vmatpush1.msra.mxu0 0.0
    %499 = vmatprep.subr.mxu0 0.0
    %500 = vmatpush1.msra.mxu0 0.0
    %501 = vmatprep.subr.mxu0 0.0
    %502 = vmatpush1.msra.mxu0 0.0
    %503 = vmatprep.subr.mxu0 0.0
    %504 = vmatpush1.msra.mxu0 0.0
    %505 = vmatprep.subr.mxu0 0.0
    %506 = vmatpush1.msra.mxu0 0.0
    %507 = vmatprep.subr.mxu0 0.0
    %508 = vmatpush1.msra.mxu0 0.0
    %509 = vmatprep.subr.mxu0 0.0
    %510 = vmatpush1.msra.mxu0 0.0
    %511 = vmatprep.subr.mxu0 0.0
    %512 = vmatpush1.msra.mxu0 0.0
    %513 = vmatprep.subr.mxu0 0.0
    %514 = vmatpush1.msra.mxu0 0.0
    %515 = vmatprep.subr.mxu0 0.0
    %516 = vmatpush1.msra.mxu0 0.0
    %517 = vmatprep.mubr.f32.mxu0 0.0
    %518 = vmatmul.mubr.f32.gmra.mrb[0].mxu0 %v430
    %v519 = vpop.f32.mrb[0].mxu0
    %v520 = vadd.f32 %v452, %v519
    %v521 = vpop.f32.mrb[0].mxu0
    %522 = vdwg.mxu0
    %v523 = vtanh.pop %v520
    %v524 = vlaneseq
    %v525 = vshrl.u32 %v524, 7
    %v526 = vsub.s32 0, %v525
    %v527 = vrot.slane %v304, %v526
    %v528 = vmul.f32 %v523, %v527
    %v529 = vlaneseq
    %v530 = vshrl.u32 %v529, 7
    %v531 = vsub.s32 0, %v530
    %v532 = vrot.slane %v303, %v531
    %v533 = vmul.f32 %v532, %v297
    %535 = vrot.lane.b32.xlu0 %v520, 124
    %v536 = vpop.permute.xlu0 %535
    %v538 = vsub.f32 %v297, %v536
    %v539 = vsub.f32 0.0, %v528
    %v540 = vmul.f32 %v539, 1.442695
    %v541 = vpow.pop %v540
    %v542 = vmul.f32 %v538, %v541
    %v543 = vmul.f32 %v527, %v542
    %v544 = vadd.f32 %v533, %v543
    %v545 = vsel %vm298, %v528, 0.0
    %546 = vadd.xlane.f32.xlu0 %v545
    %v547 = vpop.xlane.xlu0 %546
    %v548 = vsub.f32 %v302, %v547
    %v549 = vld [vmem:[%s3 + $0x6] sm:$0x1]
    %v550 = vsub.f32 1.0, %v549
    %v551 = vld [vmem:[%s5 + $0x6] sm:$0x1]
    %v552 = vlaneseq
    %v553 = vshrl.u32 %v552, 7
    %v554 = vsub.s32 0, %v553
    %v555 = vrot.slane %v551, %v554
    %s556 = scalar_lea.vmem %s4, 24
    %v557 = vld [vmem:[%s556] sm:$0xf]
    %559 = vset.pattern.permute.xlu0 0
    %560 = vperm.xlu0 %559, %v544
    %v561 = vpop.permute.xlu0 %560
    %v563 = vlaneseq
    %v564 = vshrl.u32 %v563, 7
    %v565 = vsub.s32 0, %v564
    %v566 = vrot.slane %v557, %v565
    %v567 = vmul.f32 %v561, %v566
    %v568 = vadd.f32 %v555, %v567
    %569 = vset.pattern.permute.xlu0 1
    %570 = vperm.xlu0 %569, %v544
    %v571 = vpop.permute.xlu0 %570
    %v573 = vlaneseq
    %v574 = vshrl.u32 %v573, 7
    %v575 = vsub.s32 1, %v574
    %v576 = vrot.slane %v557, %v575
    %v577 = vmul.f32 %v571, %v576
    %v578 = vadd.f32 %v568, %v577
    %vm579 = vcmp.gt.f32.partialorder %v578, 0.0
    %v580 = vmul.f32 %v578, 0.01
    %v581 = vsel %vm579, %v578, %v580
    %s582 = scalar_lea.vmem %s6, 768
    %v583 = vld [vmem:[%s582] sm:$0xff]
    %v584 = vld [vmem:[%s582 + $0x8] sm:$0xff]
    %v585 = vld [vmem:[%s582 + $0x10] sm:$0xff]
    %v586 = vld [vmem:[%s582 + $0x18] sm:$0xff]
    %v587 = vld [vmem:[%s582 + $0x20] sm:$0xff]
    %v588 = vld [vmem:[%s582 + $0x28] sm:$0xff]
    %v589 = vld [vmem:[%s582 + $0x30] sm:$0xff]
    %v590 = vld [vmem:[%s582 + $0x38] sm:$0xff]
    %v591 = vld [vmem:[%s582 + $0x40] sm:$0xff]
    %v592 = vld [vmem:[%s582 + $0x48] sm:$0xff]
    %v593 = vld [vmem:[%s582 + $0x50] sm:$0xff]
    %v594 = vld [vmem:[%s582 + $0x58] sm:$0xff]
    %v595 = vld [vmem:[%s582 + $0x60] sm:$0xff]
    %v596 = vld [vmem:[%s582 + $0x68] sm:$0xff]
    %v597 = vld [vmem:[%s582 + $0x70] sm:$0xff]
    %v598 = vld [vmem:[%s582 + $0x78] sm:$0xff]
    %v599 = vld [vmem:[%s7 + $0x6] sm:$0x1]
    %v600 = vlaneseq
    %v601 = vshrl.u32 %v600, 7
    %v602 = vsub.s32 0, %v601
    %v603 = vrot.slane %v599, %v602
    %604 = vmatprep.subr.mxu0 0.0
    %605 = vmatpush1.msra.mxu0 %v583
    %606 = vmatprep.subr.mxu0 0.0
    %607 = vmatpush1.msra.mxu0 %v584
    %608 = vmatprep.subr.mxu0 0.0
    %609 = vmatpush1.msra.mxu0 %v585
    %610 = vmatprep.subr.mxu0 0.0
    %611 = vmatpush1.msra.mxu0 %v586
    %612 = vmatprep.subr.mxu0 0.0
    %613 = vmatpush1.msra.mxu0 %v587
    %614 = vmatprep.subr.mxu0 0.0
    %615 = vmatpush1.msra.mxu0 %v588
    %616 = vmatprep.subr.mxu0 0.0
    %617 = vmatpush1.msra.mxu0 %v589
    %618 = vmatprep.subr.mxu0 0.0
    %619 = vmatpush1.msra.mxu0 %v590
    %620 = vmatprep.subr.mxu0 0.0
    %621 = vmatpush1.msra.mxu0 %v591
    %622 = vmatprep.subr.mxu0 0.0
    %623 = vmatpush1.msra.mxu0 %v592
    %624 = vmatprep.subr.mxu0 0.0
    %625 = vmatpush1.msra.mxu0 %v593
    %626 = vmatprep.subr.mxu0 0.0
    %627 = vmatpush1.msra.mxu0 %v594
    %628 = vmatprep.subr.mxu0 0.0
    %629 = vmatpush1.msra.mxu0 %v595
    %630 = vmatprep.subr.mxu0 0.0
    %631 = vmatpush1.msra.mxu0 %v596
    %632 = vmatprep.subr.mxu0 0.0
    %633 = vmatpush1.msra.mxu0 %v597
    %634 = vmatprep.subr.mxu0 0.0
    %635 = vmatpush1.msra.mxu0 %v598
    %636 = vmatprep.subr.mxu0 0.0
    %637 = vmatpush1.msra.mxu0 0.0
    %638 = vmatprep.subr.mxu0 0.0
    %639 = vmatpush1.msra.mxu0 0.0
    %640 = vmatprep.subr.mxu0 0.0
    %641 = vmatpush1.msra.mxu0 0.0
    %642 = vmatprep.subr.mxu0 0.0
    %643 = vmatpush1.msra.mxu0 0.0
    %644 = vmatprep.subr.mxu0 0.0
    %645 = vmatpush1.msra.mxu0 0.0
    %646 = vmatprep.subr.mxu0 0.0
    %647 = vmatpush1.msra.mxu0 0.0
    %648 = vmatprep.subr.mxu0 0.0
    %649 = vmatpush1.msra.mxu0 0.0
    %650 = vmatprep.subr.mxu0 0.0
    %651 = vmatpush1.msra.mxu0 0.0
    %652 = vmatprep.subr.mxu0 0.0
    %653 = vmatpush1.msra.mxu0 0.0
    %654 = vmatprep.subr.mxu0 0.0
    %655 = vmatpush1.msra.mxu0 0.0
    %656 = vmatprep.subr.mxu0 0.0
    %657 = vmatpush1.msra.mxu0 0.0
    %658 = vmatprep.subr.mxu0 0.0
    %659 = vmatpush1.msra.mxu0 0.0
    %660 = vmatprep.subr.mxu0 0.0
    %661 = vmatpush1.msra.mxu0 0.0
    %662 = vmatprep.subr.mxu0 0.0
    %663 = vmatpush1.msra.mxu0 0.0
    %664 = vmatprep.subr.mxu0 0.0
    %665 = vmatpush1.msra.mxu0 0.0
    %666 = vmatprep.subr.mxu0 0.0
    %667 = vmatpush1.msra.mxu0 0.0
    %668 = vmatprep.mubr.f32.mxu0 0.0
    %669 = vmatmul.mubr.f32.gmra.mrb[0].mxu0 %v581
    %v670 = vpop.f32.mrb[0].mxu0
    %v671 = vadd.f32 %v603, %v670
    %v672 = vpop.f32.mrb[0].mxu0
    %673 = vdwg.mxu0
    %vm674 = vcmp.gt.f32.partialorder %v671, 0.0
    %v675 = vmul.f32 %v671, 0.01
    %v676 = vsel %vm674, %v671, %v675
    %s677 = scalar_lea.vmem %s8, 768
    %v678 = vld [vmem:[%s677] sm:$0xff]
    %v679 = vld [vmem:[%s677 + $0x8] sm:$0xff]
    %v680 = vld [vmem:[%s677 + $0x10] sm:$0xff]
    %v681 = vld [vmem:[%s677 + $0x18] sm:$0xff]
    %v682 = vld [vmem:[%s677 + $0x20] sm:$0xff]
    %v683 = vld [vmem:[%s677 + $0x28] sm:$0xff]
    %v684 = vld [vmem:[%s677 + $0x30] sm:$0xff]
    %v685 = vld [vmem:[%s677 + $0x38] sm:$0xff]
    %v686 = vld [vmem:[%s677 + $0x40] sm:$0xff]
    %v687 = vld [vmem:[%s677 + $0x48] sm:$0xff]
    %v688 = vld [vmem:[%s677 + $0x50] sm:$0xff]
    %v689 = vld [vmem:[%s677 + $0x58] sm:$0xff]
    %v690 = vld [vmem:[%s677 + $0x60] sm:$0xff]
    %v691 = vld [vmem:[%s677 + $0x68] sm:$0xff]
    %v692 = vld [vmem:[%s677 + $0x70] sm:$0xff]
    %v693 = vld [vmem:[%s677 + $0x78] sm:$0xff]
    %v694 = vld [vmem:[%s9 + $0x6] sm:$0x1]
    %v695 = vlaneseq
    %v696 = vshrl.u32 %v695, 7
    %v697 = vsub.s32 0, %v696
    %v698 = vrot.slane %v694, %v697
    %699 = vmatprep.subr.mxu0 0.0
    %700 = vmatpush1.msra.mxu0 %v678
    %701 = vmatprep.subr.mxu0 0.0
    %702 = vmatpush1.msra.mxu0 %v679
    %703 = vmatprep.subr.mxu0 0.0
    %704 = vmatpush1.msra.mxu0 %v680
    %705 = vmatprep.subr.mxu0 0.0
    %706 = vmatpush1.msra.mxu0 %v681
    %707 = vmatprep.subr.mxu0 0.0
    %708 = vmatpush1.msra.mxu0 %v682
    %709 = vmatprep.subr.mxu0 0.0
    %710 = vmatpush1.msra.mxu0 %v683
    %711 = vmatprep.subr.mxu0 0.0
    %712 = vmatpush1.msra.mxu0 %v684
    %713 = vmatprep.subr.mxu0 0.0
    %714 = vmatpush1.msra.mxu0 %v685
    %715 = vmatprep.subr.mxu0 0.0
    %716 = vmatpush1.msra.mxu0 %v686
    %717 = vmatprep.subr.mxu0 0.0
    %718 = vmatpush1.msra.mxu0 %v687
    %719 = vmatprep.subr.mxu0 0.0
    %720 = vmatpush1.msra.mxu0 %v688
    %721 = vmatprep.subr.mxu0 0.0
    %722 = vmatpush1.msra.mxu0 %v689
    %723 = vmatprep.subr.mxu0 0.0
    %724 = vmatpush1.msra.mxu0 %v690
    %725 = vmatprep.subr.mxu0 0.0
    %726 = vmatpush1.msra.mxu0 %v691
    %727 = vmatprep.subr.mxu0 0.0
    %728 = vmatpush1.msra.mxu0 %v692
    %729 = vmatprep.subr.mxu0 0.0
    %730 = vmatpush1.msra.mxu0 %v693
    %731 = vmatprep.subr.mxu0 0.0
    %732 = vmatpush1.msra.mxu0 0.0
    %733 = vmatprep.subr.mxu0 0.0
    %734 = vmatpush1.msra.mxu0 0.0
    %735 = vmatprep.subr.mxu0 0.0
    %736 = vmatpush1.msra.mxu0 0.0
    %737 = vmatprep.subr.mxu0 0.0
    %738 = vmatpush1.msra.mxu0 0.0
    %739 = vmatprep.subr.mxu0 0.0
    %740 = vmatpush1.msra.mxu0 0.0
    %741 = vmatprep.subr.mxu0 0.0
    %742 = vmatpush1.msra.mxu0 0.0
    %743 = vmatprep.subr.mxu0 0.0
    %744 = vmatpush1.msra.mxu0 0.0
    %745 = vmatprep.subr.mxu0 0.0
    %746 = vmatpush1.msra.mxu0 0.0
    %747 = vmatprep.subr.mxu0 0.0
    %748 = vmatpush1.msra.mxu0 0.0
    %749 = vmatprep.subr.mxu0 0.0
    %750 = vmatpush1.msra.mxu0 0.0
    %751 = vmatprep.subr.mxu0 0.0
    %752 = vmatpush1.msra.mxu0 0.0
    %753 = vmatprep.subr.mxu0 0.0
    %754 = vmatpush1.msra.mxu0 0.0
    %755 = vmatprep.subr.mxu0 0.0
    %756 = vmatpush1.msra.mxu0 0.0
    %757 = vmatprep.subr.mxu0 0.0
    %758 = vmatpush1.msra.mxu0 0.0
    %759 = vmatprep.subr.mxu0 0.0
    %760 = vmatpush1.msra.mxu0 0.0
    %761 = vmatprep.subr.mxu0 0.0
    %762 = vmatpush1.msra.mxu0 0.0
    %763 = vmatprep.mubr.f32.mxu0 0.0
    %764 = vmatmul.mubr.f32.gmra.mrb[0].mxu0 %v676
    %v765 = vpop.f32.mrb[0].mxu0
    %v766 = vadd.f32 %v698, %v765
    %v767 = vpop.f32.mrb[0].mxu0
    %768 = vdwg.mxu0
    %v769 = vtanh.pop %v766
    %v770 = vlaneseq
    %v771 = vshrl.u32 %v770, 7
    %v772 = vsub.s32 0, %v771
    %v773 = vrot.slane %v550, %v772
    %v774 = vmul.f32 %v769, %v773
    %v775 = vlaneseq
    %v776 = vshrl.u32 %v775, 7
    %v777 = vsub.s32 0, %v776
    %v778 = vrot.slane %v549, %v777
    %v779 = vmul.f32 %v778, %v544
    %781 = vrot.lane.b32.xlu0 %v766, 124
    %v782 = vpop.permute.xlu0 %781
    %v784 = vsub.f32 %v544, %v782
    %v785 = vsub.f32 0.0, %v774
    %v786 = vmul.f32 %v785, 1.442695
    %v787 = vpow.pop %v786
    %v788 = vmul.f32 %v784, %v787
    %v789 = vmul.f32 %v773, %v788
    %v790 = vadd.f32 %v779, %v789
    %v791 = vsel %vm298, %v774, 0.0
    %792 = vadd.xlane.f32.xlu0 %v791
    %v793 = vpop.xlane.xlu0 %792
    %v794 = vsub.f32 %v548, %v793
    %v795 = vld [vmem:[%s3 + $0x5] sm:$0x1]
    %v796 = vsub.f32 1.0, %v795
    %v797 = vld [vmem:[%s5 + $0x5] sm:$0x1]
    %v798 = vlaneseq
    %v799 = vshrl.u32 %v798, 7
    %v800 = vsub.s32 0, %v799
    %v801 = vrot.slane %v797, %v800
    %s802 = scalar_lea.vmem %s4, 20
    %v803 = vld [vmem:[%s802] sm:$0xf]
    %805 = vset.pattern.permute.xlu0 2
    %806 = vperm.xlu0 %805, %v790
    %v807 = vpop.permute.xlu0 %806
    %v809 = vlaneseq
    %v810 = vshrl.u32 %v809, 7
    %v811 = vsub.s32 2, %v810
    %v812 = vrot.slane %v803, %v811
    %v813 = vmul.f32 %v807, %v812
    %v814 = vadd.f32 %v801, %v813
    %815 = vset.pattern.permute.xlu0 3
    %816 = vperm.xlu0 %815, %v790
    %v817 = vpop.permute.xlu0 %816
    %v819 = vlaneseq
    %v820 = vshrl.u32 %v819, 7
    %v821 = vsub.s32 3, %v820
    %v822 = vrot.slane %v803, %v821
    %v823 = vmul.f32 %v817, %v822
    %v824 = vadd.f32 %v814, %v823
    %vm825 = vcmp.gt.f32.partialorder %v824, 0.0
    %v826 = vmul.f32 %v824, 0.01
    %v827 = vsel %vm825, %v824, %v826
    %s828 = scalar_lea.vmem %s6, 640
    %v829 = vld [vmem:[%s828] sm:$0xff]
    %v830 = vld [vmem:[%s828 + $0x8] sm:$0xff]
    %v831 = vld [vmem:[%s828 + $0x10] sm:$0xff]
    %v832 = vld [vmem:[%s828 + $0x18] sm:$0xff]
    %v833 = vld [vmem:[%s828 + $0x20] sm:$0xff]
    %v834 = vld [vmem:[%s828 + $0x28] sm:$0xff]
    %v835 = vld [vmem:[%s828 + $0x30] sm:$0xff]
    %v836 = vld [vmem:[%s828 + $0x38] sm:$0xff]
    %v837 = vld [vmem:[%s828 + $0x40] sm:$0xff]
    %v838 = vld [vmem:[%s828 + $0x48] sm:$0xff]
    %v839 = vld [vmem:[%s828 + $0x50] sm:$0xff]
    %v840 = vld [vmem:[%s828 + $0x58] sm:$0xff]
    %v841 = vld [vmem:[%s828 + $0x60] sm:$0xff]
    %v842 = vld [vmem:[%s828 + $0x68] sm:$0xff]
    %v843 = vld [vmem:[%s828 + $0x70] sm:$0xff]
    %v844 = vld [vmem:[%s828 + $0x78] sm:$0xff]
    %v845 = vld [vmem:[%s7 + $0x5] sm:$0x1]
    %v846 = vlaneseq
    %v847 = vshrl.u32 %v846, 7
    %v848 = vsub.s32 0, %v847
    %v849 = vrot.slane %v845, %v848
    %850 = vmatprep.subr.mxu0 0.0
    %851 = vmatpush1.msra.mxu0 %v829
    %852 = vmatprep.subr.mxu0 0.0
    %853 = vmatpush1.msra.mxu0 %v830
    %854 = vmatprep.subr.mxu0 0.0
    %855 = vmatpush1.msra.mxu0 %v831
    %856 = vmatprep.subr.mxu0 0.0
    %857 = vmatpush1.msra.mxu0 %v832
    %858 = vmatprep.subr.mxu0 0.0
    %859 = vmatpush1.msra.mxu0 %v833
    %860 = vmatprep.subr.mxu0 0.0
    %861 = vmatpush1.msra.mxu0 %v834
    %862 = vmatprep.subr.mxu0 0.0
    %863 = vmatpush1.msra.mxu0 %v835
    %864 = vmatprep.subr.mxu0 0.0
    %865 = vmatpush1.msra.mxu0 %v836
    %866 = vmatprep.subr.mxu0 0.0
    %867 = vmatpush1.msra.mxu0 %v837
    %868 = vmatprep.subr.mxu0 0.0
    %869 = vmatpush1.msra.mxu0 %v838
    %870 = vmatprep.subr.mxu0 0.0
    %871 = vmatpush1.msra.mxu0 %v839
    %872 = vmatprep.subr.mxu0 0.0
    %873 = vmatpush1.msra.mxu0 %v840
    %874 = vmatprep.subr.mxu0 0.0
    %875 = vmatpush1.msra.mxu0 %v841
    %876 = vmatprep.subr.mxu0 0.0
    %877 = vmatpush1.msra.mxu0 %v842
    %878 = vmatprep.subr.mxu0 0.0
    %879 = vmatpush1.msra.mxu0 %v843
    %880 = vmatprep.subr.mxu0 0.0
    %881 = vmatpush1.msra.mxu0 %v844
    %882 = vmatprep.subr.mxu0 0.0
    %883 = vmatpush1.msra.mxu0 0.0
    %884 = vmatprep.subr.mxu0 0.0
    %885 = vmatpush1.msra.mxu0 0.0
    %886 = vmatprep.subr.mxu0 0.0
    %887 = vmatpush1.msra.mxu0 0.0
    %888 = vmatprep.subr.mxu0 0.0
    %889 = vmatpush1.msra.mxu0 0.0
    %890 = vmatprep.subr.mxu0 0.0
    %891 = vmatpush1.msra.mxu0 0.0
    %892 = vmatprep.subr.mxu0 0.0
    %893 = vmatpush1.msra.mxu0 0.0
    %894 = vmatprep.subr.mxu0 0.0
    %895 = vmatpush1.msra.mxu0 0.0
    %896 = vmatprep.subr.mxu0 0.0
    %897 = vmatpush1.msra.mxu0 0.0
    %898 = vmatprep.subr.mxu0 0.0
    %899 = vmatpush1.msra.mxu0 0.0
    %900 = vmatprep.subr.mxu0 0.0
    %901 = vmatpush1.msra.mxu0 0.0
    %902 = vmatprep.subr.mxu0 0.0
    %903 = vmatpush1.msra.mxu0 0.0
    %904 = vmatprep.subr.mxu0 0.0
    %905 = vmatpush1.msra.mxu0 0.0
    %906 = vmatprep.subr.mxu0 0.0
    %907 = vmatpush1.msra.mxu0 0.0
    %908 = vmatprep.subr.mxu0 0.0
    %909 = vmatpush1.msra.mxu0 0.0
    %910 = vmatprep.subr.mxu0 0.0
    %911 = vmatpush1.msra.mxu0 0.0
    %912 = vmatprep.subr.mxu0 0.0
    %913 = vmatpush1.msra.mxu0 0.0
    %914 = vmatprep.mubr.f32.mxu0 0.0
    %915 = vmatmul.mubr.f32.gmra.mrb[0].mxu0 %v827
    %v916 = vpop.f32.mrb[0].mxu0
    %v917 = vadd.f32 %v849, %v916
    %v918 = vpop.f32.mrb[0].mxu0
    %919 = vdwg.mxu0
    %vm920 = vcmp.gt.f32.partialorder %v917, 0.0
    %v921 = vmul.f32 %v917, 0.01
    %v922 = vsel %vm920, %v917, %v921
    %s923 = scalar_lea.vmem %s8, 640
    %v924 = vld [vmem:[%s923] sm:$0xff]
    %v925 = vld [vmem:[%s923 + $0x8] sm:$0xff]
    %v926 = vld [vmem:[%s923 + $0x10] sm:$0xff]
    %v927 = vld [vmem:[%s923 + $0x18] sm:$0xff]
    %v928 = vld [vmem:[%s923 + $0x20] sm:$0xff]
    %v929 = vld [vmem:[%s923 + $0x28] sm:$0xff]
    %v930 = vld [vmem:[%s923 + $0x30] sm:$0xff]
    %v931 = vld [vmem:[%s923 + $0x38] sm:$0xff]
    %v932 = vld [vmem:[%s923 + $0x40] sm:$0xff]
    %v933 = vld [vmem:[%s923 + $0x48] sm:$0xff]
    %v934 = vld [vmem:[%s923 + $0x50] sm:$0xff]
    %v935 = vld [vmem:[%s923 + $0x58] sm:$0xff]
    %v936 = vld [vmem:[%s923 + $0x60] sm:$0xff]
    %v937 = vld [vmem:[%s923 + $0x68] sm:$0xff]
    %v938 = vld [vmem:[%s923 + $0x70] sm:$0xff]
    %v939 = vld [vmem:[%s923 + $0x78] sm:$0xff]
    %v940 = vld [vmem:[%s9 + $0x5] sm:$0x1]
    %v941 = vlaneseq
    %v942 = vshrl.u32 %v941, 7
    %v943 = vsub.s32 0, %v942
    %v944 = vrot.slane %v940, %v943
    %945 = vmatprep.subr.mxu0 0.0
    %946 = vmatpush1.msra.mxu0 %v924
    %947 = vmatprep.subr.mxu0 0.0
    %948 = vmatpush1.msra.mxu0 %v925
    %949 = vmatprep.subr.mxu0 0.0
    %950 = vmatpush1.msra.mxu0 %v926
    %951 = vmatprep.subr.mxu0 0.0
    %952 = vmatpush1.msra.mxu0 %v927
    %953 = vmatprep.subr.mxu0 0.0
    %954 = vmatpush1.msra.mxu0 %v928
    %955 = vmatprep.subr.mxu0 0.0
    %956 = vmatpush1.msra.mxu0 %v929
    %957 = vmatprep.subr.mxu0 0.0
    %958 = vmatpush1.msra.mxu0 %v930
    %959 = vmatprep.subr.mxu0 0.0
    %960 = vmatpush1.msra.mxu0 %v931
    %961 = vmatprep.subr.mxu0 0.0
    %962 = vmatpush1.msra.mxu0 %v932
    %963 = vmatprep.subr.mxu0 0.0
    %964 = vmatpush1.msra.mxu0 %v933
    %965 = vmatprep.subr.mxu0 0.0
    %966 = vmatpush1.msra.mxu0 %v934
    %967 = vmatprep.subr.mxu0 0.0
    %968 = vmatpush1.msra.mxu0 %v935
    %969 = vmatprep.subr.mxu0 0.0
    %970 = vmatpush1.msra.mxu0 %v936
    %971 = vmatprep.subr.mxu0 0.0
    %972 = vmatpush1.msra.mxu0 %v937
    %973 = vmatprep.subr.mxu0 0.0
    %974 = vmatpush1.msra.mxu0 %v938
    %975 = vmatprep.subr.mxu0 0.0
    %976 = vmatpush1.msra.mxu0 %v939
    %977 = vmatprep.subr.mxu0 0.0
    %978 = vmatpush1.msra.mxu0 0.0
    %979 = vmatprep.subr.mxu0 0.0
    %980 = vmatpush1.msra.mxu0 0.0
    %981 = vmatprep.subr.mxu0 0.0
    %982 = vmatpush1.msra.mxu0 0.0
    %983 = vmatprep.subr.mxu0 0.0
    %984 = vmatpush1.msra.mxu0 0.0
    %985 = vmatprep.subr.mxu0 0.0
    %986 = vmatpush1.msra.mxu0 0.0
    %987 = vmatprep.subr.mxu0 0.0
    %988 = vmatpush1.msra.mxu0 0.0
    %989 = vmatprep.subr.mxu0 0.0
    %990 = vmatpush1.msra.mxu0 0.0
    %991 = vmatprep.subr.mxu0 0.0
    %992 = vmatpush1.msra.mxu0 0.0
    %993 = vmatprep.subr.mxu0 0.0
    %994 = vmatpush1.msra.mxu0 0.0
    %995 = vmatprep.subr.mxu0 0.0
    %996 = vmatpush1.msra.mxu0 0.0
    %997 = vmatprep.subr.mxu0 0.0
    %998 = vmatpush1.msra.mxu0 0.0
    %999 = vmatprep.subr.mxu0 0.0
    %1000 = vmatpush1.msra.mxu0 0.0
    %1001 = vmatprep.subr.mxu0 0.0
    %1002 = vmatpush1.msra.mxu0 0.0
    %1003 = vmatprep.subr.mxu0 0.0
    %1004 = vmatpush1.msra.mxu0 0.0
    %1005 = vmatprep.subr.mxu0 0.0
    %1006 = vmatpush1.msra.mxu0 0.0
    %1007 = vmatprep.subr.mxu0 0.0
    %1008 = vmatpush1.msra.mxu0 0.0
    %1009 = vmatprep.mubr.f32.mxu0 0.0
    %1010 = vmatmul.mubr.f32.gmra.mrb[0].mxu0 %v922
    %v1011 = vpop.f32.mrb[0].mxu0
    %v1012 = vadd.f32 %v944, %v1011
    %v1013 = vpop.f32.mrb[0].mxu0
    %1014 = vdwg.mxu0
    %v1015 = vtanh.pop %v1012
    %v1016 = vlaneseq
    %v1017 = vshrl.u32 %v1016, 7
    %v1018 = vsub.s32 0, %v1017
    %v1019 = vrot.slane %v796, %v1018
    %v1020 = vmul.f32 %v1015, %v1019
    %v1021 = vlaneseq
    %v1022 = vshrl.u32 %v1021, 7
    %v1023 = vsub.s32 0, %v1022
    %v1024 = vrot.slane %v795, %v1023
    %v1025 = vmul.f32 %v1024, %v790
    %1027 = vrot.lane.b32.xlu0 %v1012, 124
    %v1028 = vpop.permute.xlu0 %1027
    %v1030 = vsub.f32 %v790, %v1028
    %v1031 = vsub.f32 0.0, %v1020
    %v1032 = vmul.f32 %v1031, 1.442695
    %v1033 = vpow.pop %v1032
    %v1034 = vmul.f32 %v1030, %v1033
    %v1035 = vmul.f32 %v1019, %v1034
    %v1036 = vadd.f32 %v1025, %v1035
    %v1037 = vsel %vm298, %v1020, 0.0
    %1038 = vadd.xlane.f32.xlu0 %v1037
    %v1039 = vpop.xlane.xlu0 %1038
    %v1040 = vsub.f32 %v794, %v1039
    %v1041 = vld [vmem:[%s3 + $0x4] sm:$0x1]
    %v1042 = vsub.f32 1.0, %v1041
    %v1043 = vld [vmem:[%s5 + $0x4] sm:$0x1]
    %v1044 = vlaneseq
    %v1045 = vshrl.u32 %v1044, 7
    %v1046 = vsub.s32 0, %v1045
    %v1047 = vrot.slane %v1043, %v1046
    %s1048 = scalar_lea.vmem %s4, 16
    %v1049 = vld [vmem:[%s1048] sm:$0xf]
    %1051 = vset.pattern.permute.xlu0 0
    %1052 = vperm.xlu0 %1051, %v1036
    %v1053 = vpop.permute.xlu0 %1052
    %v1055 = vlaneseq
    %v1056 = vshrl.u32 %v1055, 7
    %v1057 = vsub.s32 0, %v1056
    %v1058 = vrot.slane %v1049, %v1057
    %v1059 = vmul.f32 %v1053, %v1058
    %v1060 = vadd.f32 %v1047, %v1059
    %1061 = vset.pattern.permute.xlu0 2
    %1062 = vperm.xlu0 %1061, %v1036
    %v1063 = vpop.permute.xlu0 %1062
    %v1065 = vlaneseq
    %v1066 = vshrl.u32 %v1065, 7
    %v1067 = vsub.s32 2, %v1066
    %v1068 = vrot.slane %v1049, %v1067
    %v1069 = vmul.f32 %v1063, %v1068
    %v1070 = vadd.f32 %v1060, %v1069
    %vm1071 = vcmp.gt.f32.partialorder %v1070, 0.0
    %v1072 = vmul.f32 %v1070, 0.01
    %v1073 = vsel %vm1071, %v1070, %v1072
    %s1074 = scalar_lea.vmem %s6, 512
    %v1075 = vld [vmem:[%s1074] sm:$0xff]
    %v1076 = vld [vmem:[%s1074 + $0x8] sm:$0xff]
    %v1077 = vld [vmem:[%s1074 + $0x10] sm:$0xff]
    %v1078 = vld [vmem:[%s1074 + $0x18] sm:$0xff]
    %v1079 = vld [vmem:[%s1074 + $0x20] sm:$0xff]
    %v1080 = vld [vmem:[%s1074 + $0x28] sm:$0xff]
    %v1081 = vld [vmem:[%s1074 + $0x30] sm:$0xff]
    %v1082 = vld [vmem:[%s1074 + $0x38] sm:$0xff]
    %v1083 = vld [vmem:[%s1074 + $0x40] sm:$0xff]
    %v1084 = vld [vmem:[%s1074 + $0x48] sm:$0xff]
    %v1085 = vld [vmem:[%s1074 + $0x50] sm:$0xff]
    %v1086 = vld [vmem:[%s1074 + $0x58] sm:$0xff]
    %v1087 = vld [vmem:[%s1074 + $0x60] sm:$0xff]
    %v1088 = vld [vmem:[%s1074 + $0x68] sm:$0xff]
    %v1089 = vld [vmem:[%s1074 + $0x70] sm:$0xff]
    %v1090 = vld [vmem:[%s1074 + $0x78] sm:$0xff]
    %v1091 = vld [vmem:[%s7 + $0x4] sm:$0x1]
    %v1092 = vlaneseq
    %v1093 = vshrl.u32 %v1092, 7
    %v1094 = vsub.s32 0, %v1093
    %v1095 = vrot.slane %v1091, %v1094
    %1096 = vmatprep.subr.mxu0 0.0
    %1097 = vmatpush1.msra.mxu0 %v1075
    %1098 = vmatprep.subr.mxu0 0.0
    %1099 = vmatpush1.msra.mxu0 %v1076
    %1100 = vmatprep.subr.mxu0 0.0
    %1101 = vmatpush1.msra.mxu0 %v1077
    %1102 = vmatprep.subr.mxu0 0.0
    %1103 = vmatpush1.msra.mxu0 %v1078
    %1104 = vmatprep.subr.mxu0 0.0
    %1105 = vmatpush1.msra.mxu0 %v1079
    %1106 = vmatprep.subr.mxu0 0.0
    %1107 = vmatpush1.msra.mxu0 %v1080
    %1108 = vmatprep.subr.mxu0 0.0
    %1109 = vmatpush1.msra.mxu0 %v1081
    %1110 = vmatprep.subr.mxu0 0.0
    %1111 = vmatpush1.msra.mxu0 %v1082
    %1112 = vmatprep.subr.mxu0 0.0
    %1113 = vmatpush1.msra.mxu0 %v1083
    %1114 = vmatprep.subr.mxu0 0.0
    %1115 = vmatpush1.msra.mxu0 %v1084
    %1116 = vmatprep.subr.mxu0 0.0
    %1117 = vmatpush1.msra.mxu0 %v1085
    %1118 = vmatprep.subr.mxu0 0.0
    %1119 = vmatpush1.msra.mxu0 %v1086
    %1120 = vmatprep.subr.mxu0 0.0
    %1121 = vmatpush1.msra.mxu0 %v1087
    %1122 = vmatprep.subr.mxu0 0.0
    %1123 = vmatpush1.msra.mxu0 %v1088
    %1124 = vmatprep.subr.mxu0 0.0
    %1125 = vmatpush1.msra.mxu0 %v1089
    %1126 = vmatprep.subr.mxu0 0.0
    %1127 = vmatpush1.msra.mxu0 %v1090
    %1128 = vmatprep.subr.mxu0 0.0
    %1129 = vmatpush1.msra.mxu0 0.0
    %1130 = vmatprep.subr.mxu0 0.0
    %1131 = vmatpush1.msra.mxu0 0.0
    %1132 = vmatprep.subr.mxu0 0.0
    %1133 = vmatpush1.msra.mxu0 0.0
    %1134 = vmatprep.subr.mxu0 0.0
    %1135 = vmatpush1.msra.mxu0 0.0
    %1136 = vmatprep.subr.mxu0 0.0
    %1137 = vmatpush1.msra.mxu0 0.0
    %1138 = vmatprep.subr.mxu0 0.0
    %1139 = vmatpush1.msra.mxu0 0.0
    %1140 = vmatprep.subr.mxu0 0.0
    %1141 = vmatpush1.msra.mxu0 0.0
    %1142 = vmatprep.subr.mxu0 0.0
    %1143 = vmatpush1.msra.mxu0 0.0
    %1144 = vmatprep.subr.mxu0 0.0
    %1145 = vmatpush1.msra.mxu0 0.0
    %1146 = vmatprep.subr.mxu0 0.0
    %1147 = vmatpush1.msra.mxu0 0.0
    %1148 = vmatprep.subr.mxu0 0.0
    %1149 = vmatpush1.msra.mxu0 0.0
    %1150 = vmatprep.subr.mxu0 0.0
    %1151 = vmatpush1.msra.mxu0 0.0
    %1152 = vmatprep.subr.mxu0 0.0
    %1153 = vmatpush1.msra.mxu0 0.0
    %1154 = vmatprep.subr.mxu0 0.0
    %1155 = vmatpush1.msra.mxu0 0.0
    %1156 = vmatprep.subr.mxu0 0.0
    %1157 = vmatpush1.msra.mxu0 0.0
    %1158 = vmatprep.subr.mxu0 0.0
    %1159 = vmatpush1.msra.mxu0 0.0
    %1160 = vmatprep.mubr.f32.mxu0 0.0
    %1161 = vmatmul.mubr.f32.gmra.mrb[0].mxu0 %v1073
    %v1162 = vpop.f32.mrb[0].mxu0
    %v1163 = vadd.f32 %v1095, %v1162
    %v1164 = vpop.f32.mrb[0].mxu0
    %1165 = vdwg.mxu0
    %vm1166 = vcmp.gt.f32.partialorder %v1163, 0.0
    %v1167 = vmul.f32 %v1163, 0.01
    %v1168 = vsel %vm1166, %v1163, %v1167
    %s1169 = scalar_lea.vmem %s8, 512
    %v1170 = vld [vmem:[%s1169] sm:$0xff]
    %v1171 = vld [vmem:[%s1169 + $0x8] sm:$0xff]
    %v1172 = vld [vmem:[%s1169 + $0x10] sm:$0xff]
    %v1173 = vld [vmem:[%s1169 + $0x18] sm:$0xff]
    %v1174 = vld [vmem:[%s1169 + $0x20] sm:$0xff]
    %v1175 = vld [vmem:[%s1169 + $0x28] sm:$0xff]
    %v1176 = vld [vmem:[%s1169 + $0x30] sm:$0xff]
    %v1177 = vld [vmem:[%s1169 + $0x38] sm:$0xff]
    %v1178 = vld [vmem:[%s1169 + $0x40] sm:$0xff]
    %v1179 = vld [vmem:[%s1169 + $0x48] sm:$0xff]
    %v1180 = vld [vmem:[%s1169 + $0x50] sm:$0xff]
    %v1181 = vld [vmem:[%s1169 + $0x58] sm:$0xff]
    %v1182 = vld [vmem:[%s1169 + $0x60] sm:$0xff]
    %v1183 = vld [vmem:[%s1169 + $0x68] sm:$0xff]
    %v1184 = vld [vmem:[%s1169 + $0x70] sm:$0xff]
    %v1185 = vld [vmem:[%s1169 + $0x78] sm:$0xff]
    %v1186 = vld [vmem:[%s9 + $0x4] sm:$0x1]
    %v1187 = vlaneseq
    %v1188 = vshrl.u32 %v1187, 7
    %v1189 = vsub.s32 0, %v1188
    %v1190 = vrot.slane %v1186, %v1189
    %1191 = vmatprep.subr.mxu0 0.0
    %1192 = vmatpush1.msra.mxu0 %v1170
    %1193 = vmatprep.subr.mxu0 0.0
    %1194 = vmatpush1.msra.mxu0 %v1171
    %1195 = vmatprep.subr.mxu0 0.0
    %1196 = vmatpush1.msra.mxu0 %v1172
    %1197 = vmatprep.subr.mxu0 0.0
    %1198 = vmatpush1.msra.mxu0 %v1173
    %1199 = vmatprep.subr.mxu0 0.0
    %1200 = vmatpush1.msra.mxu0 %v1174
    %1201 = vmatprep.subr.mxu0 0.0
    %1202 = vmatpush1.msra.mxu0 %v1175
    %1203 = vmatprep.subr.mxu0 0.0
    %1204 = vmatpush1.msra.mxu0 %v1176
    %1205 = vmatprep.subr.mxu0 0.0
    %1206 = vmatpush1.msra.mxu0 %v1177
    %1207 = vmatprep.subr.mxu0 0.0
    %1208 = vmatpush1.msra.mxu0 %v1178
    %1209 = vmatprep.subr.mxu0 0.0
    %1210 = vmatpush1.msra.mxu0 %v1179
    %1211 = vmatprep.subr.mxu0 0.0
    %1212 = vmatpush1.msra.mxu0 %v1180
    %1213 = vmatprep.subr.mxu0 0.0
    %1214 = vmatpush1.msra.mxu0 %v1181
    %1215 = vmatprep.subr.mxu0 0.0
    %1216 = vmatpush1.msra.mxu0 %v1182
    %1217 = vmatprep.subr.mxu0 0.0
    %1218 = vmatpush1.msra.mxu0 %v1183
    %1219 = vmatprep.subr.mxu0 0.0
    %1220 = vmatpush1.msra.mxu0 %v1184
    %1221 = vmatprep.subr.mxu0 0.0
    %1222 = vmatpush1.msra.mxu0 %v1185
    %1223 = vmatprep.subr.mxu0 0.0
    %1224 = vmatpush1.msra.mxu0 0.0
    %1225 = vmatprep.subr.mxu0 0.0
    %1226 = vmatpush1.msra.mxu0 0.0
    %1227 = vmatprep.subr.mxu0 0.0
    %1228 = vmatpush1.msra.mxu0 0.0
    %1229 = vmatprep.subr.mxu0 0.0
    %1230 = vmatpush1.msra.mxu0 0.0
    %1231 = vmatprep.subr.mxu0 0.0
    %1232 = vmatpush1.msra.mxu0 0.0
    %1233 = vmatprep.subr.mxu0 0.0
    %1234 = vmatpush1.msra.mxu0 0.0
    %1235 = vmatprep.subr.mxu0 0.0
    %1236 = vmatpush1.msra.mxu0 0.0
    %1237 = vmatprep.subr.mxu0 0.0
    %1238 = vmatpush1.msra.mxu0 0.0
    %1239 = vmatprep.subr.mxu0 0.0
    %1240 = vmatpush1.msra.mxu0 0.0
    %1241 = vmatprep.subr.mxu0 0.0
    %1242 = vmatpush1.msra.mxu0 0.0
    %1243 = vmatprep.subr.mxu0 0.0
    %1244 = vmatpush1.msra.mxu0 0.0
    %1245 = vmatprep.subr.mxu0 0.0
    %1246 = vmatpush1.msra.mxu0 0.0
    %1247 = vmatprep.subr.mxu0 0.0
    %1248 = vmatpush1.msra.mxu0 0.0
    %1249 = vmatprep.subr.mxu0 0.0
    %1250 = vmatpush1.msra.mxu0 0.0
    %1251 = vmatprep.subr.mxu0 0.0
    %1252 = vmatpush1.msra.mxu0 0.0
    %1253 = vmatprep.subr.mxu0 0.0
    %1254 = vmatpush1.msra.mxu0 0.0
    %1255 = vmatprep.mubr.f32.mxu0 0.0
    %1256 = vmatmul.mubr.f32.gmra.mrb[0].mxu0 %v1168
    %v1257 = vpop.f32.mrb[0].mxu0
    %v1258 = vadd.f32 %v1190, %v1257
    %v1259 = vpop.f32.mrb[0].mxu0
    %1260 = vdwg.mxu0
    %v1261 = vtanh.pop %v1258
    %v1262 = vlaneseq
    %v1263 = vshrl.u32 %v1262, 7
    %v1264 = vsub.s32 0, %v1263
    %v1265 = vrot.slane %v1042, %v1264
    %v1266 = vmul.f32 %v1261, %v1265
    %v1267 = vlaneseq
    %v1268 = vshrl.u32 %v1267, 7
    %v1269 = vsub.s32 0, %v1268
    %v1270 = vrot.slane %v1041, %v1269
    %v1271 = vmul.f32 %v1270, %v1036
    %1273 = vrot.lane.b32.xlu0 %v1258, 124
    %v1274 = vpop.permute.xlu0 %1273
    %v1276 = vsub.f32 %v1036, %v1274
    %v1277 = vsub.f32 0.0, %v1266
    %v1278 = vmul.f32 %v1277, 1.442695
    %v1279 = vpow.pop %v1278
    %v1280 = vmul.f32 %v1276, %v1279
    %v1281 = vmul.f32 %v1265, %v1280
    %v1282 = vadd.f32 %v1271, %v1281
    %v1283 = vsel %vm298, %v1266, 0.0
    %1284 = vadd.xlane.f32.xlu0 %v1283
    %v1285 = vpop.xlane.xlu0 %1284
    %v1286 = vsub.f32 %v1040, %v1285
    %v1287 = vld [vmem:[%s3 + $0x3] sm:$0x1]
    %v1288 = vsub.f32 1.0, %v1287
    %v1289 = vld [vmem:[%s5 + $0x3] sm:$0x1]
    %v1290 = vlaneseq
    %v1291 = vshrl.u32 %v1290, 7
    %v1292 = vsub.s32 0, %v1291
    %v1293 = vrot.slane %v1289, %v1292
    %s1294 = scalar_lea.vmem %s4, 12
    %v1295 = vld [vmem:[%s1294] sm:$0xf]
    %1297 = vset.pattern.permute.xlu0 0
    %1298 = vperm.xlu0 %1297, %v1282
    %v1299 = vpop.permute.xlu0 %1298
    %v1301 = vlaneseq
    %v1302 = vshrl.u32 %v1301, 7
    %v1303 = vsub.s32 0, %v1302
    %v1304 = vrot.slane %v1295, %v1303
    %v1305 = vmul.f32 %v1299, %v1304
    %v1306 = vadd.f32 %v1293, %v1305
    %1307 = vset.pattern.permute.xlu0 1
    %1308 = vperm.xlu0 %1307, %v1282
    %v1309 = vpop.permute.xlu0 %1308
    %v1311 = vlaneseq
    %v1312 = vshrl.u32 %v1311, 7
    %v1313 = vsub.s32 1, %v1312
    %v1314 = vrot.slane %v1295, %v1313
    %v1315 = vmul.f32 %v1309, %v1314
    %v1316 = vadd.f32 %v1306, %v1315
    %vm1317 = vcmp.gt.f32.partialorder %v1316, 0.0
    %v1318 = vmul.f32 %v1316, 0.01
    %v1319 = vsel %vm1317, %v1316, %v1318
    %s1320 = scalar_lea.vmem %s6, 384
    %v1321 = vld [vmem:[%s1320] sm:$0xff]
    %v1322 = vld [vmem:[%s1320 + $0x8] sm:$0xff]
    %v1323 = vld [vmem:[%s1320 + $0x10] sm:$0xff]
    %v1324 = vld [vmem:[%s1320 + $0x18] sm:$0xff]
    %v1325 = vld [vmem:[%s1320 + $0x20] sm:$0xff]
    %v1326 = vld [vmem:[%s1320 + $0x28] sm:$0xff]
    %v1327 = vld [vmem:[%s1320 + $0x30] sm:$0xff]
    %v1328 = vld [vmem:[%s1320 + $0x38] sm:$0xff]
    %v1329 = vld [vmem:[%s1320 + $0x40] sm:$0xff]
    %v1330 = vld [vmem:[%s1320 + $0x48] sm:$0xff]
    %v1331 = vld [vmem:[%s1320 + $0x50] sm:$0xff]
    %v1332 = vld [vmem:[%s1320 + $0x58] sm:$0xff]
    %v1333 = vld [vmem:[%s1320 + $0x60] sm:$0xff]
    %v1334 = vld [vmem:[%s1320 + $0x68] sm:$0xff]
    %v1335 = vld [vmem:[%s1320 + $0x70] sm:$0xff]
    %v1336 = vld [vmem:[%s1320 + $0x78] sm:$0xff]
    %v1337 = vld [vmem:[%s7 + $0x3] sm:$0x1]
    %v1338 = vlaneseq
    %v1339 = vshrl.u32 %v1338, 7
    %v1340 = vsub.s32 0, %v1339
    %v1341 = vrot.slane %v1337, %v1340
    %1342 = vmatprep.subr.mxu0 0.0
    %1343 = vmatpush1.msra.mxu0 %v1321
    %1344 = vmatprep.subr.mxu0 0.0
    %1345 = vmatpush1.msra.mxu0 %v1322
    %1346 = vmatprep.subr.mxu0 0.0
    %1347 = vmatpush1.msra.mxu0 %v1323
    %1348 = vmatprep.subr.mxu0 0.0
    %1349 = vmatpush1.msra.mxu0 %v1324
    %1350 = vmatprep.subr.mxu0 0.0
    %1351 = vmatpush1.msra.mxu0 %v1325
    %1352 = vmatprep.subr.mxu0 0.0
    %1353 = vmatpush1.msra.mxu0 %v1326
    %1354 = vmatprep.subr.mxu0 0.0
    %1355 = vmatpush1.msra.mxu0 %v1327
    %1356 = vmatprep.subr.mxu0 0.0
    %1357 = vmatpush1.msra.mxu0 %v1328
    %1358 = vmatprep.subr.mxu0 0.0
    %1359 = vmatpush1.msra.mxu0 %v1329
    %1360 = vmatprep.subr.mxu0 0.0
    %1361 = vmatpush1.msra.mxu0 %v1330
    %1362 = vmatprep.subr.mxu0 0.0
    %1363 = vmatpush1.msra.mxu0 %v1331
    %1364 = vmatprep.subr.mxu0 0.0
    %1365 = vmatpush1.msra.mxu0 %v1332
    %1366 = vmatprep.subr.mxu0 0.0
    %1367 = vmatpush1.msra.mxu0 %v1333
    %1368 = vmatprep.subr.mxu0 0.0
    %1369 = vmatpush1.msra.mxu0 %v1334
    %1370 = vmatprep.subr.mxu0 0.0
    %1371 = vmatpush1.msra.mxu0 %v1335
    %1372 = vmatprep.subr.mxu0 0.0
    %1373 = vmatpush1.msra.mxu0 %v1336
    %1374 = vmatprep.subr.mxu0 0.0
    %1375 = vmatpush1.msra.mxu0 0.0
    %1376 = vmatprep.subr.mxu0 0.0
    %1377 = vmatpush1.msra.mxu0 0.0
    %1378 = vmatprep.subr.mxu0 0.0
    %1379 = vmatpush1.msra.mxu0 0.0
    %1380 = vmatprep.subr.mxu0 0.0
    %1381 = vmatpush1.msra.mxu0 0.0
    %1382 = vmatprep.subr.mxu0 0.0
    %1383 = vmatpush1.msra.mxu0 0.0
    %1384 = vmatprep.subr.mxu0 0.0
    %1385 = vmatpush1.msra.mxu0 0.0
    %1386 = vmatprep.subr.mxu0 0.0
    %1387 = vmatpush1.msra.mxu0 0.0
    %1388 = vmatprep.subr.mxu0 0.0
    %1389 = vmatpush1.msra.mxu0 0.0
    %1390 = vmatprep.subr.mxu0 0.0
    %1391 = vmatpush1.msra.mxu0 0.0
    %1392 = vmatprep.subr.mxu0 0.0
    %1393 = vmatpush1.msra.mxu0 0.0
    %1394 = vmatprep.subr.mxu0 0.0
    %1395 = vmatpush1.msra.mxu0 0.0
    %1396 = vmatprep.subr.mxu0 0.0
    %1397 = vmatpush1.msra.mxu0 0.0
    %1398 = vmatprep.subr.mxu0 0.0
    %1399 = vmatpush1.msra.mxu0 0.0
    %1400 = vmatprep.subr.mxu0 0.0
    %1401 = vmatpush1.msra.mxu0 0.0
    %1402 = vmatprep.subr.mxu0 0.0
    %1403 = vmatpush1.msra.mxu0 0.0
    %1404 = vmatprep.subr.mxu0 0.0
    %1405 = vmatpush1.msra.mxu0 0.0
    %1406 = vmatprep.mubr.f32.mxu0 0.0
    %1407 = vmatmul.mubr.f32.gmra.mrb[0].mxu0 %v1319
    %v1408 = vpop.f32.mrb[0].mxu0
    %v1409 = vadd.f32 %v1341, %v1408
    %v1410 = vpop.f32.mrb[0].mxu0
    %1411 = vdwg.mxu0
    %vm1412 = vcmp.gt.f32.partialorder %v1409, 0.0
    %v1413 = vmul.f32 %v1409, 0.01
    %v1414 = vsel %vm1412, %v1409, %v1413
    %s1415 = scalar_lea.vmem %s8, 384
    %v1416 = vld [vmem:[%s1415] sm:$0xff]
    %v1417 = vld [vmem:[%s1415 + $0x8] sm:$0xff]
    %v1418 = vld [vmem:[%s1415 + $0x10] sm:$0xff]
    %v1419 = vld [vmem:[%s1415 + $0x18] sm:$0xff]
    %v1420 = vld [vmem:[%s1415 + $0x20] sm:$0xff]
    %v1421 = vld [vmem:[%s1415 + $0x28] sm:$0xff]
    %v1422 = vld [vmem:[%s1415 + $0x30] sm:$0xff]
    %v1423 = vld [vmem:[%s1415 + $0x38] sm:$0xff]
    %v1424 = vld [vmem:[%s1415 + $0x40] sm:$0xff]
    %v1425 = vld [vmem:[%s1415 + $0x48] sm:$0xff]
    %v1426 = vld [vmem:[%s1415 + $0x50] sm:$0xff]
    %v1427 = vld [vmem:[%s1415 + $0x58] sm:$0xff]
    %v1428 = vld [vmem:[%s1415 + $0x60] sm:$0xff]
    %v1429 = vld [vmem:[%s1415 + $0x68] sm:$0xff]
    %v1430 = vld [vmem:[%s1415 + $0x70] sm:$0xff]
    %v1431 = vld [vmem:[%s1415 + $0x78] sm:$0xff]
    %v1432 = vld [vmem:[%s9 + $0x3] sm:$0x1]
    %v1433 = vlaneseq
    %v1434 = vshrl.u32 %v1433, 7
    %v1435 = vsub.s32 0, %v1434
    %v1436 = vrot.slane %v1432, %v1435
    %1437 = vmatprep.subr.mxu0 0.0
    %1438 = vmatpush1.msra.mxu0 %v1416
    %1439 = vmatprep.subr.mxu0 0.0
    %1440 = vmatpush1.msra.mxu0 %v1417
    %1441 = vmatprep.subr.mxu0 0.0
    %1442 = vmatpush1.msra.mxu0 %v1418
    %1443 = vmatprep.subr.mxu0 0.0
    %1444 = vmatpush1.msra.mxu0 %v1419
    %1445 = vmatprep.subr.mxu0 0.0
    %1446 = vmatpush1.msra.mxu0 %v1420
    %1447 = vmatprep.subr.mxu0 0.0
    %1448 = vmatpush1.msra.mxu0 %v1421
    %1449 = vmatprep.subr.mxu0 0.0
    %1450 = vmatpush1.msra.mxu0 %v1422
    %1451 = vmatprep.subr.mxu0 0.0
    %1452 = vmatpush1.msra.mxu0 %v1423
    %1453 = vmatprep.subr.mxu0 0.0
    %1454 = vmatpush1.msra.mxu0 %v1424
    %1455 = vmatprep.subr.mxu0 0.0
    %1456 = vmatpush1.msra.mxu0 %v1425
    %1457 = vmatprep.subr.mxu0 0.0
    %1458 = vmatpush1.msra.mxu0 %v1426
    %1459 = vmatprep.subr.mxu0 0.0
    %1460 = vmatpush1.msra.mxu0 %v1427
    %1461 = vmatprep.subr.mxu0 0.0
    %1462 = vmatpush1.msra.mxu0 %v1428
    %1463 = vmatprep.subr.mxu0 0.0
    %1464 = vmatpush1.msra.mxu0 %v1429
    %1465 = vmatprep.subr.mxu0 0.0
    %1466 = vmatpush1.msra.mxu0 %v1430
    %1467 = vmatprep.subr.mxu0 0.0
    %1468 = vmatpush1.msra.mxu0 %v1431
    %1469 = vmatprep.subr.mxu0 0.0
    %1470 = vmatpush1.msra.mxu0 0.0
    %1471 = vmatprep.subr.mxu0 0.0
    %1472 = vmatpush1.msra.mxu0 0.0
    %1473 = vmatprep.subr.mxu0 0.0
    %1474 = vmatpush1.msra.mxu0 0.0
    %1475 = vmatprep.subr.mxu0 0.0
    %1476 = vmatpush1.msra.mxu0 0.0
    %1477 = vmatprep.subr.mxu0 0.0
    %1478 = vmatpush1.msra.mxu0 0.0
    %1479 = vmatprep.subr.mxu0 0.0
    %1480 = vmatpush1.msra.mxu0 0.0
    %1481 = vmatprep.subr.mxu0 0.0
    %1482 = vmatpush1.msra.mxu0 0.0
    %1483 = vmatprep.subr.mxu0 0.0
    %1484 = vmatpush1.msra.mxu0 0.0
    %1485 = vmatprep.subr.mxu0 0.0
    %1486 = vmatpush1.msra.mxu0 0.0
    %1487 = vmatprep.subr.mxu0 0.0
    %1488 = vmatpush1.msra.mxu0 0.0
    %1489 = vmatprep.subr.mxu0 0.0
    %1490 = vmatpush1.msra.mxu0 0.0
    %1491 = vmatprep.subr.mxu0 0.0
    %1492 = vmatpush1.msra.mxu0 0.0
    %1493 = vmatprep.subr.mxu0 0.0
    %1494 = vmatpush1.msra.mxu0 0.0
    %1495 = vmatprep.subr.mxu0 0.0
    %1496 = vmatpush1.msra.mxu0 0.0
    %1497 = vmatprep.subr.mxu0 0.0
    %1498 = vmatpush1.msra.mxu0 0.0
    %1499 = vmatprep.subr.mxu0 0.0
    %1500 = vmatpush1.msra.mxu0 0.0
    %1501 = vmatprep.mubr.f32.mxu0 0.0
    %1502 = vmatmul.mubr.f32.gmra.mrb[0].mxu0 %v1414
    %v1503 = vpop.f32.mrb[0].mxu0
    %v1504 = vadd.f32 %v1436, %v1503
    %v1505 = vpop.f32.mrb[0].mxu0
    %1506 = vdwg.mxu0
    %v1507 = vtanh.pop %v1504
    %v1508 = vlaneseq
    %v1509 = vshrl.u32 %v1508, 7
    %v1510 = vsub.s32 0, %v1509
    %v1511 = vrot.slane %v1288, %v1510
    %v1512 = vmul.f32 %v1507, %v1511
    %v1513 = vlaneseq
    %v1514 = vshrl.u32 %v1513, 7
    %v1515 = vsub.s32 0, %v1514
    %v1516 = vrot.slane %v1287, %v1515
    %v1517 = vmul.f32 %v1516, %v1282
    %1519 = vrot.lane.b32.xlu0 %v1504, 124
    %v1520 = vpop.permute.xlu0 %1519
    %v1522 = vsub.f32 %v1282, %v1520
    %v1523 = vsub.f32 0.0, %v1512
    %v1524 = vmul.f32 %v1523, 1.442695
    %v1525 = vpow.pop %v1524
    %v1526 = vmul.f32 %v1522, %v1525
    %v1527 = vmul.f32 %v1511, %v1526
    %v1528 = vadd.f32 %v1517, %v1527
    %v1529 = vsel %vm298, %v1512, 0.0
    %1530 = vadd.xlane.f32.xlu0 %v1529
    %v1531 = vpop.xlane.xlu0 %1530
    %v1532 = vsub.f32 %v1286, %v1531
    %v1533 = vld [vmem:[%s3 + $0x2] sm:$0x1]
    %v1534 = vsub.f32 1.0, %v1533
    %v1535 = vld [vmem:[%s5 + $0x2] sm:$0x1]
    %v1536 = vlaneseq
    %v1537 = vshrl.u32 %v1536, 7
    %v1538 = vsub.s32 0, %v1537
    %v1539 = vrot.slane %v1535, %v1538
    %s1540 = scalar_lea.vmem %s4, 8
    %v1541 = vld [vmem:[%s1540] sm:$0xf]
    %1543 = vset.pattern.permute.xlu0 2
    %1544 = vperm.xlu0 %1543, %v1528
    %v1545 = vpop.permute.xlu0 %1544
    %v1547 = vlaneseq
    %v1548 = vshrl.u32 %v1547, 7
    %v1549 = vsub.s32 2, %v1548
    %v1550 = vrot.slane %v1541, %v1549
    %v1551 = vmul.f32 %v1545, %v1550
    %v1552 = vadd.f32 %v1539, %v1551
    %1553 = vset.pattern.permute.xlu0 3
    %1554 = vperm.xlu0 %1553, %v1528
    %v1555 = vpop.permute.xlu0 %1554
    %v1557 = vlaneseq
    %v1558 = vshrl.u32 %v1557, 7
    %v1559 = vsub.s32 3, %v1558
    %v1560 = vrot.slane %v1541, %v1559
    %v1561 = vmul.f32 %v1555, %v1560
    %v1562 = vadd.f32 %v1552, %v1561
    %vm1563 = vcmp.gt.f32.partialorder %v1562, 0.0
    %v1564 = vmul.f32 %v1562, 0.01
    %v1565 = vsel %vm1563, %v1562, %v1564
    %s1566 = scalar_lea.vmem %s6, 256
    %v1567 = vld [vmem:[%s1566] sm:$0xff]
    %v1568 = vld [vmem:[%s1566 + $0x8] sm:$0xff]
    %v1569 = vld [vmem:[%s1566 + $0x10] sm:$0xff]
    %v1570 = vld [vmem:[%s1566 + $0x18] sm:$0xff]
    %v1571 = vld [vmem:[%s1566 + $0x20] sm:$0xff]
    %v1572 = vld [vmem:[%s1566 + $0x28] sm:$0xff]
    %v1573 = vld [vmem:[%s1566 + $0x30] sm:$0xff]
    %v1574 = vld [vmem:[%s1566 + $0x38] sm:$0xff]
    %v1575 = vld [vmem:[%s1566 + $0x40] sm:$0xff]
    %v1576 = vld [vmem:[%s1566 + $0x48] sm:$0xff]
    %v1577 = vld [vmem:[%s1566 + $0x50] sm:$0xff]
    %v1578 = vld [vmem:[%s1566 + $0x58] sm:$0xff]
    %v1579 = vld [vmem:[%s1566 + $0x60] sm:$0xff]
    %v1580 = vld [vmem:[%s1566 + $0x68] sm:$0xff]
    %v1581 = vld [vmem:[%s1566 + $0x70] sm:$0xff]
    %v1582 = vld [vmem:[%s1566 + $0x78] sm:$0xff]
    %v1583 = vld [vmem:[%s7 + $0x2] sm:$0x1]
    %v1584 = vlaneseq
    %v1585 = vshrl.u32 %v1584, 7
    %v1586 = vsub.s32 0, %v1585
    %v1587 = vrot.slane %v1583, %v1586
    %1588 = vmatprep.subr.mxu0 0.0
    %1589 = vmatpush1.msra.mxu0 %v1567
    %1590 = vmatprep.subr.mxu0 0.0
    %1591 = vmatpush1.msra.mxu0 %v1568
    %1592 = vmatprep.subr.mxu0 0.0
    %1593 = vmatpush1.msra.mxu0 %v1569
    %1594 = vmatprep.subr.mxu0 0.0
    %1595 = vmatpush1.msra.mxu0 %v1570
    %1596 = vmatprep.subr.mxu0 0.0
    %1597 = vmatpush1.msra.mxu0 %v1571
    %1598 = vmatprep.subr.mxu0 0.0
    %1599 = vmatpush1.msra.mxu0 %v1572
    %1600 = vmatprep.subr.mxu0 0.0
    %1601 = vmatpush1.msra.mxu0 %v1573
    %1602 = vmatprep.subr.mxu0 0.0
    %1603 = vmatpush1.msra.mxu0 %v1574
    %1604 = vmatprep.subr.mxu0 0.0
    %1605 = vmatpush1.msra.mxu0 %v1575
    %1606 = vmatprep.subr.mxu0 0.0
    %1607 = vmatpush1.msra.mxu0 %v1576
    %1608 = vmatprep.subr.mxu0 0.0
    %1609 = vmatpush1.msra.mxu0 %v1577
    %1610 = vmatprep.subr.mxu0 0.0
    %1611 = vmatpush1.msra.mxu0 %v1578
    %1612 = vmatprep.subr.mxu0 0.0
    %1613 = vmatpush1.msra.mxu0 %v1579
    %1614 = vmatprep.subr.mxu0 0.0
    %1615 = vmatpush1.msra.mxu0 %v1580
    %1616 = vmatprep.subr.mxu0 0.0
    %1617 = vmatpush1.msra.mxu0 %v1581
    %1618 = vmatprep.subr.mxu0 0.0
    %1619 = vmatpush1.msra.mxu0 %v1582
    %1620 = vmatprep.subr.mxu0 0.0
    %1621 = vmatpush1.msra.mxu0 0.0
    %1622 = vmatprep.subr.mxu0 0.0
    %1623 = vmatpush1.msra.mxu0 0.0
    %1624 = vmatprep.subr.mxu0 0.0
    %1625 = vmatpush1.msra.mxu0 0.0
    %1626 = vmatprep.subr.mxu0 0.0
    %1627 = vmatpush1.msra.mxu0 0.0
    %1628 = vmatprep.subr.mxu0 0.0
    %1629 = vmatpush1.msra.mxu0 0.0
    %1630 = vmatprep.subr.mxu0 0.0
    %1631 = vmatpush1.msra.mxu0 0.0
    %1632 = vmatprep.subr.mxu0 0.0
    %1633 = vmatpush1.msra.mxu0 0.0
    %1634 = vmatprep.subr.mxu0 0.0
    %1635 = vmatpush1.msra.mxu0 0.0
    %1636 = vmatprep.subr.mxu0 0.0
    %1637 = vmatpush1.msra.mxu0 0.0
    %1638 = vmatprep.subr.mxu0 0.0
    %1639 = vmatpush1.msra.mxu0 0.0
    %1640 = vmatprep.subr.mxu0 0.0
    %1641 = vmatpush1.msra.mxu0 0.0
    %1642 = vmatprep.subr.mxu0 0.0
    %1643 = vmatpush1.msra.mxu0 0.0
    %1644 = vmatprep.subr.mxu0 0.0
    %1645 = vmatpush1.msra.mxu0 0.0
    %1646 = vmatprep.subr.mxu0 0.0
    %1647 = vmatpush1.msra.mxu0 0.0
    %1648 = vmatprep.subr.mxu0 0.0
    %1649 = vmatpush1.msra.mxu0 0.0
    %1650 = vmatprep.subr.mxu0 0.0
    %1651 = vmatpush1.msra.mxu0 0.0
    %1652 = vmatprep.mubr.f32.mxu0 0.0
    %1653 = vmatmul.mubr.f32.gmra.mrb[0].mxu0 %v1565
    %v1654 = vpop.f32.mrb[0].mxu0
    %v1655 = vadd.f32 %v1587, %v1654
    %v1656 = vpop.f32.mrb[0].mxu0
    %1657 = vdwg.mxu0
    %vm1658 = vcmp.gt.f32.partialorder %v1655, 0.0
    %v1659 = vmul.f32 %v1655, 0.01
    %v1660 = vsel %vm1658, %v1655, %v1659
    %s1661 = scalar_lea.vmem %s8, 256
    %v1662 = vld [vmem:[%s1661] sm:$0xff]
    %v1663 = vld [vmem:[%s1661 + $0x8] sm:$0xff]
    %v1664 = vld [vmem:[%s1661 + $0x10] sm:$0xff]
    %v1665 = vld [vmem:[%s1661 + $0x18] sm:$0xff]
    %v1666 = vld [vmem:[%s1661 + $0x20] sm:$0xff]
    %v1667 = vld [vmem:[%s1661 + $0x28] sm:$0xff]
    %v1668 = vld [vmem:[%s1661 + $0x30] sm:$0xff]
    %v1669 = vld [vmem:[%s1661 + $0x38] sm:$0xff]
    %v1670 = vld [vmem:[%s1661 + $0x40] sm:$0xff]
    %v1671 = vld [vmem:[%s1661 + $0x48] sm:$0xff]
    %v1672 = vld [vmem:[%s1661 + $0x50] sm:$0xff]
    %v1673 = vld [vmem:[%s1661 + $0x58] sm:$0xff]
    %v1674 = vld [vmem:[%s1661 + $0x60] sm:$0xff]
    %v1675 = vld [vmem:[%s1661 + $0x68] sm:$0xff]
    %v1676 = vld [vmem:[%s1661 + $0x70] sm:$0xff]
    %v1677 = vld [vmem:[%s1661 + $0x78] sm:$0xff]
    %v1678 = vld [vmem:[%s9 + $0x2] sm:$0x1]
    %v1679 = vlaneseq
    %v1680 = vshrl.u32 %v1679, 7
    %v1681 = vsub.s32 0, %v1680
    %v1682 = vrot.slane %v1678, %v1681
    %1683 = vmatprep.subr.mxu0 0.0
    %1684 = vmatpush1.msra.mxu0 %v1662
    %1685 = vmatprep.subr.mxu0 0.0
    %1686 = vmatpush1.msra.mxu0 %v1663
    %1687 = vmatprep.subr.mxu0 0.0
    %1688 = vmatpush1.msra.mxu0 %v1664
    %1689 = vmatprep.subr.mxu0 0.0
    %1690 = vmatpush1.msra.mxu0 %v1665
    %1691 = vmatprep.subr.mxu0 0.0
    %1692 = vmatpush1.msra.mxu0 %v1666
    %1693 = vmatprep.subr.mxu0 0.0
    %1694 = vmatpush1.msra.mxu0 %v1667
    %1695 = vmatprep.subr.mxu0 0.0
    %1696 = vmatpush1.msra.mxu0 %v1668
    %1697 = vmatprep.subr.mxu0 0.0
    %1698 = vmatpush1.msra.mxu0 %v1669
    %1699 = vmatprep.subr.mxu0 0.0
    %1700 = vmatpush1.msra.mxu0 %v1670
    %1701 = vmatprep.subr.mxu0 0.0
    %1702 = vmatpush1.msra.mxu0 %v1671
    %1703 = vmatprep.subr.mxu0 0.0
    %1704 = vmatpush1.msra.mxu0 %v1672
    %1705 = vmatprep.subr.mxu0 0.0
    %1706 = vmatpush1.msra.mxu0 %v1673
    %1707 = vmatprep.subr.mxu0 0.0
    %1708 = vmatpush1.msra.mxu0 %v1674
    %1709 = vmatprep.subr.mxu0 0.0
    %1710 = vmatpush1.msra.mxu0 %v1675
    %1711 = vmatprep.subr.mxu0 0.0
    %1712 = vmatpush1.msra.mxu0 %v1676
    %1713 = vmatprep.subr.mxu0 0.0
    %1714 = vmatpush1.msra.mxu0 %v1677
    %1715 = vmatprep.subr.mxu0 0.0
    %1716 = vmatpush1.msra.mxu0 0.0
    %1717 = vmatprep.subr.mxu0 0.0
    %1718 = vmatpush1.msra.mxu0 0.0
    %1719 = vmatprep.subr.mxu0 0.0
    %1720 = vmatpush1.msra.mxu0 0.0
    %1721 = vmatprep.subr.mxu0 0.0
    %1722 = vmatpush1.msra.mxu0 0.0
    %1723 = vmatprep.subr.mxu0 0.0
    %1724 = vmatpush1.msra.mxu0 0.0
    %1725 = vmatprep.subr.mxu0 0.0
    %1726 = vmatpush1.msra.mxu0 0.0
    %1727 = vmatprep.subr.mxu0 0.0
    %1728 = vmatpush1.msra.mxu0 0.0
    %1729 = vmatprep.subr.mxu0 0.0
    %1730 = vmatpush1.msra.mxu0 0.0
    %1731 = vmatprep.subr.mxu0 0.0
    %1732 = vmatpush1.msra.mxu0 0.0
    %1733 = vmatprep.subr.mxu0 0.0
    %1734 = vmatpush1.msra.mxu0 0.0
    %1735 = vmatprep.subr.mxu0 0.0
    %1736 = vmatpush1.msra.mxu0 0.0
    %1737 = vmatprep.subr.mxu0 0.0
    %1738 = vmatpush1.msra.mxu0 0.0
    %1739 = vmatprep.subr.mxu0 0.0
    %1740 = vmatpush1.msra.mxu0 0.0
    %1741 = vmatprep.subr.mxu0 0.0
    %1742 = vmatpush1.msra.mxu0 0.0
    %1743 = vmatprep.subr.mxu0 0.0
    %1744 = vmatpush1.msra.mxu0 0.0
    %1745 = vmatprep.subr.mxu0 0.0
    %1746 = vmatpush1.msra.mxu0 0.0
    %1747 = vmatprep.mubr.f32.mxu0 0.0
    %1748 = vmatmul.mubr.f32.gmra.mrb[0].mxu0 %v1660
    %v1749 = vpop.f32.mrb[0].mxu0
    %v1750 = vadd.f32 %v1682, %v1749
    %v1751 = vpop.f32.mrb[0].mxu0
    %1752 = vdwg.mxu0
    %v1753 = vtanh.pop %v1750
    %v1754 = vlaneseq
    %v1755 = vshrl.u32 %v1754, 7
    %v1756 = vsub.s32 0, %v1755
    %v1757 = vrot.slane %v1534, %v1756
    %v1758 = vmul.f32 %v1753, %v1757
    %v1759 = vlaneseq
    %v1760 = vshrl.u32 %v1759, 7
    %v1761 = vsub.s32 0, %v1760
    %v1762 = vrot.slane %v1533, %v1761
    %v1763 = vmul.f32 %v1762, %v1528
    %1765 = vrot.lane.b32.xlu0 %v1750, 124
    %v1766 = vpop.permute.xlu0 %1765
    %v1768 = vsub.f32 %v1528, %v1766
    %v1769 = vsub.f32 0.0, %v1758
    %v1770 = vmul.f32 %v1769, 1.442695
    %v1771 = vpow.pop %v1770
    %v1772 = vmul.f32 %v1768, %v1771
    %v1773 = vmul.f32 %v1757, %v1772
    %v1774 = vadd.f32 %v1763, %v1773
    %v1775 = vsel %vm298, %v1758, 0.0
    %1776 = vadd.xlane.f32.xlu0 %v1775
    %v1777 = vpop.xlane.xlu0 %1776
    %v1778 = vsub.f32 %v1532, %v1777
    %v1779 = vld [vmem:[%s3 + $0x1] sm:$0x1]
    %v1780 = vsub.f32 1.0, %v1779
    %v1781 = vld [vmem:[%s5 + $0x1] sm:$0x1]
    %v1782 = vlaneseq
    %v1783 = vshrl.u32 %v1782, 7
    %v1784 = vsub.s32 0, %v1783
    %v1785 = vrot.slane %v1781, %v1784
    %s1786 = scalar_lea.vmem %s4, 4
    %v1787 = vld [vmem:[%s1786] sm:$0xf]
    %1789 = vset.pattern.permute.xlu0 0
    %1790 = vperm.xlu0 %1789, %v1774
    %v1791 = vpop.permute.xlu0 %1790
    %v1793 = vlaneseq
    %v1794 = vshrl.u32 %v1793, 7
    %v1795 = vsub.s32 0, %v1794
    %v1796 = vrot.slane %v1787, %v1795
    %v1797 = vmul.f32 %v1791, %v1796
    %v1798 = vadd.f32 %v1785, %v1797
    %1799 = vset.pattern.permute.xlu0 2
    %1800 = vperm.xlu0 %1799, %v1774
    %v1801 = vpop.permute.xlu0 %1800
    %v1803 = vlaneseq
    %v1804 = vshrl.u32 %v1803, 7
    %v1805 = vsub.s32 2, %v1804
    %v1806 = vrot.slane %v1787, %v1805
    %v1807 = vmul.f32 %v1801, %v1806
    %v1808 = vadd.f32 %v1798, %v1807
    %vm1809 = vcmp.gt.f32.partialorder %v1808, 0.0
    %v1810 = vmul.f32 %v1808, 0.01
    %v1811 = vsel %vm1809, %v1808, %v1810
    %s1812 = scalar_lea.vmem %s6, 128
    %v1813 = vld [vmem:[%s1812] sm:$0xff]
    %v1814 = vld [vmem:[%s1812 + $0x8] sm:$0xff]
    %v1815 = vld [vmem:[%s1812 + $0x10] sm:$0xff]
    %v1816 = vld [vmem:[%s1812 + $0x18] sm:$0xff]
    %v1817 = vld [vmem:[%s1812 + $0x20] sm:$0xff]
    %v1818 = vld [vmem:[%s1812 + $0x28] sm:$0xff]
    %v1819 = vld [vmem:[%s1812 + $0x30] sm:$0xff]
    %v1820 = vld [vmem:[%s1812 + $0x38] sm:$0xff]
    %v1821 = vld [vmem:[%s1812 + $0x40] sm:$0xff]
    %v1822 = vld [vmem:[%s1812 + $0x48] sm:$0xff]
    %v1823 = vld [vmem:[%s1812 + $0x50] sm:$0xff]
    %v1824 = vld [vmem:[%s1812 + $0x58] sm:$0xff]
    %v1825 = vld [vmem:[%s1812 + $0x60] sm:$0xff]
    %v1826 = vld [vmem:[%s1812 + $0x68] sm:$0xff]
    %v1827 = vld [vmem:[%s1812 + $0x70] sm:$0xff]
    %v1828 = vld [vmem:[%s1812 + $0x78] sm:$0xff]
    %v1829 = vld [vmem:[%s7 + $0x1] sm:$0x1]
    %v1830 = vlaneseq
    %v1831 = vshrl.u32 %v1830, 7
    %v1832 = vsub.s32 0, %v1831
    %v1833 = vrot.slane %v1829, %v1832
    %1834 = vmatprep.subr.mxu0 0.0
    %1835 = vmatpush1.msra.mxu0 %v1813
    %1836 = vmatprep.subr.mxu0 0.0
    %1837 = vmatpush1.msra.mxu0 %v1814
    %1838 = vmatprep.subr.mxu0 0.0
    %1839 = vmatpush1.msra.mxu0 %v1815
    %1840 = vmatprep.subr.mxu0 0.0
    %1841 = vmatpush1.msra.mxu0 %v1816
    %1842 = vmatprep.subr.mxu0 0.0
    %1843 = vmatpush1.msra.mxu0 %v1817
    %1844 = vmatprep.subr.mxu0 0.0
    %1845 = vmatpush1.msra.mxu0 %v1818
    %1846 = vmatprep.subr.mxu0 0.0
    %1847 = vmatpush1.msra.mxu0 %v1819
    %1848 = vmatprep.subr.mxu0 0.0
    %1849 = vmatpush1.msra.mxu0 %v1820
    %1850 = vmatprep.subr.mxu0 0.0
    %1851 = vmatpush1.msra.mxu0 %v1821
    %1852 = vmatprep.subr.mxu0 0.0
    %1853 = vmatpush1.msra.mxu0 %v1822
    %1854 = vmatprep.subr.mxu0 0.0
    %1855 = vmatpush1.msra.mxu0 %v1823
    %1856 = vmatprep.subr.mxu0 0.0
    %1857 = vmatpush1.msra.mxu0 %v1824
    %1858 = vmatprep.subr.mxu0 0.0
    %1859 = vmatpush1.msra.mxu0 %v1825
    %1860 = vmatprep.subr.mxu0 0.0
    %1861 = vmatpush1.msra.mxu0 %v1826
    %1862 = vmatprep.subr.mxu0 0.0
    %1863 = vmatpush1.msra.mxu0 %v1827
    %1864 = vmatprep.subr.mxu0 0.0
    %1865 = vmatpush1.msra.mxu0 %v1828
    %1866 = vmatprep.subr.mxu0 0.0
    %1867 = vmatpush1.msra.mxu0 0.0
    %1868 = vmatprep.subr.mxu0 0.0
    %1869 = vmatpush1.msra.mxu0 0.0
    %1870 = vmatprep.subr.mxu0 0.0
    %1871 = vmatpush1.msra.mxu0 0.0
    %1872 = vmatprep.subr.mxu0 0.0
    %1873 = vmatpush1.msra.mxu0 0.0
    %1874 = vmatprep.subr.mxu0 0.0
    %1875 = vmatpush1.msra.mxu0 0.0
    %1876 = vmatprep.subr.mxu0 0.0
    %1877 = vmatpush1.msra.mxu0 0.0
    %1878 = vmatprep.subr.mxu0 0.0
    %1879 = vmatpush1.msra.mxu0 0.0
    %1880 = vmatprep.subr.mxu0 0.0
    %1881 = vmatpush1.msra.mxu0 0.0
    %1882 = vmatprep.subr.mxu0 0.0
    %1883 = vmatpush1.msra.mxu0 0.0
    %1884 = vmatprep.subr.mxu0 0.0
    %1885 = vmatpush1.msra.mxu0 0.0
    %1886 = vmatprep.subr.mxu0 0.0
    %1887 = vmatpush1.msra.mxu0 0.0
    %1888 = vmatprep.subr.mxu0 0.0
    %1889 = vmatpush1.msra.mxu0 0.0
    %1890 = vmatprep.subr.mxu0 0.0
    %1891 = vmatpush1.msra.mxu0 0.0
    %1892 = vmatprep.subr.mxu0 0.0
    %1893 = vmatpush1.msra.mxu0 0.0
    %1894 = vmatprep.subr.mxu0 0.0
    %1895 = vmatpush1.msra.mxu0 0.0
    %1896 = vmatprep.subr.mxu0 0.0
    %1897 = vmatpush1.msra.mxu0 0.0
    %1898 = vmatprep.mubr.f32.mxu0 0.0
    %1899 = vmatmul.mubr.f32.gmra.mrb[0].mxu0 %v1811
    %v1900 = vpop.f32.mrb[0].mxu0
    %v1901 = vadd.f32 %v1833, %v1900
    %v1902 = vpop.f32.mrb[0].mxu0
    %1903 = vdwg.mxu0
    %vm1904 = vcmp.gt.f32.partialorder %v1901, 0.0
    %v1905 = vmul.f32 %v1901, 0.01
    %v1906 = vsel %vm1904, %v1901, %v1905
    %s1907 = scalar_lea.vmem %s8, 128
    %v1908 = vld [vmem:[%s1907] sm:$0xff]
    %v1909 = vld [vmem:[%s1907 + $0x8] sm:$0xff]
    %v1910 = vld [vmem:[%s1907 + $0x10] sm:$0xff]
    %v1911 = vld [vmem:[%s1907 + $0x18] sm:$0xff]
    %v1912 = vld [vmem:[%s1907 + $0x20] sm:$0xff]
    %v1913 = vld [vmem:[%s1907 + $0x28] sm:$0xff]
    %v1914 = vld [vmem:[%s1907 + $0x30] sm:$0xff]
    %v1915 = vld [vmem:[%s1907 + $0x38] sm:$0xff]
    %v1916 = vld [vmem:[%s1907 + $0x40] sm:$0xff]
    %v1917 = vld [vmem:[%s1907 + $0x48] sm:$0xff]
    %v1918 = vld [vmem:[%s1907 + $0x50] sm:$0xff]
    %v1919 = vld [vmem:[%s1907 + $0x58] sm:$0xff]
    %v1920 = vld [vmem:[%s1907 + $0x60] sm:$0xff]
    %v1921 = vld [vmem:[%s1907 + $0x68] sm:$0xff]
    %v1922 = vld [vmem:[%s1907 + $0x70] sm:$0xff]
    %v1923 = vld [vmem:[%s1907 + $0x78] sm:$0xff]
    %v1924 = vld [vmem:[%s9 + $0x1] sm:$0x1]
    %v1925 = vlaneseq
    %v1926 = vshrl.u32 %v1925, 7
    %v1927 = vsub.s32 0, %v1926
    %v1928 = vrot.slane %v1924, %v1927
    %1929 = vmatprep.subr.mxu0 0.0
    %1930 = vmatpush1.msra.mxu0 %v1908
    %1931 = vmatprep.subr.mxu0 0.0
    %1932 = vmatpush1.msra.mxu0 %v1909
    %1933 = vmatprep.subr.mxu0 0.0
    %1934 = vmatpush1.msra.mxu0 %v1910
    %1935 = vmatprep.subr.mxu0 0.0
    %1936 = vmatpush1.msra.mxu0 %v1911
    %1937 = vmatprep.subr.mxu0 0.0
    %1938 = vmatpush1.msra.mxu0 %v1912
    %1939 = vmatprep.subr.mxu0 0.0
    %1940 = vmatpush1.msra.mxu0 %v1913
    %1941 = vmatprep.subr.mxu0 0.0
    %1942 = vmatpush1.msra.mxu0 %v1914
    %1943 = vmatprep.subr.mxu0 0.0
    %1944 = vmatpush1.msra.mxu0 %v1915
    %1945 = vmatprep.subr.mxu0 0.0
    %1946 = vmatpush1.msra.mxu0 %v1916
    %1947 = vmatprep.subr.mxu0 0.0
    %1948 = vmatpush1.msra.mxu0 %v1917
    %1949 = vmatprep.subr.mxu0 0.0
    %1950 = vmatpush1.msra.mxu0 %v1918
    %1951 = vmatprep.subr.mxu0 0.0
    %1952 = vmatpush1.msra.mxu0 %v1919
    %1953 = vmatprep.subr.mxu0 0.0
    %1954 = vmatpush1.msra.mxu0 %v1920
    %1955 = vmatprep.subr.mxu0 0.0
    %1956 = vmatpush1.msra.mxu0 %v1921
    %1957 = vmatprep.subr.mxu0 0.0
    %1958 = vmatpush1.msra.mxu0 %v1922
    %1959 = vmatprep.subr.mxu0 0.0
    %1960 = vmatpush1.msra.mxu0 %v1923
    %1961 = vmatprep.subr.mxu0 0.0
    %1962 = vmatpush1.msra.mxu0 0.0
    %1963 = vmatprep.subr.mxu0 0.0
    %1964 = vmatpush1.msra.mxu0 0.0
    %1965 = vmatprep.subr.mxu0 0.0
    %1966 = vmatpush1.msra.mxu0 0.0
    %1967 = vmatprep.subr.mxu0 0.0
    %1968 = vmatpush1.msra.mxu0 0.0
    %1969 = vmatprep.subr.mxu0 0.0
    %1970 = vmatpush1.msra.mxu0 0.0
    %1971 = vmatprep.subr.mxu0 0.0
    %1972 = vmatpush1.msra.mxu0 0.0
    %1973 = vmatprep.subr.mxu0 0.0
    %1974 = vmatpush1.msra.mxu0 0.0
    %1975 = vmatprep.subr.mxu0 0.0
    %1976 = vmatpush1.msra.mxu0 0.0
    %1977 = vmatprep.subr.mxu0 0.0
    %1978 = vmatpush1.msra.mxu0 0.0
    %1979 = vmatprep.subr.mxu0 0.0
    %1980 = vmatpush1.msra.mxu0 0.0
    %1981 = vmatprep.subr.mxu0 0.0
    %1982 = vmatpush1.msra.mxu0 0.0
    %1983 = vmatprep.subr.mxu0 0.0
    %1984 = vmatpush1.msra.mxu0 0.0
    %1985 = vmatprep.subr.mxu0 0.0
    %1986 = vmatpush1.msra.mxu0 0.0
    %1987 = vmatprep.subr.mxu0 0.0
    %1988 = vmatpush1.msra.mxu0 0.0
    %1989 = vmatprep.subr.mxu0 0.0
    %1990 = vmatpush1.msra.mxu0 0.0
    %1991 = vmatprep.subr.mxu0 0.0
    %1992 = vmatpush1.msra.mxu0 0.0
    %1993 = vmatprep.mubr.f32.mxu0 0.0
    %1994 = vmatmul.mubr.f32.gmra.mrb[0].mxu0 %v1906
    %v1995 = vpop.f32.mrb[0].mxu0
    %v1996 = vadd.f32 %v1928, %v1995
    %v1997 = vpop.f32.mrb[0].mxu0
    %1998 = vdwg.mxu0
    %v1999 = vtanh.pop %v1996
    %v2000 = vlaneseq
    %v2001 = vshrl.u32 %v2000, 7
    %v2002 = vsub.s32 0, %v2001
    %v2003 = vrot.slane %v1780, %v2002
    %v2004 = vmul.f32 %v1999, %v2003
    %v2005 = vlaneseq
    %v2006 = vshrl.u32 %v2005, 7
    %v2007 = vsub.s32 0, %v2006
    %v2008 = vrot.slane %v1779, %v2007
    %v2009 = vmul.f32 %v2008, %v1774
    %2011 = vrot.lane.b32.xlu0 %v1996, 124
    %v2012 = vpop.permute.xlu0 %2011
    %v2014 = vsub.f32 %v1774, %v2012
    %v2015 = vsub.f32 0.0, %v2004
    %v2016 = vmul.f32 %v2015, 1.442695
    %v2017 = vpow.pop %v2016
    %v2018 = vmul.f32 %v2014, %v2017
    %v2019 = vmul.f32 %v2003, %v2018
    %v2020 = vadd.f32 %v2009, %v2019
    %v2021 = vsel %vm298, %v2004, 0.0
    %2022 = vadd.xlane.f32.xlu0 %v2021
    %v2023 = vpop.xlane.xlu0 %2022
    %v2024 = vsub.f32 %v1778, %v2023
    %v2025 = vld [vmem:[%s3] sm:$0x1]
    %v2026 = vsub.f32 1.0, %v2025
    %v2027 = vld [vmem:[%s5] sm:$0x1]
    %v2028 = vlaneseq
    %v2029 = vshrl.u32 %v2028, 7
    %v2030 = vsub.s32 0, %v2029
    %v2031 = vrot.slane %v2027, %v2030
    %v2032 = vld [vmem:[%s4] sm:$0xf]
    %2034 = vset.pattern.permute.xlu0 0
    %2035 = vperm.xlu0 %2034, %v2020
    %v2036 = vpop.permute.xlu0 %2035
    %v2038 = vlaneseq
    %v2039 = vshrl.u32 %v2038, 7
    %v2040 = vsub.s32 0, %v2039
    %v2041 = vrot.slane %v2032, %v2040
    %v2042 = vmul.f32 %v2036, %v2041
    %v2043 = vadd.f32 %v2031, %v2042
    %2044 = vset.pattern.permute.xlu0 1
    %2045 = vperm.xlu0 %2044, %v2020
    %v2046 = vpop.permute.xlu0 %2045
    %v2048 = vlaneseq
    %v2049 = vshrl.u32 %v2048, 7
    %v2050 = vsub.s32 1, %v2049
    %v2051 = vrot.slane %v2032, %v2050
    %v2052 = vmul.f32 %v2046, %v2051
    %v2053 = vadd.f32 %v2043, %v2052
    %vm2054 = vcmp.gt.f32.partialorder %v2053, 0.0
    %v2055 = vmul.f32 %v2053, 0.01
    %v2056 = vsel %vm2054, %v2053, %v2055
    %v2057 = vld [vmem:[%s6] sm:$0xff]
    %v2058 = vld [vmem:[%s6 + $0x8] sm:$0xff]
    %v2059 = vld [vmem:[%s6 + $0x10] sm:$0xff]
    %v2060 = vld [vmem:[%s6 + $0x18] sm:$0xff]
    %v2061 = vld [vmem:[%s6 + $0x20] sm:$0xff]
    %v2062 = vld [vmem:[%s6 + $0x28] sm:$0xff]
    %v2063 = vld [vmem:[%s6 + $0x30] sm:$0xff]
    %v2064 = vld [vmem:[%s6 + $0x38] sm:$0xff]
    %v2065 = vld [vmem:[%s6 + $0x40] sm:$0xff]
    %v2066 = vld [vmem:[%s6 + $0x48] sm:$0xff]
    %v2067 = vld [vmem:[%s6 + $0x50] sm:$0xff]
    %v2068 = vld [vmem:[%s6 + $0x58] sm:$0xff]
    %v2069 = vld [vmem:[%s6 + $0x60] sm:$0xff]
    %v2070 = vld [vmem:[%s6 + $0x68] sm:$0xff]
    %v2071 = vld [vmem:[%s6 + $0x70] sm:$0xff]
    %v2072 = vld [vmem:[%s6 + $0x78] sm:$0xff]
    %v2073 = vld [vmem:[%s7] sm:$0x1]
    %v2074 = vlaneseq
    %v2075 = vshrl.u32 %v2074, 7
    %v2076 = vsub.s32 0, %v2075
    %v2077 = vrot.slane %v2073, %v2076
    %2078 = vmatprep.subr.mxu0 0.0
    %2079 = vmatpush1.msra.mxu0 %v2057
    %2080 = vmatprep.subr.mxu0 0.0
    %2081 = vmatpush1.msra.mxu0 %v2058
    %2082 = vmatprep.subr.mxu0 0.0
    %2083 = vmatpush1.msra.mxu0 %v2059
    %2084 = vmatprep.subr.mxu0 0.0
    %2085 = vmatpush1.msra.mxu0 %v2060
    %2086 = vmatprep.subr.mxu0 0.0
    %2087 = vmatpush1.msra.mxu0 %v2061
    %2088 = vmatprep.subr.mxu0 0.0
    %2089 = vmatpush1.msra.mxu0 %v2062
    %2090 = vmatprep.subr.mxu0 0.0
    %2091 = vmatpush1.msra.mxu0 %v2063
    %2092 = vmatprep.subr.mxu0 0.0
    %2093 = vmatpush1.msra.mxu0 %v2064
    %2094 = vmatprep.subr.mxu0 0.0
    %2095 = vmatpush1.msra.mxu0 %v2065
    %2096 = vmatprep.subr.mxu0 0.0
    %2097 = vmatpush1.msra.mxu0 %v2066
    %2098 = vmatprep.subr.mxu0 0.0
    %2099 = vmatpush1.msra.mxu0 %v2067
    %2100 = vmatprep.subr.mxu0 0.0
    %2101 = vmatpush1.msra.mxu0 %v2068
    %2102 = vmatprep.subr.mxu0 0.0
    %2103 = vmatpush1.msra.mxu0 %v2069
    %2104 = vmatprep.subr.mxu0 0.0
    %2105 = vmatpush1.msra.mxu0 %v2070
    %2106 = vmatprep.subr.mxu0 0.0
    %2107 = vmatpush1.msra.mxu0 %v2071
    %2108 = vmatprep.subr.mxu0 0.0
    %2109 = vmatpush1.msra.mxu0 %v2072
    %2110 = vmatprep.subr.mxu0 0.0
    %2111 = vmatpush1.msra.mxu0 0.0
    %2112 = vmatprep.subr.mxu0 0.0
    %2113 = vmatpush1.msra.mxu0 0.0
    %2114 = vmatprep.subr.mxu0 0.0
    %2115 = vmatpush1.msra.mxu0 0.0
    %2116 = vmatprep.subr.mxu0 0.0
    %2117 = vmatpush1.msra.mxu0 0.0
    %2118 = vmatprep.subr.mxu0 0.0
    %2119 = vmatpush1.msra.mxu0 0.0
    %2120 = vmatprep.subr.mxu0 0.0
    %2121 = vmatpush1.msra.mxu0 0.0
    %2122 = vmatprep.subr.mxu0 0.0
    %2123 = vmatpush1.msra.mxu0 0.0
    %2124 = vmatprep.subr.mxu0 0.0
    %2125 = vmatpush1.msra.mxu0 0.0
    %2126 = vmatprep.subr.mxu0 0.0
    %2127 = vmatpush1.msra.mxu0 0.0
    %2128 = vmatprep.subr.mxu0 0.0
    %2129 = vmatpush1.msra.mxu0 0.0
    %2130 = vmatprep.subr.mxu0 0.0
    %2131 = vmatpush1.msra.mxu0 0.0
    %2132 = vmatprep.subr.mxu0 0.0
    %2133 = vmatpush1.msra.mxu0 0.0
    %2134 = vmatprep.subr.mxu0 0.0
    %2135 = vmatpush1.msra.mxu0 0.0
    %2136 = vmatprep.subr.mxu0 0.0
    %2137 = vmatpush1.msra.mxu0 0.0
    %2138 = vmatprep.subr.mxu0 0.0
    %2139 = vmatpush1.msra.mxu0 0.0
    %2140 = vmatprep.subr.mxu0 0.0
    %2141 = vmatpush1.msra.mxu0 0.0
    %2142 = vmatprep.mubr.f32.mxu0 0.0
    %2143 = vmatmul.mubr.f32.gmra.mrb[0].mxu0 %v2056
    %v2144 = vpop.f32.mrb[0].mxu0
    %v2145 = vadd.f32 %v2077, %v2144
    %v2146 = vpop.f32.mrb[0].mxu0
    %2147 = vdwg.mxu0
    %vm2148 = vcmp.gt.f32.partialorder %v2145, 0.0
    %v2149 = vmul.f32 %v2145, 0.01
    %v2150 = vsel %vm2148, %v2145, %v2149
    %v2151 = vld [vmem:[%s8] sm:$0xff]
    %v2152 = vld [vmem:[%s8 + $0x8] sm:$0xff]
    %v2153 = vld [vmem:[%s8 + $0x10] sm:$0xff]
    %v2154 = vld [vmem:[%s8 + $0x18] sm:$0xff]
    %v2155 = vld [vmem:[%s8 + $0x20] sm:$0xff]
    %v2156 = vld [vmem:[%s8 + $0x28] sm:$0xff]
    %v2157 = vld [vmem:[%s8 + $0x30] sm:$0xff]
    %v2158 = vld [vmem:[%s8 + $0x38] sm:$0xff]
    %v2159 = vld [vmem:[%s8 + $0x40] sm:$0xff]
    %v2160 = vld [vmem:[%s8 + $0x48] sm:$0xff]
    %v2161 = vld [vmem:[%s8 + $0x50] sm:$0xff]
    %v2162 = vld [vmem:[%s8 + $0x58] sm:$0xff]
    %v2163 = vld [vmem:[%s8 + $0x60] sm:$0xff]
    %v2164 = vld [vmem:[%s8 + $0x68] sm:$0xff]
    %v2165 = vld [vmem:[%s8 + $0x70] sm:$0xff]
    %v2166 = vld [vmem:[%s8 + $0x78] sm:$0xff]
    %v2167 = vld [vmem:[%s9] sm:$0x1]
    %v2168 = vlaneseq
    %v2169 = vshrl.u32 %v2168, 7
    %v2170 = vsub.s32 0, %v2169
    %v2171 = vrot.slane %v2167, %v2170
    %2172 = vmatprep.subr.mxu0 0.0
    %2173 = vmatpush1.msra.mxu0 %v2151
    %2174 = vmatprep.subr.mxu0 0.0
    %2175 = vmatpush1.msra.mxu0 %v2152
    %2176 = vmatprep.subr.mxu0 0.0
    %2177 = vmatpush1.msra.mxu0 %v2153
    %2178 = vmatprep.subr.mxu0 0.0
    %2179 = vmatpush1.msra.mxu0 %v2154
    %2180 = vmatprep.subr.mxu0 0.0
    %2181 = vmatpush1.msra.mxu0 %v2155
    %2182 = vmatprep.subr.mxu0 0.0
    %2183 = vmatpush1.msra.mxu0 %v2156
    %2184 = vmatprep.subr.mxu0 0.0
    %2185 = vmatpush1.msra.mxu0 %v2157
    %2186 = vmatprep.subr.mxu0 0.0
    %2187 = vmatpush1.msra.mxu0 %v2158
    %2188 = vmatprep.subr.mxu0 0.0
    %2189 = vmatpush1.msra.mxu0 %v2159
    %2190 = vmatprep.subr.mxu0 0.0
    %2191 = vmatpush1.msra.mxu0 %v2160
    %2192 = vmatprep.subr.mxu0 0.0
    %2193 = vmatpush1.msra.mxu0 %v2161
    %2194 = vmatprep.subr.mxu0 0.0
    %2195 = vmatpush1.msra.mxu0 %v2162
    %2196 = vmatprep.subr.mxu0 0.0
    %2197 = vmatpush1.msra.mxu0 %v2163
    %2198 = vmatprep.subr.mxu0 0.0
    %2199 = vmatpush1.msra.mxu0 %v2164
    %2200 = vmatprep.subr.mxu0 0.0
    %2201 = vmatpush1.msra.mxu0 %v2165
    %2202 = vmatprep.subr.mxu0 0.0
    %2203 = vmatpush1.msra.mxu0 %v2166
    %2204 = vmatprep.subr.mxu0 0.0
    %2205 = vmatpush1.msra.mxu0 0.0
    %2206 = vmatprep.subr.mxu0 0.0
    %2207 = vmatpush1.msra.mxu0 0.0
    %2208 = vmatprep.subr.mxu0 0.0
    %2209 = vmatpush1.msra.mxu0 0.0
    %2210 = vmatprep.subr.mxu0 0.0
    %2211 = vmatpush1.msra.mxu0 0.0
    %2212 = vmatprep.subr.mxu0 0.0
    %2213 = vmatpush1.msra.mxu0 0.0
    %2214 = vmatprep.subr.mxu0 0.0
    %2215 = vmatpush1.msra.mxu0 0.0
    %2216 = vmatprep.subr.mxu0 0.0
    %2217 = vmatpush1.msra.mxu0 0.0
    %2218 = vmatprep.subr.mxu0 0.0
    %2219 = vmatpush1.msra.mxu0 0.0
    %2220 = vmatprep.subr.mxu0 0.0
    %2221 = vmatpush1.msra.mxu0 0.0
    %2222 = vmatprep.subr.mxu0 0.0
    %2223 = vmatpush1.msra.mxu0 0.0
    %2224 = vmatprep.subr.mxu0 0.0
    %2225 = vmatpush1.msra.mxu0 0.0
    %2226 = vmatprep.subr.mxu0 0.0
    %2227 = vmatpush1.msra.mxu0 0.0
    %2228 = vmatprep.subr.mxu0 0.0
    %2229 = vmatpush1.msra.mxu0 0.0
    %2230 = vmatprep.subr.mxu0 0.0
    %2231 = vmatpush1.msra.mxu0 0.0
    %2232 = vmatprep.subr.mxu0 0.0
    %2233 = vmatpush1.msra.mxu0 0.0
    %2234 = vmatprep.subr.mxu0 0.0
    %2235 = vmatpush1.msra.mxu0 0.0
    %2236 = vmatprep.mubr.f32.mxu0 0.0
    %2237 = vmatmul.mubr.f32.gmra.mrb[0].mxu0 %v2150
    %v2238 = vpop.f32.mrb[0].mxu0
    %v2239 = vadd.f32 %v2171, %v2238
    %v2240 = vpop.f32.mrb[0].mxu0
    %2241 = vdwg.mxu0
    %v2242 = vtanh.pop %v2239
    %v2243 = vlaneseq
    %v2244 = vshrl.u32 %v2243, 7
    %v2245 = vsub.s32 0, %v2244
    %v2246 = vrot.slane %v2026, %v2245
    %v2247 = vmul.f32 %v2242, %v2246
    %v2248 = vlaneseq
    %v2249 = vshrl.u32 %v2248, 7
    %v2250 = vsub.s32 0, %v2249
    %v2251 = vrot.slane %v2025, %v2250
    %v2252 = vmul.f32 %v2251, %v2020
    %2254 = vrot.lane.b32.xlu0 %v2239, 124
    %v2255 = vpop.permute.xlu0 %2254
    %v2257 = vsub.f32 %v2020, %v2255
    %v2258 = vsub.f32 0.0, %v2247
    %v2259 = vmul.f32 %v2258, 1.442695
    %v2260 = vpow.pop %v2259
    %v2261 = vmul.f32 %v2257, %v2260
    %v2262 = vmul.f32 %v2246, %v2261
    %v2263 = vadd.f32 %v2252, %v2262
    %v2264 = vsel %vm298, %v2247, 0.0
    %2265 = vadd.xlane.f32.xlu0 %v2264
    %v2266 = vpop.xlane.xlu0 %2265
    %v2267 = vsub.f32 %v2024, %v2266
    %v2268 = vmul.f32 %v2263, %v2263
    %v2269 = vsel %vm298, %v2268, 0.0
    %2270 = vadd.xlane.f32.xlu0 %v2269
    %v2271 = vpop.xlane.xlu0 %2270
    %v2272 = vmul.f32 %v2271, -0.5
    %v2273 = vsub.f32 %v2272, 3.675754
    %v2274 = vadd.f32 %v2273, %v2267
    %v2275 = vsub.f32 %v50, %v2274
    %v2276 = vadd.f32 %v50, 0.6931472
    %v2277 = vand.u32 2147483647, %v55
    %v2278 = vadd.f32 %v2276, %v2277
    %v2279 = vadd.f32 %v2275, %v2278
    %v2280 = vmul.f32 %v2279, 0.125
    %v2281 = vsel %vm298, %v2280, 0.0
    %2282 = vadd.xlane.f32.xlu0 %v2281
    %v2283 = vpop.xlane.xlu0 %2282
    %v2284 = vrot.slane %v2283, 4
    %v2285 = vadd.f32 %v2283, %v2284
    %v2286 = vrot.slane %v2285, 2
    %v2287 = vadd.f32 %v2285, %v2286
    %v2288 = vrot.slane %v2287, 1
    %v2289 = vadd.f32 %v2287, %v2288
    %s2290 = vtos %v2289
    %v2291 = vstv %s2290
    %2292 = vst [vmem:[#allocation2] sm:$0xff] %v2291
    // Predicated region
    $region42: #{tpu_custom_call.1} parent=1 // pred_check
      _
    $region43: #{tpu_custom_call.1} parent=1 // pred_check_branch
      %2294 = sbr.rel (0) target = $region45
    $region44: #{tpu_custom_call.1} parent=1 // pred_region
      %s2296 = ssub.s32 128, 128
      %2297 = vsyncadd [#allocation3], %s2296
      %s2299 = sshll.u32 [#allocation2], 4
      %s2300 = int_to_ptr.vmem [resolvable:$true] %s2299
      %2302 = dma.vmem_to_hbm [thread:$0]  %s2300, 128, %s10, [#allocation3]
    $region45: #{tpu_custom_call.1} parent=1 // pred_fallthru
      _
    // Predicated region
    $region46: #{tpu_custom_call.1} parent=1 // pred_check
      _
    $region47: #{tpu_custom_call.1} parent=1 // pred_check_branch
      %2304 = sbr.rel (0) target = $region49
    $region48: #{tpu_custom_call.1} parent=1 // pred_region
      %2305 = dma.done [#allocation3], 128
    $region49: #{tpu_custom_call.1} parent=1 // pred_fallthru
      _
    %2306 = vsyncpa [#allocation3], 1

</llo_original>
